<compile_context>
chip_gen: v7x
topology: tpu7x:2x2x1
jax: 0.10.0
libtpu: 0.0.40
codegen_flags: <defaults>
</compile_context>

<pallas_src>
import functools

import jax
import jax.numpy as jnp
from jax.experimental import pallas as pl
from jax.experimental.pallas import tpu as pltpu

EPS = 1e-5
LANE = 128
CONV_VMEM_LIMIT = 48 * 1024 * 1024   # explicit cap; fits v7x's 64 MiB VMEM
TAIL_VMEM_LIMIT = 32 * 1024 * 1024


def _pad_c(c):
    return ((c + LANE - 1) // LANE) * LANE


def _round_up(x, m):
    return ((x + m - 1) // m) * m


# ----------------------------- Pallas kernels ------------------------------


def _make_conv3x3_s1_kernel(H, W, Cip, Cop, apply_bnrelu, has_shortcut):
    """3x3 conv, stride 1, padding 1, one image per grid step.

    Builds a kw-fused halo buffer apad[r, j, kw*C:(kw+1)*C] = xpad[r, j+kw, :]
    so the 9 taps become 3 K=3*Cip MXU dots over leading-dim slices.  MXU
    operands are bf16, accumulation f32.  Optionally fuses relu(BN1(.)) into
    the prologue (conv2) and/or the 1x1 projection shortcut (conv1, stride 1).
    Per-channel (sum, sum^2) BN statistics are emitted as side outputs.
    """
    C = Cip

    def kernel(*refs):
        i = 0
        x_ref = refs[i]; i += 1
        if apply_bnrelu:
            s_ref, b_ref = refs[i], refs[i + 1]; i += 2
        w_ref = refs[i]; i += 1
        if has_shortcut:
            ws_ref = refs[i]; i += 1
        y_ref, yst_ref = refs[i], refs[i + 1]; i += 2
        if has_shortcut:
            ys_ref, ysst_ref = refs[i], refs[i + 1]; i += 2
        apad_ref = refs[i]

        x = x_ref[0].astype(jnp.float32)                       # (H, W, Cip)
        if apply_bnrelu:
            a = jnp.maximum(x * s_ref[...] + b_ref[...], 0.0)  # fused BN1+ReLU
        else:
            a = x

        # Zero only the halo border every step (tiny); the interior is always
        # fully overwritten, so no full-tile zero fill and no reliance on
        # scratch persistence across grid steps (megacore-safe).
        zrow = jnp.zeros((1, W, 3 * C), jnp.float32)
        apad_ref[0:1] = zrow
        apad_ref[H + 1:H + 2] = zrow
        zcol = jnp.zeros((H, 1, C), jnp.float32)
        apad_ref[1:H + 1, 0:1, 0:C] = zcol
        apad_ref[1:H + 1, W - 1:W, 2 * C:3 * C] = zcol
        # kw-shifted channel groups: 3 copies instead of 9 per-tap slices.
        apad_ref[1:H + 1, 1:W, 0:C] = a[:, 0:W - 1, :]
        apad_ref[1:H + 1, :, C:2 * C] = a
        apad_ref[1:H + 1, 0:W - 1, 2 * C:3 * C] = a[:, 1:W, :]

        acc = jnp.zeros((H * W, Cop), jnp.float32)
        for kh in range(3):                                    # 3 dots, K=3*Cip
            lhs = apad_ref[kh:kh + H].reshape(H * W, 3 * C).astype(jnp.bfloat16)
            acc = acc + jnp.dot(lhs, w_ref[kh],
                                preferred_element_type=jnp.float32)
        y_ref[0] = acc.reshape(H, W, Cop).astype(y_ref.dtype)
        yst_ref[0] = jnp.concatenate(
            [jnp.sum(acc, axis=0, keepdims=True),
             jnp.sum(acc * acc, axis=0, keepdims=True)], axis=0)

        if has_shortcut:
            xs = a.reshape(H * W, C).astype(jnp.bfloat16)
            ys = jnp.dot(xs, ws_ref[...], preferred_element_type=jnp.float32)
            ys_ref[0] = ys.reshape(H, W, Cop).astype(ys_ref.dtype)
            ysst_ref[0] = jnp.concatenate(
                [jnp.sum(ys, axis=0, keepdims=True),
                 jnp.sum(ys * ys, axis=0, keepdims=True)], axis=0)

    return kernel


def conv3x3_s1(x, w3, ws=None, scale=None, bias=None):
    """x: (N,H,W,Cip) bf16; w3: (3, 3*Cip, Cop) bf16; ws: optional (Cip, Cop) bf16."""
    N, H, W, Cip = x.shape
    Cop = w3.shape[-1]
    apply_bnrelu = scale is not None
    has_sc = ws is not None
    kernel = _make_conv3x3_s1_kernel(H, W, Cip, Cop, apply_bnrelu, has_sc)

    in_specs = [pl.BlockSpec((1, H, W, Cip), lambda n: (n, 0, 0, 0))]
    args = [x]
    if apply_bnrelu:
        vec = pl.BlockSpec((1, Cip), lambda n: (0, 0))
        in_specs += [vec, vec]
        args += [scale.reshape(1, Cip).astype(jnp.float32),
                 bias.reshape(1, Cip).astype(jnp.float32)]
    in_specs.append(pl.BlockSpec((3, 3 * Cip, Cop), lambda n: (0, 0, 0)))
    args.append(w3)
    if has_sc:
        in_specs.append(pl.BlockSpec((Cip, Cop), lambda n: (0, 0)))
        args.append(ws)

    y_spec = pl.BlockSpec((1, H, W, Cop), lambda n: (n, 0, 0, 0))
    st_spec = pl.BlockSpec((1, 2, Cop), lambda n: (n, 0, 0))
    out_shapes = [jax.ShapeDtypeStruct((N, H, W, Cop), jnp.bfloat16),
                  jax.ShapeDtypeStruct((N, 2, Cop), jnp.float32)]
    out_specs = [y_spec, st_spec]
    if has_sc:
        out_shapes += [jax.ShapeDtypeStruct((N, H, W, Cop), jnp.bfloat16),
                       jax.ShapeDtypeStruct((N, 2, Cop), jnp.float32)]
        out_specs += [y_spec, st_spec]

    return pl.pallas_call(
        kernel,
        out_shape=tuple(out_shapes),
        grid=(N,),
        in_specs=in_specs,
        out_specs=tuple(out_specs),
        scratch_shapes=[pltpu.VMEM((H + 2, W, 3 * Cip), jnp.float32)],
        compiler_params=pltpu.CompilerParams(
            dimension_semantics=("parallel",),
            vmem_limit_bytes=CONV_VMEM_LIMIT),
    )(*args)


def _make_conv3x3_s2_kernel(Ho, Wo, Cip, Cop):
    """3x3 conv, stride 2, padding 1 + fused 1x1 stride-2 projection shortcut.

    Input is the 2x2 stride-phase stack of the spatially padded image.  It is
    packed in-kernel into two kw-fused buffers B[p][r, j, kw*C:(kw+1)*C] =
    xpad[2r+p, 2j+kw, :], so the 9 taps become 3 K=3*Cip dots over leading-dim
    slices.  The shortcut's input pixels are exactly B[1][:, :, C:2C].
    """
    C = Cip

    def kernel(xph_ref, w_ref, ws_ref, y_ref, yst_ref, ys_ref, ysst_ref, b_ref):
        for p in range(2):
            b_ref[p, :, :, 0:C] = \
                xph_ref[2 * p, 0, :, 0:Wo, :].astype(jnp.float32)
            b_ref[p, :, :, C:2 * C] = \
                xph_ref[2 * p + 1, 0, :, 0:Wo, :].astype(jnp.float32)
            b_ref[p, :, :, 2 * C:3 * C] = \
                xph_ref[2 * p, 0, :, 1:Wo + 1, :].astype(jnp.float32)

        acc = jnp.zeros((Ho * Wo, Cop), jnp.float32)
        for kh in range(3):                                    # 3 dots, K=3*Cip
            p, r0 = kh % 2, kh // 2
            lhs = b_ref[p, r0:r0 + Ho].reshape(Ho * Wo, 3 * C).astype(jnp.bfloat16)
            acc = acc + jnp.dot(lhs, w_ref[kh],
                                preferred_element_type=jnp.float32)
        y_ref[0] = acc.reshape(Ho, Wo, Cop).astype(y_ref.dtype)
        yst_ref[0] = jnp.concatenate(
            [jnp.sum(acc, axis=0, keepdims=True),
             jnp.sum(acc * acc, axis=0, keepdims=True)], axis=0)

        xs = b_ref[1, 0:Ho, :, C:2 * C].reshape(Ho * Wo, C).astype(jnp.bfloat16)
        ys = jnp.dot(xs, ws_ref[...], preferred_element_type=jnp.float32)
        ys_ref[0] = ys.reshape(Ho, Wo, Cop).astype(ys_ref.dtype)
        ysst_ref[0] = jnp.concatenate(
            [jnp.sum(ys, axis=0, keepdims=True),
             jnp.sum(ys * ys, axis=0, keepdims=True)], axis=0)

    return kernel


def conv3x3_s2_proj(xph, w3, ws):
    """xph: (4, N, Ho+1, Wo+1, Cip) bf16; w3: (3, 3*Cip, Cop) bf16; ws: (Cip, Cop) bf16."""
    nph, N, Hp, Wp, Cip = xph.shape
    assert nph == 4
    Ho, Wo = Hp - 1, Wp - 1
    Cop = w3.shape[-1]
    kernel = _make_conv3x3_s2_kernel(Ho, Wo, Cip, Cop)
    y_spec = pl.BlockSpec((1, Ho, Wo, Cop), lambda n: (n, 0, 0, 0))
    st_spec = pl.BlockSpec((1, 2, Cop), lambda n: (n, 0, 0))
    return pl.pallas_call(
        kernel,
        out_shape=(jax.ShapeDtypeStruct((N, Ho, Wo, Cop), jnp.bfloat16),
                   jax.ShapeDtypeStruct((N, 2, Cop), jnp.float32),
                   jax.ShapeDtypeStruct((N, Ho, Wo, Cop), jnp.bfloat16),
                   jax.ShapeDtypeStruct((N, 2, Cop), jnp.float32)),
        grid=(N,),
        in_specs=[pl.BlockSpec((4, 1, Hp, Wp, Cip), lambda n: (0, n, 0, 0, 0)),
                  pl.BlockSpec((3, 3 * Cip, Cop), lambda n: (0, 0, 0)),
                  pl.BlockSpec((Cip, Cop), lambda n: (0, 0))],
        out_specs=(y_spec, st_spec, y_spec, st_spec),
        scratch_shapes=[pltpu.VMEM((2, Ho + 1, Wo, 3 * Cip), jnp.float32)],
        compiler_params=pltpu.CompilerParams(
            dimension_semantics=("parallel",),
            vmem_limit_bytes=CONV_VMEM_LIMIT),
    )(xph, w3, ws)


def _add_dual_bn_relu_kernel(y2_ref, s2_ref, b2_ref, ys_ref, ss_ref, bs_ref, o_ref):
    r = y2_ref[...].astype(jnp.float32) * s2_ref[...] + b2_ref[...]
    s = ys_ref[...].astype(jnp.float32) * ss_ref[...] + bs_ref[...]
    o_ref[...] = jnp.maximum(r + s, 0.0)


def add_dual_bn_relu(y2, s2, b2, ys, ss, bs):
    """relu(BN2(y2) + BN_s(shortcut)) over lane-dense (tm, 128k) tiles."""
    M, C = y2.shape
    tm = min(1024, _round_up(M, 8))
    tile = pl.BlockSpec((tm, C), lambda i: (i, 0))
    row = pl.BlockSpec((1, C), lambda i: (0, 0))
    return pl.pallas_call(
        _add_dual_bn_relu_kernel,
        out_shape=jax.ShapeDtypeStruct((M, C), jnp.float32),
        grid=(pl.cdiv(M, tm),),
        in_specs=[tile, row, row, tile, row, row],
        out_specs=tile,
        compiler_params=pltpu.CompilerParams(
            dimension_semantics=("parallel",),
            vmem_limit_bytes=TAIL_VMEM_LIMIT),
    )(y2, s2.reshape(1, C).astype(jnp.float32), b2.reshape(1, C).astype(jnp.float32),
      ys, ss.reshape(1, C).astype(jnp.float32), bs.reshape(1, C).astype(jnp.float32))


# ------------------------------- JAX glue ----------------------------------


def _pad_channels(x, cp):
    c = x.shape[-1]
    if c == cp:
        return x
    return jnp.pad(x, [(0, 0)] * (x.ndim - 1) + [(0, cp - c)])


def _pad_vec(v, cp, value=0.0):
    c = v.shape[0]
    if c == cp:
        return v
    return jnp.pad(v, (0, cp - c), constant_values=value)


def _prep_w3x3(w_oihw, cip, cop):
    """PyTorch OIHW (Cout,Cin,3,3) -> kw-fused (3, 3*Cip, Cop) bf16, zero-padded."""
    cout, cin = w_oihw.shape[:2]
    w = jnp.transpose(w_oihw, (2, 3, 1, 0))            # (kh, kw, Cin, Cout)
    w = jnp.pad(w, ((0, 0), (0, 0), (0, cip - cin), (0, cop - cout)))
    return w.reshape(3, 3 * cip, cop).astype(jnp.bfloat16)


def _build_phases_s2(x_nhwc):
    """Spatial pad by 1, build the 2x2 stride-phase stack (4, N, Ho+1, Wo+1, C)."""
    xpad = jnp.pad(x_nhwc, ((0, 0), (1, 1), (1, 1), (0, 0)))
    phases = [xpad[:, p::2, q::2, :] for p in range(2) for q in range(2)]
    return jnp.stack(phases, axis=0)


def _bn_fold_from_stats(stats, count, gamma_p, beta_p):
    """stats: (N, 2, C) per-image (sum, sum^2). Training-mode BN -> scale/bias."""
    total = jnp.sum(stats[:, 0, :], axis=0)
    totsq = jnp.sum(stats[:, 1, :], axis=0)
    mean = total / count
    var = jnp.maximum(totsq / count - mean * mean, 0.0)   # biased variance
    scale = gamma_p / jnp.sqrt(var + EPS)
    bias = beta_p - mean * scale
    return scale, bias


@functools.partial(jax.jit, static_argnums=(2,))
def basic_block_forward(x_nchw, params, stride):
    assert stride in (1, 2)
    x = jnp.transpose(x_nchw, (0, 2, 3, 1)).astype(jnp.float32)   # -> NHWC
    N, H, W, Cin = x.shape
    Cout = params["w1"].shape[0]
    Cip, Cop = _pad_c(Cin), _pad_c(Cout)
    assert H % stride == 0 and W % stride == 0
    Ho, Wo = H // stride, W // stride
    has_sc = (stride != 1) or (Cin != Cout)

    # channel-padded bf16 activations (lane-dense, half the HBM traffic)
    xb = _pad_channels(x, Cip).astype(jnp.bfloat16)

    w1 = _prep_w3x3(params["w1"], Cip, Cop)
    w2 = _prep_w3x3(params["w2"], Cop, Cop)
    ws = None
    if has_sc:
        ws = params["ws"].reshape(Cout, Cin).T
        ws = jnp.pad(ws, ((0, Cip - Cin), (0, Cop - Cout))).astype(jnp.bfloat16)

    g1, be1 = _pad_vec(params["g1"], Cop, 1.0), _pad_vec(params["be1"], Cop)
    g2, be2 = _pad_vec(params["g2"], Cop, 1.0), _pad_vec(params["be2"], Cop)

    # conv1 (3x3, stride) [+ fused 1x1 shortcut conv], BN stats as side outputs
    if stride == 1:
        res = conv3x3_s1(xb, w1, ws=ws)
        if has_sc:
            y1, y1st, ysh, yshst = res
        else:
            y1, y1st = res
    else:
        xph = _build_phases_s2(xb)                     # small input-only tensor
        y1, y1st, ysh, yshst = conv3x3_s2_proj(xph, w1, ws)

    cnt = float(N * Ho * Wo)
    s1, b1 = _bn_fold_from_stats(y1st, cnt, g1, be1)

    # conv2 (3x3, stride 1), BN1-affine + ReLU fused into the prologue
    y2, y2st = conv3x3_s1(y1, w2, scale=s1, bias=b1)
    s2, b2 = _bn_fold_from_stats(y2st, cnt, g2, be2)

    # shortcut: projection-BN fold or identity
    if has_sc:
        gs, bes = _pad_vec(params["gs"], Cop, 1.0), _pad_vec(params["bes"], Cop)
        ss, bs = _bn_fold_from_stats(yshst, cnt, gs, bes)
        sc2d = ysh.reshape(N * Ho * Wo, Cop)
    else:
        ss = jnp.ones((Cop,), jnp.float32)
        bs = jnp.zeros((Cop,), jnp.float32)
        sc2d = xb.reshape(N * Ho * Wo, Cip)            # Cip == Cop here

    # relu( BN2(conv2) + BN_s(shortcut) )
    out2d = add_dual_bn_relu(y2.reshape(N * Ho * Wo, Cop), s2, b2, sc2d, ss, bs)
    out = out2d.reshape(N, Ho, Wo, Cop)[:, :, :, :Cout]
    return jnp.transpose(out, (0, 3, 1, 2))            # back to NCHW


# ------------------------- pure-JAX reference check -------------------------


def basic_block_reference(x_nchw, params, stride):
    def conv2d(x, w, st, padding):
        return jax.lax.conv_general_dilated(
            x, w, window_strides=(st, st), padding=padding,
            dimension_numbers=("NCHW", "OIHW", "NCHW"))

    def bn(y, gamma, beta):
        mean = jnp.mean(y, axis=(0, 2, 3), keepdims=True)
        var = jnp.mean((y - mean) ** 2, axis=(0, 2, 3), keepdims=True)
        return (gamma[None, :, None, None] * (y - mean) / jnp.sqrt(var + EPS)
                + beta[None, :, None, None])

    x = x_nchw.astype(jnp.float32)
    cin = x.shape[1]
    cout = params["w1"].shape[0]
    y1 = conv2d(x, params["w1"], stride, ((1, 1), (1, 1)))
    a1 = jax.nn.relu(bn(y1, params["g1"], params["be1"]))
    y2 = conv2d(a1, params["w2"], 1, ((1, 1), (1, 1)))
    r = bn(y2, params["g2"], params["be2"])
    if stride != 1 or cin != cout:
        ys = conv2d(x, params["ws"], stride, ((0, 0), (0, 0)))
        sc = bn(ys, params["gs"], params["bes"])
    else:
        sc = x
    return jax.nn.relu(r + sc)


# --------------------------------- main -------------------------------------

if __name__ == "__main__":
    def make_params(key, cin, cout):
        k = jax.random.split(key, 3)
        return {
            "w1": 0.1 * jax.random.normal(k[0], (cout, cin, 3, 3), jnp.float32),
            "g1": jnp.ones((cout,), jnp.float32), "be1": jnp.zeros((cout,), jnp.float32),
            "w2": 0.1 * jax.random.normal(k[1], (cout, cout, 3, 3), jnp.float32),
            "g2": jnp.ones((cout,), jnp.float32), "be2": jnp.zeros((cout,), jnp.float32),
            "ws": 0.1 * jax.random.normal(k[2], (cout, cin, 1, 1), jnp.float32),
            "gs": jnp.ones((cout,), jnp.float32), "bes": jnp.zeros((cout,), jnp.float32),
        }

    key = jax.random.PRNGKey(0)
    kp1, kx1, kp2, kx2 = jax.random.split(key, 4)

    # Case 1: projection shortcut (stride 2, channel change)
    cin, cout, stride = 4, 8, 2
    params = make_params(kp1, cin, cout)
    x = jax.random.normal(kx1, (2, cin, 16, 16), jnp.float32)     # NCHW input
    out = jax.block_until_ready(basic_block_forward(x, params, stride))
    ref = basic_block_reference(x, params, stride)
    assert out.shape == (2, cout, 8, 8), out.shape
    assert bool(jnp.all(out >= 0.0))
    # bf16 MXU operands / bf16 intermediates: tolerances reflect bf16 precision.
    assert bool(jnp.allclose(out, ref, rtol=5e-2, atol=5e-2)), \
        float(jnp.max(jnp.abs(out - ref)))
    assert float(jnp.mean(jnp.abs(out - ref))) < 2e-2

    # Case 2: identity shortcut (stride 1, cin == cout)
    cin2 = cout2 = 8
    params2 = make_params(kp2, cin2, cout2)
    x2 = jax.random.normal(kx2, (2, cin2, 16, 16), jnp.float32)
    out2 = jax.block_until_ready(basic_block_forward(x2, params2, 1))
    ref2 = basic_block_reference(x2, params2, 1)
    assert out2.shape == (2, cout2, 16, 16), out2.shape
    assert bool(jnp.allclose(out2, ref2, rtol=5e-2, atol=5e-2)), \
        float(jnp.max(jnp.abs(out2 - ref2)))
    assert float(jnp.mean(jnp.abs(out2 - ref2))) < 2e-2

    print("KERNEL_OK")
</pallas_src>

<mosaic_0001>
module attributes {stable_mosaic.version = 11 : i64} {
  func.func @kernel(%arg0: i32, %arg1: memref<4x1x9x9x128xbf16, #tpu.memory_space<vmem>>, %arg2: memref<3x384x128xbf16, #tpu.memory_space<vmem>>, %arg3: memref<128x128xbf16, #tpu.memory_space<vmem>>, %arg4: memref<1x8x8x128xbf16, #tpu.memory_space<vmem>>, %arg5: memref<1x2x128xf32, #tpu.memory_space<vmem>>, %arg6: memref<1x8x8x128xbf16, #tpu.memory_space<vmem>>, %arg7: memref<1x2x128xf32, #tpu.memory_space<vmem>>, %arg8: memref<2x9x8x384xf32, #tpu.memory_space<vmem>>) attributes {dimension_semantics = [#tpu.dimension_semantics<parallel>], iteration_bounds = array<i64: 2>, scalar_prefetch = 0 : i64, scratch_operands = 1 : i64, tpu.core_type = #tpu.core_type<tc>, window_params = [{transform_indices = @transform_0, window_bounds = array<i64: 4, 1, 9, 9, 128>}, {pipeline_mode = #tpu.pipeline_mode<synchronous>, transform_indices = @transform_1, window_bounds = array<i64: 3, 384, 128>}, {pipeline_mode = #tpu.pipeline_mode<synchronous>, transform_indices = @transform_2, window_bounds = array<i64: 128, 128>}, {transform_indices = @transform_3, window_bounds = array<i64: 1, 8, 8, 128>}, {transform_indices = @transform_4, window_bounds = array<i64: 1, 2, 128>}, {transform_indices = @transform_5, window_bounds = array<i64: 1, 8, 8, 128>}, {transform_indices = @transform_6, window_bounds = array<i64: 1, 2, 128>}]} {
    %c0 = arith.constant 0 : index
    %c0_0 = arith.constant 0 : index
    %c0_1 = arith.constant 0 : index
    %c0_2 = arith.constant 0 : index
    %c0_3 = arith.constant 0 : index
    %0 = vector.load %arg1[%c0, %c0_0, %c0_1, %c0_2, %c0_3] : memref<4x1x9x9x128xbf16, #tpu.memory_space<vmem>>, vector<1x1x9x8x128xbf16>
    %1 = vector.shape_cast %0 : vector<1x1x9x8x128xbf16> to vector<9x8x128xbf16>
    %2 = arith.extf %1 : vector<9x8x128xbf16> to vector<9x8x128xf32>
    %c0_4 = arith.constant 0 : index
    %c0_5 = arith.constant 0 : index
    %c0_6 = arith.constant 0 : index
    %c0_7 = arith.constant 0 : index
    %3 = vector.load %arg8[%c0_4, %c0_5, %c0_6, %c0_7] : memref<2x9x8x384xf32, #tpu.memory_space<vmem>>, vector<1x9x8x128xf32>
    %4 = vector.shape_cast %3 : vector<1x9x8x128xf32> to vector<9x8x128xf32>
    %5 = vector.shape_cast %2 : vector<9x8x128xf32> to vector<1x9x8x128xf32>
    tpu.vector_store %arg8[%c0_4, %c0_5, %c0_6, %c0_7], %5 {strides = array<i32>} : memref<2x9x8x384xf32, #tpu.memory_space<vmem>>, vector<1x9x8x128xf32>,
    %c1 = arith.constant 1 : index
    %c0_8 = arith.constant 0 : index
    %c0_9 = arith.constant 0 : index
    %c0_10 = arith.constant 0 : index
    %c0_11 = arith.constant 0 : index
    %6 = vector.load %arg1[%c1, %c0_8, %c0_9, %c0_10, %c0_11] : memref<4x1x9x9x128xbf16, #tpu.memory_space<vmem>>, vector<1x1x9x8x128xbf16>
    %7 = vector.shape_cast %6 : vector<1x1x9x8x128xbf16> to vector<9x8x128xbf16>
    %8 = arith.extf %7 : vector<9x8x128xbf16> to vector<9x8x128xf32>
    %c0_12 = arith.constant 0 : index
    %c0_13 = arith.constant 0 : index
    %c0_14 = arith.constant 0 : index
    %c128 = arith.constant 128 : index
    %9 = vector.load %arg8[%c0_12, %c0_13, %c0_14, %c128] : memref<2x9x8x384xf32, #tpu.memory_space<vmem>>, vector<1x9x8x128xf32>
    %10 = vector.shape_cast %9 : vector<1x9x8x128xf32> to vector<9x8x128xf32>
    %11 = vector.shape_cast %8 : vector<9x8x128xf32> to vector<1x9x8x128xf32>
    tpu.vector_store %arg8[%c0_12, %c0_13, %c0_14, %c128], %11 {strides = array<i32>} : memref<2x9x8x384xf32, #tpu.memory_space<vmem>>, vector<1x9x8x128xf32>,
    %c0_15 = arith.constant 0 : index
    %c0_16 = arith.constant 0 : index
    %c0_17 = arith.constant 0 : index
    %c1_18 = arith.constant 1 : index
    %c0_19 = arith.constant 0 : index
    %12 = vector.load %arg1[%c0_15, %c0_16, %c0_17, %c1_18, %c0_19] : memref<4x1x9x9x128xbf16, #tpu.memory_space<vmem>>, vector<1x1x9x8x128xbf16>
    %13 = vector.shape_cast %12 : vector<1x1x9x8x128xbf16> to vector<9x8x128xbf16>
    %14 = arith.extf %13 : vector<9x8x128xbf16> to vector<9x8x128xf32>
    %c0_20 = arith.constant 0 : index
    %c0_21 = arith.constant 0 : index
    %c0_22 = arith.constant 0 : index
    %c256 = arith.constant 256 : index
    %15 = vector.load %arg8[%c0_20, %c0_21, %c0_22, %c256] : memref<2x9x8x384xf32, #tpu.memory_space<vmem>>, vector<1x9x8x128xf32>
    %16 = vector.shape_cast %15 : vector<1x9x8x128xf32> to vector<9x8x128xf32>
    %17 = vector.shape_cast %14 : vector<9x8x128xf32> to vector<1x9x8x128xf32>
    tpu.vector_store %arg8[%c0_20, %c0_21, %c0_22, %c256], %17 {strides = array<i32>} : memref<2x9x8x384xf32, #tpu.memory_space<vmem>>, vector<1x9x8x128xf32>,
    %c2 = arith.constant 2 : index
    %c0_23 = arith.constant 0 : index
    %c0_24 = arith.constant 0 : index
    %c0_25 = arith.constant 0 : index
    %c0_26 = arith.constant 0 : index
    %18 = vector.load %arg1[%c2, %c0_23, %c0_24, %c0_25, %c0_26] : memref<4x1x9x9x128xbf16, #tpu.memory_space<vmem>>, vector<1x1x9x8x128xbf16>
    %19 = vector.shape_cast %18 : vector<1x1x9x8x128xbf16> to vector<9x8x128xbf16>
    %20 = arith.extf %19 : vector<9x8x128xbf16> to vector<9x8x128xf32>
    %c1_27 = arith.constant 1 : index
    %c0_28 = arith.constant 0 : index
    %c0_29 = arith.constant 0 : index
    %c0_30 = arith.constant 0 : index
    %21 = vector.load %arg8[%c1_27, %c0_28, %c0_29, %c0_30] : memref<2x9x8x384xf32, #tpu.memory_space<vmem>>, vector<1x9x8x128xf32>
    %22 = vector.shape_cast %21 : vector<1x9x8x128xf32> to vector<9x8x128xf32>
    %23 = vector.shape_cast %20 : vector<9x8x128xf32> to vector<1x9x8x128xf32>
    tpu.vector_store %arg8[%c1_27, %c0_28, %c0_29, %c0_30], %23 {strides = array<i32>} : memref<2x9x8x384xf32, #tpu.memory_space<vmem>>, vector<1x9x8x128xf32>,
    %c3 = arith.constant 3 : index
    %c0_31 = arith.constant 0 : index
    %c0_32 = arith.constant 0 : index
    %c0_33 = arith.constant 0 : index
    %c0_34 = arith.constant 0 : index
    %24 = vector.load %arg1[%c3, %c0_31, %c0_32, %c0_33, %c0_34] : memref<4x1x9x9x128xbf16, #tpu.memory_space<vmem>>, vector<1x1x9x8x128xbf16>
    %25 = vector.shape_cast %24 : vector<1x1x9x8x128xbf16> to vector<9x8x128xbf16>
    %26 = arith.extf %25 : vector<9x8x128xbf16> to vector<9x8x128xf32>
    %c1_35 = arith.constant 1 : index
    %c0_36 = arith.constant 0 : index
    %c0_37 = arith.constant 0 : index
    %c128_38 = arith.constant 128 : index
    %27 = vector.load %arg8[%c1_35, %c0_36, %c0_37, %c128_38] : memref<2x9x8x384xf32, #tpu.memory_space<vmem>>, vector<1x9x8x128xf32>
    %28 = vector.shape_cast %27 : vector<1x9x8x128xf32> to vector<9x8x128xf32>
    %29 = vector.shape_cast %26 : vector<9x8x128xf32> to vector<1x9x8x128xf32>
    tpu.vector_store %arg8[%c1_35, %c0_36, %c0_37, %c128_38], %29 {strides = array<i32>} : memref<2x9x8x384xf32, #tpu.memory_space<vmem>>, vector<1x9x8x128xf32>,
    %c2_39 = arith.constant 2 : index
    %c0_40 = arith.constant 0 : index
    %c0_41 = arith.constant 0 : index
    %c1_42 = arith.constant 1 : index
    %c0_43 = arith.constant 0 : index
    %30 = vector.load %arg1[%c2_39, %c0_40, %c0_41, %c1_42, %c0_43] : memref<4x1x9x9x128xbf16, #tpu.memory_space<vmem>>, vector<1x1x9x8x128xbf16>
    %31 = vector.shape_cast %30 : vector<1x1x9x8x128xbf16> to vector<9x8x128xbf16>
    %32 = arith.extf %31 : vector<9x8x128xbf16> to vector<9x8x128xf32>
    %c1_44 = arith.constant 1 : index
    %c0_45 = arith.constant 0 : index
    %c0_46 = arith.constant 0 : index
    %c256_47 = arith.constant 256 : index
    %33 = vector.load %arg8[%c1_44, %c0_45, %c0_46, %c256_47] : memref<2x9x8x384xf32, #tpu.memory_space<vmem>>, vector<1x9x8x128xf32>
    %34 = vector.shape_cast %33 : vector<1x9x8x128xf32> to vector<9x8x128xf32>
    %35 = vector.shape_cast %32 : vector<9x8x128xf32> to vector<1x9x8x128xf32>
    tpu.vector_store %arg8[%c1_44, %c0_45, %c0_46, %c256_47], %35 {strides = array<i32>} : memref<2x9x8x384xf32, #tpu.memory_space<vmem>>, vector<1x9x8x128xf32>,
    %cst = arith.constant 0.000000e+00 : f32
    %36 = vector.broadcast %cst : f32 to vector<64x128xf32>
    %c0_48 = arith.constant 0 : index
    %c0_49 = arith.constant 0 : index
    %c0_50 = arith.constant 0 : index
    %c0_51 = arith.constant 0 : index
    %37 = vector.load %arg8[%c0_48, %c0_49, %c0_50, %c0_51] : memref<2x9x8x384xf32, #tpu.memory_space<vmem>>, vector<1x8x8x384xf32>
    %38 = vector.shape_cast %37 : vector<1x8x8x384xf32> to vector<8x8x384xf32>
    %39 = vector.shape_cast %38 : vector<8x8x384xf32> to vector<64x384xf32>
    %40 = arith.truncf %39 : vector<64x384xf32> to vector<64x384xbf16>
    %c0_52 = arith.constant 0 : index
    %c0_53 = arith.constant 0 : index
    %c0_54 = arith.constant 0 : index
    %41 = vector.load %arg2[%c0_52, %c0_53, %c0_54] : memref<3x384x128xbf16, #tpu.memory_space<vmem>>, vector<1x384x128xbf16>
    %42 = vector.shape_cast %41 : vector<1x384x128xbf16> to vector<384x128xbf16>
    %cst_55 = arith.constant dense<0.000000e+00> : vector<64x128xf32>
    %43 = tpu.matmul %40, %42, %cst_55 {dimension_numbers = #tpu.dot_dimension_numbers<[1], [0], [0], [1], [0, 0, 1, 1], [], []>} : vector<64x384xbf16>, vector<384x128xbf16>, vector<64x128xf32> -> vector<64x128xf32>
    %44 = arith.addf %36, %43 : vector<64x128xf32>
    %c1_56 = arith.constant 1 : index
    %c0_57 = arith.constant 0 : index
    %c0_58 = arith.constant 0 : index
    %c0_59 = arith.constant 0 : index
    %45 = vector.load %arg8[%c1_56, %c0_57, %c0_58, %c0_59] : memref<2x9x8x384xf32, #tpu.memory_space<vmem>>, vector<1x8x8x384xf32>
    %46 = vector.shape_cast %45 : vector<1x8x8x384xf32> to vector<8x8x384xf32>
    %47 = vector.shape_cast %46 : vector<8x8x384xf32> to vector<64x384xf32>
    %48 = arith.truncf %47 : vector<64x384xf32> to vector<64x384xbf16>
    %c1_60 = arith.constant 1 : index
    %c0_61 = arith.constant 0 : index
    %c0_62 = arith.constant 0 : index
    %49 = vector.load %arg2[%c1_60, %c0_61, %c0_62] : memref<3x384x128xbf16, #tpu.memory_space<vmem>>, vector<1x384x128xbf16>
    %50 = vector.shape_cast %49 : vector<1x384x128xbf16> to vector<384x128xbf16>
    %cst_63 = arith.constant dense<0.000000e+00> : vector<64x128xf32>
    %51 = tpu.matmul %48, %50, %cst_63 {dimension_numbers = #tpu.dot_dimension_numbers<[1], [0], [0], [1], [0, 0, 1, 1], [], []>} : vector<64x384xbf16>, vector<384x128xbf16>, vector<64x128xf32> -> vector<64x128xf32>
    %52 = arith.addf %44, %51 : vector<64x128xf32>
    %c0_64 = arith.constant 0 : index
    %c1_65 = arith.constant 1 : index
    %c0_66 = arith.constant 0 : index
    %c0_67 = arith.constant 0 : index
    %53 = vector.load %arg8[%c0_64, %c1_65, %c0_66, %c0_67] : memref<2x9x8x384xf32, #tpu.memory_space<vmem>>, vector<1x8x8x384xf32>
    %54 = vector.shape_cast %53 : vector<1x8x8x384xf32> to vector<8x8x384xf32>
    %55 = vector.shape_cast %54 : vector<8x8x384xf32> to vector<64x384xf32>
    %56 = arith.truncf %55 : vector<64x384xf32> to vector<64x384xbf16>
    %c2_68 = arith.constant 2 : index
    %c0_69 = arith.constant 0 : index
    %c0_70 = arith.constant 0 : index
    %57 = vector.load %arg2[%c2_68, %c0_69, %c0_70] : memref<3x384x128xbf16, #tpu.memory_space<vmem>>, vector<1x384x128xbf16>
    %58 = vector.shape_cast %57 : vector<1x384x128xbf16> to vector<384x128xbf16>
    %cst_71 = arith.constant dense<0.000000e+00> : vector<64x128xf32>
    %59 = tpu.matmul %56, %58, %cst_71 {dimension_numbers = #tpu.dot_dimension_numbers<[1], [0], [0], [1], [0, 0, 1, 1], [], []>} : vector<64x384xbf16>, vector<384x128xbf16>, vector<64x128xf32> -> vector<64x128xf32>
    %60 = arith.addf %52, %59 : vector<64x128xf32>
    %61 = vector.shape_cast %60 : vector<64x128xf32> to vector<8x8x128xf32>
    %62 = arith.truncf %61 : vector<8x8x128xf32> to vector<8x8x128xbf16>
    %c0_72 = arith.constant 0 : index
    %c0_73 = arith.constant 0 : index
    %c0_74 = arith.constant 0 : index
    %c0_75 = arith.constant 0 : index
    %63 = vector.load %arg4[%c0_72, %c0_73, %c0_74, %c0_75] : memref<1x8x8x128xbf16, #tpu.memory_space<vmem>>, vector<1x8x8x128xbf16>
    %64 = vector.shape_cast %63 : vector<1x8x8x128xbf16> to vector<8x8x128xbf16>
    %65 = vector.shape_cast %62 : vector<8x8x128xbf16> to vector<1x8x8x128xbf16>
    tpu.vector_store %arg4[%c0_72, %c0_73, %c0_74, %c0_75], %65 {strides = array<i32>} : memref<1x8x8x128xbf16, #tpu.memory_space<vmem>>, vector<1x8x8x128xbf16>,
    %cst_76 = arith.constant dense<0.000000e+00> : vector<128xf32>
    %66 = vector.multi_reduction <add>, %60, %cst_76 [0] : vector<64x128xf32> to vector<128xf32>
    %67 = vector.shape_cast %66 : vector<128xf32> to vector<1x128xf32>
    %68 = arith.mulf %60, %60 : vector<64x128xf32>
    %cst_77 = arith.constant dense<0.000000e+00> : vector<128xf32>
    %69 = vector.multi_reduction <add>, %68, %cst_77 [0] : vector<64x128xf32> to vector<128xf32>
    %70 = vector.shape_cast %69 : vector<128xf32> to vector<1x128xf32>
    %71 = tpu.concatenate %67, %70 in 0 : vector<1x128xf32>, vector<1x128xf32> -> vector<2x128xf32>
    %c0_78 = arith.constant 0 : index
    %c0_79 = arith.constant 0 : index
    %c0_80 = arith.constant 0 : index
    %72 = vector.load %arg5[%c0_78, %c0_79, %c0_80] : memref<1x2x128xf32, #tpu.memory_space<vmem>>, vector<1x2x128xf32>
    %73 = vector.shape_cast %72 : vector<1x2x128xf32> to vector<2x128xf32>
    %74 = vector.shape_cast %71 : vector<2x128xf32> to vector<1x2x128xf32>
    tpu.vector_store %arg5[%c0_78, %c0_79, %c0_80], %74 {strides = array<i32>} : memref<1x2x128xf32, #tpu.memory_space<vmem>>, vector<1x2x128xf32>,
    %c1_81 = arith.constant 1 : index
    %c0_82 = arith.constant 0 : index
    %c0_83 = arith.constant 0 : index
    %c128_84 = arith.constant 128 : index
    %75 = vector.load %arg8[%c1_81, %c0_82, %c0_83, %c128_84] : memref<2x9x8x384xf32, #tpu.memory_space<vmem>>, vector<1x8x8x128xf32>
    %76 = vector.shape_cast %75 : vector<1x8x8x128xf32> to vector<8x8x128xf32>
    %77 = vector.shape_cast %76 : vector<8x8x128xf32> to vector<64x128xf32>
    %78 = arith.truncf %77 : vector<64x128xf32> to vector<64x128xbf16>
    %c0_85 = arith.constant 0 : index
    %c0_86 = arith.constant 0 : index
    %79 = vector.load %arg3[%c0_85, %c0_86] : memref<128x128xbf16, #tpu.memory_space<vmem>>, vector<128x128xbf16>
    %cst_87 = arith.constant dense<0.000000e+00> : vector<64x128xf32>
    %80 = tpu.matmul %78, %79, %cst_87 {dimension_numbers = #tpu.dot_dimension_numbers<[1], [0], [0], [1], [0, 0, 1, 1], [], []>} : vector<64x128xbf16>, vector<128x128xbf16>, vector<64x128xf32> -> vector<64x128xf32>
    %81 = vector.shape_cast %80 : vector<64x128xf32> to vector<8x8x128xf32>
    %82 = arith.truncf %81 : vector<8x8x128xf32> to vector<8x8x128xbf16>
    %c0_88 = arith.constant 0 : index
    %c0_89 = arith.constant 0 : index
    %c0_90 = arith.constant 0 : index
    %c0_91 = arith.constant 0 : index
    %83 = vector.load %arg6[%c0_88, %c0_89, %c0_90, %c0_91] : memref<1x8x8x128xbf16, #tpu.memory_space<vmem>>, vector<1x8x8x128xbf16>
    %84 = vector.shape_cast %83 : vector<1x8x8x128xbf16> to vector<8x8x128xbf16>
    %85 = vector.shape_cast %82 : vector<8x8x128xbf16> to vector<1x8x8x128xbf16>
    tpu.vector_store %arg6[%c0_88, %c0_89, %c0_90, %c0_91], %85 {strides = array<i32>} : memref<1x8x8x128xbf16, #tpu.memory_space<vmem>>, vector<1x8x8x128xbf16>,
    %cst_92 = arith.constant dense<0.000000e+00> : vector<128xf32>
    %86 = vector.multi_reduction <add>, %80, %cst_92 [0] : vector<64x128xf32> to vector<128xf32>
    %87 = vector.shape_cast %86 : vector<128xf32> to vector<1x128xf32>
    %88 = arith.mulf %80, %80 : vector<64x128xf32>
    %cst_93 = arith.constant dense<0.000000e+00> : vector<128xf32>
    %89 = vector.multi_reduction <add>, %88, %cst_93 [0] : vector<64x128xf32> to vector<128xf32>
    %90 = vector.shape_cast %89 : vector<128xf32> to vector<1x128xf32>
    %91 = tpu.concatenate %87, %90 in 0 : vector<1x128xf32>, vector<1x128xf32> -> vector<2x128xf32>
    %c0_94 = arith.constant 0 : index
    %c0_95 = arith.constant 0 : index
    %c0_96 = arith.constant 0 : index
    %92 = vector.load %arg7[%c0_94, %c0_95, %c0_96] : memref<1x2x128xf32, #tpu.memory_space<vmem>>, vector<1x2x128xf32>
    %93 = vector.shape_cast %92 : vector<1x2x128xf32> to vector<2x128xf32>
    %94 = vector.shape_cast %91 : vector<2x128xf32> to vector<1x2x128xf32>
    tpu.vector_store %arg7[%c0_94, %c0_95, %c0_96], %94 {strides = array<i32>} : memref<1x2x128xf32, #tpu.memory_space<vmem>>, vector<1x2x128xf32>,
    return
  }
  func.func @transform_0(%arg0: i32) -> (i32, i32, i32, i32, i32) {
    %c0_i32 = arith.constant 0 : i32
    %c0_i32_0 = arith.constant 0 : i32
    %c0_i32_1 = arith.constant 0 : i32
    %c0_i32_2 = arith.constant 0 : i32
    %c0_i32_3 = arith.constant 0 : i32
    return %c0_i32, %arg0, %c0_i32_0, %c0_i32_1, %c0_i32_2 : i32, i32, i32, i32, i32
  }
  func.func @transform_1(%arg0: i32) -> (i32, i32, i32) {
    %c0_i32 = arith.constant 0 : i32
    %c0_i32_0 = arith.constant 0 : i32
    %c0_i32_1 = arith.constant 0 : i32
    %c0_i32_2 = arith.constant 0 : i32
    return %c0_i32, %c0_i32_0, %c0_i32_1 : i32, i32, i32
  }
  func.func @transform_2(%arg0: i32) -> (i32, i32) {
    %c0_i32 = arith.constant 0 : i32
    %c0_i32_0 = arith.constant 0 : i32
    %c0_i32_1 = arith.constant 0 : i32
    return %c0_i32, %c0_i32_0 : i32, i32
  }
  func.func @transform_3(%arg0: i32) -> (i32, i32, i32, i32) {
    %c0_i32 = arith.constant 0 : i32
    %c0_i32_0 = arith.constant 0 : i32
    %c0_i32_1 = arith.constant 0 : i32
    %c0_i32_2 = arith.constant 0 : i32
    return %arg0, %c0_i32, %c0_i32_0, %c0_i32_1 : i32, i32, i32, i32
  }
  func.func @transform_4(%arg0: i32) -> (i32, i32, i32) {
    %c0_i32 = arith.constant 0 : i32
    %c0_i32_0 = arith.constant 0 : i32
    %c0_i32_1 = arith.constant 0 : i32
    return %arg0, %c0_i32, %c0_i32_0 : i32, i32, i32
  }
  func.func @transform_5(%arg0: i32) -> (i32, i32, i32, i32) {
    %c0_i32 = arith.constant 0 : i32
    %c0_i32_0 = arith.constant 0 : i32
    %c0_i32_1 = arith.constant 0 : i32
    %c0_i32_2 = arith.constant 0 : i32
    return %arg0, %c0_i32, %c0_i32_0, %c0_i32_1 : i32, i32, i32, i32
  }
  func.func @transform_6(%arg0: i32) -> (i32, i32, i32) {
    %c0_i32 = arith.constant 0 : i32
    %c0_i32_0 = arith.constant 0 : i32
    %c0_i32_1 = arith.constant 0 : i32
    return %arg0, %c0_i32, %c0_i32_0 : i32, i32, i32
  }
}

module attributes {stable_mosaic.version = 11 : i64} {
  func.func @kernel(%arg0: i32, %arg1: memref<1x8x8x128xbf16, #tpu.memory_space<vmem>>, %arg2: memref<1x128xf32, #tpu.memory_space<vmem>>, %arg3: memref<1x128xf32, #tpu.memory_space<vmem>>, %arg4: memref<3x384x128xbf16, #tpu.memory_space<vmem>>, %arg5: memref<1x8x8x128xbf16, #tpu.memory_space<vmem>>, %arg6: memref<1x2x128xf32, #tpu.memory_space<vmem>>, %arg7: memref<10x8x384xf32, #tpu.memory_space<vmem>>) attributes {dimension_semantics = [#tpu.dimension_semantics<parallel>], iteration_bounds = array<i64: 2>, scalar_prefetch = 0 : i64, scratch_operands = 1 : i64, tpu.core_type = #tpu.core_type<tc>, window_params = [{transform_indices = @transform_0, window_bounds = array<i64: 1, 8, 8, 128>}, {pipeline_mode = #tpu.pipeline_mode<synchronous>, transform_indices = @transform_1, window_bounds = array<i64: 1, 128>}, {pipeline_mode = #tpu.pipeline_mode<synchronous>, transform_indices = @transform_2, window_bounds = array<i64: 1, 128>}, {pipeline_mode = #tpu.pipeline_mode<synchronous>, transform_indices = @transform_3, window_bounds = array<i64: 3, 384, 128>}, {transform_indices = @transform_4, window_bounds = array<i64: 1, 8, 8, 128>}, {transform_indices = @transform_5, window_bounds = array<i64: 1, 2, 128>}]} {
    %c0 = arith.constant 0 : index
    %c0_0 = arith.constant 0 : index
    %c0_1 = arith.constant 0 : index
    %c0_2 = arith.constant 0 : index
    %0 = vector.load %arg1[%c0, %c0_0, %c0_1, %c0_2] : memref<1x8x8x128xbf16, #tpu.memory_space<vmem>>, vector<1x8x8x128xbf16>
    %1 = vector.shape_cast %0 : vector<1x8x8x128xbf16> to vector<8x8x128xbf16>
    %2 = arith.extf %1 : vector<8x8x128xbf16> to vector<8x8x128xf32>
    %c0_3 = arith.constant 0 : index
    %c0_4 = arith.constant 0 : index
    %3 = vector.load %arg2[%c0_3, %c0_4] : memref<1x128xf32, #tpu.memory_space<vmem>>, vector<1x128xf32>
    %4 = vector.shape_cast %3 : vector<1x128xf32> to vector<1x1x128xf32>
    %5 = vector.broadcast %4 : vector<1x1x128xf32> to vector<8x8x128xf32>
    %6 = arith.mulf %2, %5 : vector<8x8x128xf32>
    %c0_5 = arith.constant 0 : index
    %c0_6 = arith.constant 0 : index
    %7 = vector.load %arg3[%c0_5, %c0_6] : memref<1x128xf32, #tpu.memory_space<vmem>>, vector<1x128xf32>
    %8 = vector.shape_cast %7 : vector<1x128xf32> to vector<1x1x128xf32>
    %9 = vector.broadcast %8 : vector<1x1x128xf32> to vector<8x8x128xf32>
    %10 = arith.addf %6, %9 : vector<8x8x128xf32>
    %cst = arith.constant 0.000000e+00 : f32
    %11 = vector.broadcast %cst : f32 to vector<8x8x128xf32>
    %12 = arith.maximumf %10, %11 : vector<8x8x128xf32>
    %cst_7 = arith.constant 0.000000e+00 : f32
    %13 = vector.broadcast %cst_7 : f32 to vector<1x8x384xf32>
    %c0_8 = arith.constant 0 : index
    %c0_9 = arith.constant 0 : index
    %c0_10 = arith.constant 0 : index
    %14 = vector.load %arg7[%c0_8, %c0_9, %c0_10] : memref<10x8x384xf32, #tpu.memory_space<vmem>>, vector<1x8x384xf32>
    tpu.vector_store %arg7[%c0_8, %c0_9, %c0_10], %13 {strides = array<i32>} : memref<10x8x384xf32, #tpu.memory_space<vmem>>, vector<1x8x384xf32>,
    %c9 = arith.constant 9 : index
    %c0_11 = arith.constant 0 : index
    %c0_12 = arith.constant 0 : index
    %15 = vector.load %arg7[%c9, %c0_11, %c0_12] : memref<10x8x384xf32, #tpu.memory_space<vmem>>, vector<1x8x384xf32>
    tpu.vector_store %arg7[%c9, %c0_11, %c0_12], %13 {strides = array<i32>} : memref<10x8x384xf32, #tpu.memory_space<vmem>>, vector<1x8x384xf32>,
    %cst_13 = arith.constant 0.000000e+00 : f32
    %16 = vector.broadcast %cst_13 : f32 to vector<8x1x128xf32>
    %c1 = arith.constant 1 : index
    %c0_14 = arith.constant 0 : index
    %c0_15 = arith.constant 0 : index
    %17 = vector.load %arg7[%c1, %c0_14, %c0_15] : memref<10x8x384xf32, #tpu.memory_space<vmem>>, vector<8x1x128xf32>
    tpu.vector_store %arg7[%c1, %c0_14, %c0_15], %16 {strides = array<i32>} : memref<10x8x384xf32, #tpu.memory_space<vmem>>, vector<8x1x128xf32>,
    %c1_16 = arith.constant 1 : index
    %c7 = arith.constant 7 : index
    %c256 = arith.constant 256 : index
    %18 = vector.load %arg7[%c1_16, %c7, %c256] : memref<10x8x384xf32, #tpu.memory_space<vmem>>, vector<8x1x128xf32>
    tpu.vector_store %arg7[%c1_16, %c7, %c256], %16 {strides = array<i32>} : memref<10x8x384xf32, #tpu.memory_space<vmem>>, vector<8x1x128xf32>,
    %19 = vector.extract_strided_slice %12 {offsets = [0, 0, 0], sizes = [8, 7, 128], strides = [1, 1, 1]} : vector<8x8x128xf32> to vector<8x7x128xf32>
    %c1_17 = arith.constant 1 : index
    %c1_18 = arith.constant 1 : index
    %c0_19 = arith.constant 0 : index
    %20 = vector.load %arg7[%c1_17, %c1_18, %c0_19] : memref<10x8x384xf32, #tpu.memory_space<vmem>>, vector<8x7x128xf32>
    tpu.vector_store %arg7[%c1_17, %c1_18, %c0_19], %19 {strides = array<i32>} : memref<10x8x384xf32, #tpu.memory_space<vmem>>, vector<8x7x128xf32>,
    %c1_20 = arith.constant 1 : index
    %c0_21 = arith.constant 0 : index
    %c128 = arith.constant 128 : index
    %21 = vector.load %arg7[%c1_20, %c0_21, %c128] : memref<10x8x384xf32, #tpu.memory_space<vmem>>, vector<8x8x128xf32>
    tpu.vector_store %arg7[%c1_20, %c0_21, %c128], %12 {strides = array<i32>} : memref<10x8x384xf32, #tpu.memory_space<vmem>>, vector<8x8x128xf32>,
    %22 = vector.extract_strided_slice %12 {offsets = [0, 1, 0], sizes = [8, 7, 128], strides = [1, 1, 1]} : vector<8x8x128xf32> to vector<8x7x128xf32>
    %c1_22 = arith.constant 1 : index
    %c0_23 = arith.constant 0 : index
    %c256_24 = arith.constant 256 : index
    %23 = vector.load %arg7[%c1_22, %c0_23, %c256_24] : memref<10x8x384xf32, #tpu.memory_space<vmem>>, vector<8x7x128xf32>
    tpu.vector_store %arg7[%c1_22, %c0_23, %c256_24], %22 {strides = array<i32>} : memref<10x8x384xf32, #tpu.memory_space<vmem>>, vector<8x7x128xf32>,
    %cst_25 = arith.constant 0.000000e+00 : f32
    %24 = vector.broadcast %cst_25 : f32 to vector<64x128xf32>
    %c0_26 = arith.constant 0 : index
    %c0_27 = arith.constant 0 : index
    %c0_28 = arith.constant 0 : index
    %25 = vector.load %arg7[%c0_26, %c0_27, %c0_28] : memref<10x8x384xf32, #tpu.memory_space<vmem>>, vector<8x8x384xf32>
    %26 = vector.shape_cast %25 : vector<8x8x384xf32> to vector<64x384xf32>
    %27 = arith.truncf %26 : vector<64x384xf32> to vector<64x384xbf16>
    %c0_29 = arith.constant 0 : index
    %c0_30 = arith.constant 0 : index
    %c0_31 = arith.constant 0 : index
    %28 = vector.load %arg4[%c0_29, %c0_30, %c0_31] : memref<3x384x128xbf16, #tpu.memory_space<vmem>>, vector<1x384x128xbf16>
    %29 = vector.shape_cast %28 : vector<1x384x128xbf16> to vector<384x128xbf16>
    %cst_32 = arith.constant dense<0.000000e+00> : vector<64x128xf32>
    %30 = tpu.matmul %27, %29, %cst_32 {dimension_numbers = #tpu.dot_dimension_numbers<[1], [0], [0], [1], [0, 0, 1, 1], [], []>} : vector<64x384xbf16>, vector<384x128xbf16>, vector<64x128xf32> -> vector<64x128xf32>
    %31 = arith.addf %24, %30 : vector<64x128xf32>
    %c1_33 = arith.constant 1 : index
    %c0_34 = arith.constant 0 : index
    %c0_35 = arith.constant 0 : index
    %32 = vector.load %arg7[%c1_33, %c0_34, %c0_35] : memref<10x8x384xf32, #tpu.memory_space<vmem>>, vector<8x8x384xf32>
    %33 = vector.shape_cast %32 : vector<8x8x384xf32> to vector<64x384xf32>
    %34 = arith.truncf %33 : vector<64x384xf32> to vector<64x384xbf16>
    %c1_36 = arith.constant 1 : index
    %c0_37 = arith.constant 0 : index
    %c0_38 = arith.constant 0 : index
    %35 = vector.load %arg4[%c1_36, %c0_37, %c0_38] : memref<3x384x128xbf16, #tpu.memory_space<vmem>>, vector<1x384x128xbf16>
    %36 = vector.shape_cast %35 : vector<1x384x128xbf16> to vector<384x128xbf16>
    %cst_39 = arith.constant dense<0.000000e+00> : vector<64x128xf32>
    %37 = tpu.matmul %34, %36, %cst_39 {dimension_numbers = #tpu.dot_dimension_numbers<[1], [0], [0], [1], [0, 0, 1, 1], [], []>} : vector<64x384xbf16>, vector<384x128xbf16>, vector<64x128xf32> -> vector<64x128xf32>
    %38 = arith.addf %31, %37 : vector<64x128xf32>
    %c2 = arith.constant 2 : index
    %c0_40 = arith.constant 0 : index
    %c0_41 = arith.constant 0 : index
    %39 = vector.load %arg7[%c2, %c0_40, %c0_41] : memref<10x8x384xf32, #tpu.memory_space<vmem>>, vector<8x8x384xf32>
    %40 = vector.shape_cast %39 : vector<8x8x384xf32> to vector<64x384xf32>
    %41 = arith.truncf %40 : vector<64x384xf32> to vector<64x384xbf16>
    %c2_42 = arith.constant 2 : index
    %c0_43 = arith.constant 0 : index
    %c0_44 = arith.constant 0 : index
    %42 = vector.load %arg4[%c2_42, %c0_43, %c0_44] : memref<3x384x128xbf16, #tpu.memory_space<vmem>>, vector<1x384x128xbf16>
    %43 = vector.shape_cast %42 : vector<1x384x128xbf16> to vector<384x128xbf16>
    %cst_45 = arith.constant dense<0.000000e+00> : vector<64x128xf32>
    %44 = tpu.matmul %41, %43, %cst_45 {dimension_numbers = #tpu.dot_dimension_numbers<[1], [0], [0], [1], [0, 0, 1, 1], [], []>} : vector<64x384xbf16>, vector<384x128xbf16>, vector<64x128xf32> -> vector<64x128xf32>
    %45 = arith.addf %38, %44 : vector<64x128xf32>
    %46 = vector.shape_cast %45 : vector<64x128xf32> to vector<8x8x128xf32>
    %47 = arith.truncf %46 : vector<8x8x128xf32> to vector<8x8x128xbf16>
    %c0_46 = arith.constant 0 : index
    %c0_47 = arith.constant 0 : index
    %c0_48 = arith.constant 0 : index
    %c0_49 = arith.constant 0 : index
    %48 = vector.load %arg5[%c0_46, %c0_47, %c0_48, %c0_49] : memref<1x8x8x128xbf16, #tpu.memory_space<vmem>>, vector<1x8x8x128xbf16>
    %49 = vector.shape_cast %48 : vector<1x8x8x128xbf16> to vector<8x8x128xbf16>
    %50 = vector.shape_cast %47 : vector<8x8x128xbf16> to vector<1x8x8x128xbf16>
    tpu.vector_store %arg5[%c0_46, %c0_47, %c0_48, %c0_49], %50 {strides = array<i32>} : memref<1x8x8x128xbf16, #tpu.memory_space<vmem>>, vector<1x8x8x128xbf16>,
    %cst_50 = arith.constant dense<0.000000e+00> : vector<128xf32>
    %51 = vector.multi_reduction <add>, %45, %cst_50 [0] : vector<64x128xf32> to vector<128xf32>
    %52 = vector.shape_cast %51 : vector<128xf32> to vector<1x128xf32>
    %53 = arith.mulf %45, %45 : vector<64x128xf32>
    %cst_51 = arith.constant dense<0.000000e+00> : vector<128xf32>
    %54 = vector.multi_reduction <add>, %53, %cst_51 [0] : vector<64x128xf32> to vector<128xf32>
    %55 = vector.shape_cast %54 : vector<128xf32> to vector<1x128xf32>
    %56 = tpu.concatenate %52, %55 in 0 : vector<1x128xf32>, vector<1x128xf32> -> vector<2x128xf32>
    %c0_52 = arith.constant 0 : index
    %c0_53 = arith.constant 0 : index
    %c0_54 = arith.constant 0 : index
    %57 = vector.load %arg6[%c0_52, %c0_53, %c0_54] : memref<1x2x128xf32, #tpu.memory_space<vmem>>, vector<1x2x128xf32>
    %58 = vector.shape_cast %57 : vector<1x2x128xf32> to vector<2x128xf32>
    %59 = vector.shape_cast %56 : vector<2x128xf32> to vector<1x2x128xf32>
    tpu.vector_store %arg6[%c0_52, %c0_53, %c0_54], %59 {strides = array<i32>} : memref<1x2x128xf32, #tpu.memory_space<vmem>>, vector<1x2x128xf32>,
    return
  }
  func.func @transform_0(%arg0: i32) -> (i32, i32, i32, i32) {
    %c0_i32 = arith.constant 0 : i32
    %c0_i32_0 = arith.constant 0 : i32
    %c0_i32_1 = arith.constant 0 : i32
    %c0_i32_2 = arith.constant 0 : i32
    return %arg0, %c0_i32, %c0_i32_0, %c0_i32_1 : i32, i32, i32, i32
  }
  func.func @transform_1(%arg0: i32) -> (i32, i32) {
    %c0_i32 = arith.constant 0 : i32
    %c0_i32_0 = arith.constant 0 : i32
    %c0_i32_1 = arith.constant 0 : i32
    return %c0_i32, %c0_i32_0 : i32, i32
  }
  func.func @transform_2(%arg0: i32) -> (i32, i32) {
    %c0_i32 = arith.constant 0 : i32
    %c0_i32_0 = arith.constant 0 : i32
    %c0_i32_1 = arith.constant 0 : i32
    return %c0_i32, %c0_i32_0 : i32, i32
  }
  func.func @transform_3(%arg0: i32) -> (i32, i32, i32) {
    %c0_i32 = arith.constant 0 : i32
    %c0_i32_0 = arith.constant 0 : i32
    %c0_i32_1 = arith.constant 0 : i32
    %c0_i32_2 = arith.constant 0 : i32
    return %c0_i32, %c0_i32_0, %c0_i32_1 : i32, i32, i32
  }
  func.func @transform_4(%arg0: i32) -> (i32, i32, i32, i32) {
    %c0_i32 = arith.constant 0 : i32
    %c0_i32_0 = arith.constant 0 : i32
    %c0_i32_1 = arith.constant 0 : i32
    %c0_i32_2 = arith.constant 0 : i32
    return %arg0, %c0_i32, %c0_i32_0, %c0_i32_1 : i32, i32, i32, i32
  }
  func.func @transform_5(%arg0: i32) -> (i32, i32, i32) {
    %c0_i32 = arith.constant 0 : i32
    %c0_i32_0 = arith.constant 0 : i32
    %c0_i32_1 = arith.constant 0 : i32
    return %arg0, %c0_i32, %c0_i32_0 : i32, i32, i32
  }
}

module attributes {stable_mosaic.version = 11 : i64} {
  func.func @_add_dual_bn_relu_kernel(%arg0: i32, %arg1: memref<128x128xbf16, #tpu.memory_space<vmem>>, %arg2: memref<1x128xf32, #tpu.memory_space<vmem>>, %arg3: memref<1x128xf32, #tpu.memory_space<vmem>>, %arg4: memref<128x128xbf16, #tpu.memory_space<vmem>>, %arg5: memref<1x128xf32, #tpu.memory_space<vmem>>, %arg6: memref<1x128xf32, #tpu.memory_space<vmem>>, %arg7: memref<128x128xf32, #tpu.memory_space<vmem>>) attributes {dimension_semantics = [#tpu.dimension_semantics<parallel>], iteration_bounds = array<i64: 1>, scalar_prefetch = 0 : i64, scratch_operands = 0 : i64, tpu.core_type = #tpu.core_type<tc>, window_params = [{transform_indices = @transform_0, window_bounds = array<i64: 128, 128>}, {pipeline_mode = #tpu.pipeline_mode<synchronous>, transform_indices = @transform_1, window_bounds = array<i64: 1, 128>}, {pipeline_mode = #tpu.pipeline_mode<synchronous>, transform_indices = @transform_2, window_bounds = array<i64: 1, 128>}, {transform_indices = @transform_3, window_bounds = array<i64: 128, 128>}, {pipeline_mode = #tpu.pipeline_mode<synchronous>, transform_indices = @transform_4, window_bounds = array<i64: 1, 128>}, {pipeline_mode = #tpu.pipeline_mode<synchronous>, transform_indices = @transform_5, window_bounds = array<i64: 1, 128>}, {transform_indices = @transform_6, window_bounds = array<i64: 128, 128>}]} {
    %c0 = arith.constant 0 : index
    %c0_0 = arith.constant 0 : index
    %0 = vector.load %arg1[%c0, %c0_0] : memref<128x128xbf16, #tpu.memory_space<vmem>>, vector<128x128xbf16>
    %1 = arith.extf %0 : vector<128x128xbf16> to vector<128x128xf32>
    %c0_1 = arith.constant 0 : index
    %c0_2 = arith.constant 0 : index
    %2 = vector.load %arg2[%c0_1, %c0_2] : memref<1x128xf32, #tpu.memory_space<vmem>>, vector<1x128xf32>
    %3 = vector.broadcast %2 : vector<1x128xf32> to vector<128x128xf32>
    %4 = arith.mulf %1, %3 : vector<128x128xf32>
    %c0_3 = arith.constant 0 : index
    %c0_4 = arith.constant 0 : index
    %5 = vector.load %arg3[%c0_3, %c0_4] : memref<1x128xf32, #tpu.memory_space<vmem>>, vector<1x128xf32>
    %6 = vector.broadcast %5 : vector<1x128xf32> to vector<128x128xf32>
    %7 = arith.addf %4, %6 : vector<128x128xf32>
    %c0_5 = arith.constant 0 : index
    %c0_6 = arith.constant 0 : index
    %8 = vector.load %arg4[%c0_5, %c0_6] : memref<128x128xbf16, #tpu.memory_space<vmem>>, vector<128x128xbf16>
    %9 = arith.extf %8 : vector<128x128xbf16> to vector<128x128xf32>
    %c0_7 = arith.constant 0 : index
    %c0_8 = arith.constant 0 : index
    %10 = vector.load %arg5[%c0_7, %c0_8] : memref<1x128xf32, #tpu.memory_space<vmem>>, vector<1x128xf32>
    %11 = vector.broadcast %10 : vector<1x128xf32> to vector<128x128xf32>
    %12 = arith.mulf %9, %11 : vector<128x128xf32>
    %c0_9 = arith.constant 0 : index
    %c0_10 = arith.constant 0 : index
    %13 = vector.load %arg6[%c0_9, %c0_10] : memref<1x128xf32, #tpu.memory_space<vmem>>, vector<1x128xf32>
    %14 = vector.broadcast %13 : vector<1x128xf32> to vector<128x128xf32>
    %15 = arith.addf %12, %14 : vector<128x128xf32>
    %16 = arith.addf %7, %15 : vector<128x128xf32>
    %cst = arith.constant 0.000000e+00 : f32
    %17 = vector.broadcast %cst : f32 to vector<128x128xf32>
    %18 = arith.maximumf %16, %17 : vector<128x128xf32>
    %c0_11 = arith.constant 0 : index
    %c0_12 = arith.constant 0 : index
    %19 = vector.load %arg7[%c0_11, %c0_12] : memref<128x128xf32, #tpu.memory_space<vmem>>, vector<128x128xf32>
    tpu.vector_store %arg7[%c0_11, %c0_12], %18 {strides = array<i32>} : memref<128x128xf32, #tpu.memory_space<vmem>>, vector<128x128xf32>,
    return
  }
  func.func @transform_0(%arg0: i32) -> (i32, i32) {
    %c0_i32 = arith.constant 0 : i32
    %c0_i32_0 = arith.constant 0 : i32
    return %arg0, %c0_i32 : i32, i32
  }
  func.func @transform_1(%arg0: i32) -> (i32, i32) {
    %c0_i32 = arith.constant 0 : i32
    %c0_i32_0 = arith.constant 0 : i32
    %c0_i32_1 = arith.constant 0 : i32
    return %c0_i32, %c0_i32_0 : i32, i32
  }
  func.func @transform_2(%arg0: i32) -> (i32, i32) {
    %c0_i32 = arith.constant 0 : i32
    %c0_i32_0 = arith.constant 0 : i32
    %c0_i32_1 = arith.constant 0 : i32
    return %c0_i32, %c0_i32_0 : i32, i32
  }
  func.func @transform_3(%arg0: i32) -> (i32, i32) {
    %c0_i32 = arith.constant 0 : i32
    %c0_i32_0 = arith.constant 0 : i32
    return %arg0, %c0_i32 : i32, i32
  }
  func.func @transform_4(%arg0: i32) -> (i32, i32) {
    %c0_i32 = arith.constant 0 : i32
    %c0_i32_0 = arith.constant 0 : i32
    %c0_i32_1 = arith.constant 0 : i32
    return %c0_i32, %c0_i32_0 : i32, i32
  }
  func.func @transform_5(%arg0: i32) -> (i32, i32) {
    %c0_i32 = arith.constant 0 : i32
    %c0_i32_0 = arith.constant 0 : i32
    %c0_i32_1 = arith.constant 0 : i32
    return %c0_i32, %c0_i32_0 : i32, i32
  }
  func.func @transform_6(%arg0: i32) -> (i32, i32) {
    %c0_i32 = arith.constant 0 : i32
    %c0_i32_0 = arith.constant 0 : i32
    return %arg0, %c0_i32 : i32, i32
  }
}

</mosaic_0001>

<llo_original>
// kernel: basic_block_forward.5
$region0: #{basic_block_forward.5}
  #allocation0 [shape = 'u32[]', space=smem, size = 0x4, offset = 0x4, fixed_abs, tag = 'smem constant byte address 0x4 - core index']
  #allocation1 [shape = 'u32[144,128]{1,0:T(1,128)}', space=vmem, size = 0x12000, scoped, tag = 'internal scratch']
  %s0 = inlined_call_operand.vmem [shape: bf16[128,128], index: 0, kind: input, shape index: {}]
  %s1 = inlined_call_operand.vmem [shape: f32[1,128], index: 1, kind: input, shape index: {}]
  %s2 = inlined_call_operand.vmem [shape: f32[1,128], index: 2, kind: input, shape index: {}]
  %s3 = inlined_call_operand.vmem [shape: bf16[128,128], index: 3, kind: input, shape index: {}]
  %s4 = inlined_call_operand.vmem [shape: f32[1,128], index: 4, kind: input, shape index: {}]
  %s5 = inlined_call_operand.vmem [shape: f32[1,128], index: 5, kind: input, shape index: {}]
  %s6 = inlined_call_operand.vmem [shape: f32[128,128], index: 6, kind: output, shape index: {}]
  %s7 = sld [smem:[#allocation0]]
  $region34: #{basic_block_forward.5} parent=0
    _
  %s9 = ssub.s32 1, %s7
  %s10 = scalar_select 0, %s9, %s7
  // Predicated region
  $region2: #{basic_block_forward.5} parent=0 // pred_check
    _
  $region3: #{basic_block_forward.5} parent=0 // pred_check_branch
    %12 = sbr.rel (0) target = $region5
  $region4: #{basic_block_forward.5} parent=0 // pred_region
    _
  $region5: #{basic_block_forward.5} parent=0 // pred_fallthru
    _
  // Predicated region
  $region6: #{basic_block_forward.5} parent=0 // pred_check
    _
  $region7: #{basic_block_forward.5} parent=0 // pred_check_branch
    %14 = sbr.rel (0) target = $region9
  $region8: #{basic_block_forward.5} parent=0 // pred_region
    _
  $region9: #{basic_block_forward.5} parent=0 // pred_fallthru
    _
  // Predicated region
  $region10: #{basic_block_forward.5} parent=0 // pred_check
    _
  $region11: #{basic_block_forward.5} parent=0 // pred_check_branch
    %16 = sbr.rel (0) target = $region13
  $region12: #{basic_block_forward.5} parent=0 // pred_region
    _
  $region13: #{basic_block_forward.5} parent=0 // pred_fallthru
    _
  // Predicated region
  $region14: #{basic_block_forward.5} parent=0 // pred_check
    _
  $region15: #{basic_block_forward.5} parent=0 // pred_check_branch
    %18 = sbr.rel (0) target = $region17
  $region16: #{basic_block_forward.5} parent=0 // pred_region
    _
  $region17: #{basic_block_forward.5} parent=0 // pred_fallthru
    _
  // Predicated region
  $region18: #{basic_block_forward.5} parent=0 // pred_check
    _
  $region19: #{basic_block_forward.5} parent=0 // pred_check_branch
    %20 = sbr.rel (0) target = $region21
  $region20: #{basic_block_forward.5} parent=0 // pred_region
    _
  $region21: #{basic_block_forward.5} parent=0 // pred_fallthru
    _
  // Predicated region
  $region22: #{basic_block_forward.5} parent=0 // pred_check
    _
  $region23: #{basic_block_forward.5} parent=0 // pred_check_branch
    %22 = sbr.rel (0) target = $region25
  $region24: #{basic_block_forward.5} parent=0 // pred_region
    _
  $region25: #{basic_block_forward.5} parent=0 // pred_fallthru
    _
  %v23 = vld [vmem:[%s0] sm:$0xf]
  %v24 = vld [vmem:[%s0 + $0x4] sm:$0xf]
  %v25 = vld [vmem:[%s0 + $0x8] sm:$0xf]
  %v26 = vld [vmem:[%s0 + $0xc] sm:$0xf]
  %v27 = vld [vmem:[%s0 + $0x10] sm:$0xf]
  %v28 = vld [vmem:[%s0 + $0x14] sm:$0xf]
  %v29 = vld [vmem:[%s0 + $0x18] sm:$0xf]
  %v30 = vld [vmem:[%s0 + $0x1c] sm:$0xf]
  %v31 = vld [vmem:[%s0 + $0x20] sm:$0xf]
  %v32 = vld [vmem:[%s0 + $0x24] sm:$0xf]
  %v33 = vld [vmem:[%s0 + $0x28] sm:$0xf]
  %v34 = vld [vmem:[%s0 + $0x2c] sm:$0xf]
  %v35 = vld [vmem:[%s0 + $0x30] sm:$0xf]
  %v36 = vld [vmem:[%s0 + $0x34] sm:$0xf]
  %v37 = vld [vmem:[%s0 + $0x38] sm:$0xf]
  %v38 = vld [vmem:[%s0 + $0x3c] sm:$0xf]
  %v39 = vunpack.c.l.bf16 %v23
  %v40 = vunpack.c.l.bf16 %v24
  %v41 = vunpack.c.l.bf16 %v25
  %v42 = vunpack.c.l.bf16 %v26
  %v43 = vunpack.c.l.bf16 %v27
  %v44 = vunpack.c.l.bf16 %v28
  %v45 = vunpack.c.l.bf16 %v29
  %v46 = vunpack.c.l.bf16 %v30
  %v47 = vunpack.c.l.bf16 %v31
  %v48 = vunpack.c.l.bf16 %v32
  %v49 = vunpack.c.l.bf16 %v33
  %v50 = vunpack.c.l.bf16 %v34
  %v51 = vunpack.c.l.bf16 %v35
  %v52 = vunpack.c.l.bf16 %v36
  %v53 = vunpack.c.l.bf16 %v37
  %v54 = vunpack.c.l.bf16 %v38
  %v55 = vld [vmem:[%s1] sm:$0x1]
  %v57 = vlaneseq
  %v58 = vshrl.u32 %v57, 7
  %v59 = vsub.s32 0, %v58
  %v60 = vrot.slane %v55, %v59
  %v62 = vmul.f32 %v39, %v60
  %v63 = vmul.f32 %v40, %v60
  %v64 = vmul.f32 %v41, %v60
  %v65 = vmul.f32 %v42, %v60
  %v66 = vmul.f32 %v43, %v60
  %v67 = vmul.f32 %v44, %v60
  %v68 = vmul.f32 %v45, %v60
  %v69 = vmul.f32 %v46, %v60
  %v70 = vmul.f32 %v47, %v60
  %v71 = vmul.f32 %v48, %v60
  %v72 = vmul.f32 %v49, %v60
  %v73 = vmul.f32 %v50, %v60
  %v74 = vmul.f32 %v51, %v60
  %v75 = vmul.f32 %v52, %v60
  %v76 = vmul.f32 %v53, %v60
  %v77 = vmul.f32 %v54, %v60
  %v78 = vld [vmem:[%s2] sm:$0x1]
  %v80 = vlaneseq
  %v81 = vshrl.u32 %v80, 7
  %v82 = vsub.s32 0, %v81
  %v83 = vrot.slane %v78, %v82
  %v85 = vadd.f32 %v62, %v83
  %v86 = vadd.f32 %v63, %v83
  %v87 = vadd.f32 %v64, %v83
  %v88 = vadd.f32 %v65, %v83
  %v89 = vadd.f32 %v66, %v83
  %v90 = vadd.f32 %v67, %v83
  %v91 = vadd.f32 %v68, %v83
  %v92 = vadd.f32 %v69, %v83
  %v93 = vadd.f32 %v70, %v83
  %v94 = vadd.f32 %v71, %v83
  %v95 = vadd.f32 %v72, %v83
  %v96 = vadd.f32 %v73, %v83
  %v97 = vadd.f32 %v74, %v83
  %v98 = vadd.f32 %v75, %v83
  %v99 = vadd.f32 %v76, %v83
  %v100 = vadd.f32 %v77, %v83
  %v101 = vld [vmem:[%s3] sm:$0xf]
  %v102 = vld [vmem:[%s3 + $0x4] sm:$0xf]
  %v103 = vld [vmem:[%s3 + $0x8] sm:$0xf]
  %v104 = vld [vmem:[%s3 + $0xc] sm:$0xf]
  %v105 = vld [vmem:[%s3 + $0x10] sm:$0xf]
  %v106 = vld [vmem:[%s3 + $0x14] sm:$0xf]
  %v107 = vld [vmem:[%s3 + $0x18] sm:$0xf]
  %v108 = vld [vmem:[%s3 + $0x1c] sm:$0xf]
  %v109 = vld [vmem:[%s3 + $0x20] sm:$0xf]
  %v110 = vld [vmem:[%s3 + $0x24] sm:$0xf]
  %v111 = vld [vmem:[%s3 + $0x28] sm:$0xf]
  %v112 = vld [vmem:[%s3 + $0x2c] sm:$0xf]
  %v113 = vld [vmem:[%s3 + $0x30] sm:$0xf]
  %v114 = vld [vmem:[%s3 + $0x34] sm:$0xf]
  %v115 = vld [vmem:[%s3 + $0x38] sm:$0xf]
  %v116 = vld [vmem:[%s3 + $0x3c] sm:$0xf]
  %v117 = vunpack.c.l.bf16 %v101
  %v118 = vunpack.c.l.bf16 %v102
  %v119 = vunpack.c.l.bf16 %v103
  %v120 = vunpack.c.l.bf16 %v104
  %v121 = vunpack.c.l.bf16 %v105
  %v122 = vunpack.c.l.bf16 %v106
  %v123 = vunpack.c.l.bf16 %v107
  %v124 = vunpack.c.l.bf16 %v108
  %v125 = vunpack.c.l.bf16 %v109
  %v126 = vunpack.c.l.bf16 %v110
  %v127 = vunpack.c.l.bf16 %v111
  %v128 = vunpack.c.l.bf16 %v112
  %v129 = vunpack.c.l.bf16 %v113
  %v130 = vunpack.c.l.bf16 %v114
  %v131 = vunpack.c.l.bf16 %v115
  %v132 = vunpack.c.l.bf16 %v116
  %v133 = vld [vmem:[%s4] sm:$0x1]
  %v135 = vlaneseq
  %v136 = vshrl.u32 %v135, 7
  %v137 = vsub.s32 0, %v136
  %v138 = vrot.slane %v133, %v137
  %v140 = vmul.f32 %v117, %v138
  %v141 = vmul.f32 %v118, %v138
  %v142 = vmul.f32 %v119, %v138
  %v143 = vmul.f32 %v120, %v138
  %v144 = vmul.f32 %v121, %v138
  %v145 = vmul.f32 %v122, %v138
  %v146 = vmul.f32 %v123, %v138
  %v147 = vmul.f32 %v124, %v138
  %v148 = vmul.f32 %v125, %v138
  %v149 = vmul.f32 %v126, %v138
  %v150 = vmul.f32 %v127, %v138
  %v151 = vmul.f32 %v128, %v138
  %v152 = vmul.f32 %v129, %v138
  %v153 = vmul.f32 %v130, %v138
  %v154 = vmul.f32 %v131, %v138
  %v155 = vmul.f32 %v132, %v138
  %v156 = vld [vmem:[%s5] sm:$0x1]
  %v158 = vlaneseq
  %v159 = vshrl.u32 %v158, 7
  %v160 = vsub.s32 0, %v159
  %v161 = vrot.slane %v156, %v160
  %v163 = vadd.f32 %v140, %v161
  %v164 = vadd.f32 %v141, %v161
  %v165 = vadd.f32 %v142, %v161
  %v166 = vadd.f32 %v143, %v161
  %v167 = vadd.f32 %v144, %v161
  %v168 = vadd.f32 %v145, %v161
  %v169 = vadd.f32 %v146, %v161
  %v170 = vadd.f32 %v147, %v161
  %v171 = vadd.f32 %v148, %v161
  %v172 = vadd.f32 %v149, %v161
  %v173 = vadd.f32 %v150, %v161
  %v174 = vadd.f32 %v151, %v161
  %v175 = vadd.f32 %v152, %v161
  %v176 = vadd.f32 %v153, %v161
  %v177 = vadd.f32 %v154, %v161
  %v178 = vadd.f32 %v155, %v161
  %v179 = vadd.f32 %v85, %v163
  %v180 = vadd.f32 %v86, %v164
  %v181 = vadd.f32 %v87, %v165
  %v182 = vadd.f32 %v88, %v166
  %v183 = vadd.f32 %v89, %v167
  %v184 = vadd.f32 %v90, %v168
  %v185 = vadd.f32 %v91, %v169
  %v186 = vadd.f32 %v92, %v170
  %v187 = vadd.f32 %v93, %v171
  %v188 = vadd.f32 %v94, %v172
  %v189 = vadd.f32 %v95, %v173
  %v190 = vadd.f32 %v96, %v174
  %v191 = vadd.f32 %v97, %v175
  %v192 = vadd.f32 %v98, %v176
  %v193 = vadd.f32 %v99, %v177
  %v194 = vadd.f32 %v100, %v178
  %v195 = vmax.f32 %v179, 0.0
  %v196 = vmax.f32 %v180, 0.0
  %v197 = vmax.f32 %v181, 0.0
  %v198 = vmax.f32 %v182, 0.0
  %v199 = vmax.f32 %v183, 0.0
  %v200 = vmax.f32 %v184, 0.0
  %v201 = vmax.f32 %v185, 0.0
  %v202 = vmax.f32 %v186, 0.0
  %v203 = vmax.f32 %v187, 0.0
  %v204 = vmax.f32 %v188, 0.0
  %v205 = vmax.f32 %v189, 0.0
  %v206 = vmax.f32 %v190, 0.0
  %v207 = vmax.f32 %v191, 0.0
  %v208 = vmax.f32 %v192, 0.0
  %v209 = vmax.f32 %v193, 0.0
  %v210 = vmax.f32 %v194, 0.0
  %211 = vst [vmem:[%s6] sm:$0xff] %v195
  %212 = vst [vmem:[%s6 + $0x8] sm:$0xff] %v196
  %213 = vst [vmem:[%s6 + $0x10] sm:$0xff] %v197
  %214 = vst [vmem:[%s6 + $0x18] sm:$0xff] %v198
  %215 = vst [vmem:[%s6 + $0x20] sm:$0xff] %v199
  %216 = vst [vmem:[%s6 + $0x28] sm:$0xff] %v200
  %217 = vst [vmem:[%s6 + $0x30] sm:$0xff] %v201
  %218 = vst [vmem:[%s6 + $0x38] sm:$0xff] %v202
  %219 = vst [vmem:[%s6 + $0x40] sm:$0xff] %v203
  %220 = vst [vmem:[%s6 + $0x48] sm:$0xff] %v204
  %221 = vst [vmem:[%s6 + $0x50] sm:$0xff] %v205
  %222 = vst [vmem:[%s6 + $0x58] sm:$0xff] %v206
  %223 = vst [vmem:[%s6 + $0x60] sm:$0xff] %v207
  %224 = vst [vmem:[%s6 + $0x68] sm:$0xff] %v208
  %225 = vst [vmem:[%s6 + $0x70] sm:$0xff] %v209
  %226 = vst [vmem:[%s6 + $0x78] sm:$0xff] %v210
  // Predicated region
  $region26: #{basic_block_forward.5} parent=0 // pred_check
    _
  $region27: #{basic_block_forward.5} parent=0 // pred_check_branch
    %228 = sbr.rel (0) target = $region29
  $region28: #{basic_block_forward.5} parent=0 // pred_region
    _
  $region29: #{basic_block_forward.5} parent=0 // pred_fallthru
    _
  // Predicated region
  $region30: #{basic_block_forward.5} parent=0 // pred_check
    _
  $region31: #{basic_block_forward.5} parent=0 // pred_check_branch
    %230 = sbr.rel (0) target = $region33
  $region32: #{basic_block_forward.5} parent=0 // pred_region
    _
  $region33: #{basic_block_forward.5} parent=0 // pred_fallthru
    _

// kernel: basic_block_forward.4
$region0: #{basic_block_forward.4}
  #allocation0 [shape = 'u32[]', space=smem, size = 0x4, offset = 0x4, fixed_abs, tag = 'smem constant byte address 0x4 - core index']
  #allocation1 [shape = 'u32[144,128]{1,0:T(1,128)}', space=vmem, size = 0x12000, scoped, tag = 'internal scratch']
  #allocation2 [shape = 'f32[10,8,384]{2,1,0:T(8,128)}', space=vmem, size = 0x1e000, scoped, tag = 'scratch operand']
  %s0 = inlined_call_operand.vmem [shape: bf16[2,8,8,128], index: 0, kind: input, shape index: {}]
  %s1 = inlined_call_operand.vmem [shape: f32[1,128], index: 1, kind: input, shape index: {}]
  %s2 = inlined_call_operand.vmem [shape: f32[1,128], index: 2, kind: input, shape index: {}]
  %s3 = inlined_call_operand.vmem [shape: bf16[3,384,128], index: 3, kind: input, shape index: {}]
  %s4 = inlined_call_operand.vmem [shape: bf16[2,8,8,128], index: 4, kind: output, shape index: {0}]
  %s5 = inlined_call_operand.vmem [shape: f32[2,2,128], index: 5, kind: output, shape index: {1}]
  %6 = xla_tuple %s4, %s5
  %s7 = sld [smem:[#allocation0]]
  $region57: #{basic_block_forward.4} parent=0
    _
  %s9 = ssub.s32 1, %s7
  %s10 = scalar_select 0, %s9, %s7
  loop: start=0, step=1, limit=4
  $region2: #{basic_block_forward.4} parent=0 // loop_pre_header
    _
  $region3: #{basic_block_forward.4} parent=0 // loop_header
    %s12 = sphi 0, %s16
    %p13 = scmp.ge.s32.totalorder %s12, 4
    %s22 = sphi 0, %s24
    %s25 = sphi 0, %s22
    %s26 = sphi 0, %s25
    %s42 = sphi 0, %s26
    %s46 = sphi 0, %s46
    %s48 = sphi 0, %s46
    %s49 = sphi 0, %s48
    %s63 = sphi 0, %s49
    %s67 = sphi 0, %s67
    %s69 = sphi 0, %s67
    %s70 = sphi 0, %s69
    %s84 = sphi 0, %s70
    %s88 = sphi 0, %s88
    %s90 = sphi 0, %s88
    %s91 = sphi 0, %s90
    %s105 = sphi 0, %s91
    %s111 = sphi 0, %s113
    %s114 = sphi 0, %s111
    %s115 = sphi 0, %s114
    %s131 = sphi 0, %s115
    %s137 = sphi 0, %s139
    %s140 = sphi 0, %s137
    %s141 = sphi 0, %s140
    %s157 = sphi 0, %s141
  $region4: #{basic_block_forward.4} parent=0 // loop_header_branch
    %15 = sbr.rel (%p13) target = $region8
  $region5: #{basic_block_forward.4} parent=0 // loop_body
    %s17 = ssub.s32 %s12, 1
    %s18 = ssub.s32 %s12, 2
    %s19 = sadd.s32 %s12, 1
    %s20 = ssub.s32 %s12, %s19
    %p21 = scmp.eq.s32.totalorder %s20, 0
    %s23 = sadd.s32 %s22, 1
    %s24 = scalar_select %p21, %s22, %s23
    %p27 = pneg %p21
    %p28 = scmp.eq.s32.totalorder %s12, 1
    %p29 = por %p27, %p28
    %p30 = scmp.ne.s32.totalorder %s22, %s25
    %p31 = scmp.eq.s32.totalorder %s12, 0
    %p32 = por %p30, %p31
    %p33 = scmp.ne.s32.totalorder %s22, %s25
    %p34 = scmp.eq.s32.totalorder %s17, 1
    %p35 = por %p33, %p34
    %p36 = scmp.ne.s32.totalorder %s25, %s26
    %p37 = scmp.eq.s32.totalorder %s17, 0
    %p38 = por %p36, %p37
    %p39 = scmp.ne.s32.totalorder %s25, %s26
    %p40 = scmp.eq.s32.totalorder %s18, 1
    %p41 = por %p39, %p40
    %p43 = scmp.ne.s32.totalorder %s26, %s42
    %p44 = scmp.eq.s32.totalorder %s18, 0
    %p45 = por %p43, %p44
    %s47 = sadd.s32 %s46, 1
    %p50 = scmp.eq.s32.totalorder %s12, 1
    %p51 = scmp.ne.s32.totalorder %s46, %s48
    %p52 = scmp.eq.s32.totalorder %s12, 0
    %p53 = por %p51, %p52
    %p54 = scmp.ne.s32.totalorder %s46, %s48
    %p55 = scmp.eq.s32.totalorder %s17, 1
    %p56 = por %p54, %p55
    %p57 = scmp.ne.s32.totalorder %s48, %s49
    %p58 = scmp.eq.s32.totalorder %s17, 0
    %p59 = por %p57, %p58
    %p60 = scmp.ne.s32.totalorder %s48, %s49
    %p61 = scmp.eq.s32.totalorder %s18, 1
    %p62 = por %p60, %p61
    %p64 = scmp.ne.s32.totalorder %s49, %s63
    %p65 = scmp.eq.s32.totalorder %s18, 0
    %p66 = por %p64, %p65
    %s68 = sadd.s32 %s67, 1
    %p71 = scmp.eq.s32.totalorder %s12, 1
    %p72 = scmp.ne.s32.totalorder %s67, %s69
    %p73 = scmp.eq.s32.totalorder %s12, 0
    %p74 = por %p72, %p73
    %p75 = scmp.ne.s32.totalorder %s67, %s69
    %p76 = scmp.eq.s32.totalorder %s17, 1
    %p77 = por %p75, %p76
    %p78 = scmp.ne.s32.totalorder %s69, %s70
    %p79 = scmp.eq.s32.totalorder %s17, 0
    %p80 = por %p78, %p79
    %p81 = scmp.ne.s32.totalorder %s69, %s70
    %p82 = scmp.eq.s32.totalorder %s18, 1
    %p83 = por %p81, %p82
    %p85 = scmp.ne.s32.totalorder %s70, %s84
    %p86 = scmp.eq.s32.totalorder %s18, 0
    %p87 = por %p85, %p86
    %s89 = sadd.s32 %s88, 1
    %p92 = scmp.eq.s32.totalorder %s12, 1
    %p93 = scmp.ne.s32.totalorder %s88, %s90
    %p94 = scmp.eq.s32.totalorder %s12, 0
    %p95 = por %p93, %p94
    %p96 = scmp.ne.s32.totalorder %s88, %s90
    %p97 = scmp.eq.s32.totalorder %s17, 1
    %p98 = por %p96, %p97
    %p99 = scmp.ne.s32.totalorder %s90, %s91
    %p100 = scmp.eq.s32.totalorder %s17, 0
    %p101 = por %p99, %p100
    %p102 = scmp.ne.s32.totalorder %s90, %s91
    %p103 = scmp.eq.s32.totalorder %s18, 1
    %p104 = por %p102, %p103
    %p106 = scmp.ne.s32.totalorder %s91, %s105
    %p107 = scmp.eq.s32.totalorder %s18, 0
    %p108 = por %p106, %p107
    %s109 = ssub.s32 %s12, %s19
    %p110 = scmp.eq.s32.totalorder %s109, 0
    %s112 = sadd.s32 %s111, 1
    %s113 = scalar_select %p110, %s111, %s112
    %p116 = pneg %p110
    %p117 = scmp.eq.s32.totalorder %s12, 1
    %p118 = por %p116, %p117
    %p119 = scmp.ne.s32.totalorder %s111, %s114
    %p120 = scmp.eq.s32.totalorder %s12, 0
    %p121 = por %p119, %p120
    %p122 = scmp.ne.s32.totalorder %s111, %s114
    %p123 = scmp.eq.s32.totalorder %s17, 1
    %p124 = por %p122, %p123
    %p125 = scmp.ne.s32.totalorder %s114, %s115
    %p126 = scmp.eq.s32.totalorder %s17, 0
    %p127 = por %p125, %p126
    %p128 = scmp.ne.s32.totalorder %s114, %s115
    %p129 = scmp.eq.s32.totalorder %s18, 1
    %p130 = por %p128, %p129
    %p132 = scmp.ne.s32.totalorder %s115, %s131
    %p133 = scmp.eq.s32.totalorder %s18, 0
    %p134 = por %p132, %p133
    %s135 = ssub.s32 %s12, %s19
    %p136 = scmp.eq.s32.totalorder %s135, 0
    %s138 = sadd.s32 %s137, 1
    %s139 = scalar_select %p136, %s137, %s138
    %p142 = pneg %p136
    %p143 = scmp.eq.s32.totalorder %s12, 1
    %p144 = por %p142, %p143
    %p145 = scmp.ne.s32.totalorder %s137, %s140
    %p146 = scmp.eq.s32.totalorder %s12, 0
    %p147 = por %p145, %p146
    %p148 = scmp.ne.s32.totalorder %s137, %s140
    %p149 = scmp.eq.s32.totalorder %s17, 1
    %p150 = por %p148, %p149
    %p151 = scmp.ne.s32.totalorder %s140, %s141
    %p152 = scmp.eq.s32.totalorder %s17, 0
    %p153 = por %p151, %p152
    %p154 = scmp.ne.s32.totalorder %s140, %s141
    %p155 = scmp.eq.s32.totalorder %s18, 1
    %p156 = por %p154, %p155
    %p158 = scmp.ne.s32.totalorder %s141, %s157
    %p159 = scmp.eq.s32.totalorder %s18, 0
    %p160 = por %p158, %p159
    %p161 = scmp.le.s32.totalorder 1, %s12
    %p162 = scmp.lt.s32.totalorder %s12, 3
    %p163 = pnand %p161, %p162
    %p164 = pneg %p163
    // Predicated region
    $region9: #{basic_block_forward.4} parent=5 // pred_check
      _
    $region10: #{basic_block_forward.4} parent=5 // pred_check_branch
      %166 = sbr.rel (%p163) target = $region12
    $region11: #{basic_block_forward.4} parent=5 // pred_region
      %s167 = ssub.s32 %s12, 1
      // Predicated region
      $region13: #{basic_block_forward.4} parent=11 // pred_check
        %p168 = pneg %p59
      $region14: #{basic_block_forward.4} parent=11 // pred_check_branch
        %170 = sbr.rel (%p168) target = $region16
      $region15: #{basic_block_forward.4} parent=11 // pred_region
        _
      $region16: #{basic_block_forward.4} parent=11 // pred_fallthru
        _
      // Predicated region
      $region17: #{basic_block_forward.4} parent=11 // pred_check
        %p171 = pneg %p80
      $region18: #{basic_block_forward.4} parent=11 // pred_check_branch
        %173 = sbr.rel (%p171) target = $region20
      $region19: #{basic_block_forward.4} parent=11 // pred_region
        _
      $region20: #{basic_block_forward.4} parent=11 // pred_fallthru
        _
      // Predicated region
      $region21: #{basic_block_forward.4} parent=11 // pred_check
        %p174 = pneg %p101
      $region22: #{basic_block_forward.4} parent=11 // pred_check_branch
        %176 = sbr.rel (%p174) target = $region24
      $region23: #{basic_block_forward.4} parent=11 // pred_region
        _
      $region24: #{basic_block_forward.4} parent=11 // pred_fallthru
        _
    $region12: #{basic_block_forward.4} parent=5 // pred_fallthru
      _
    %p177 = scmp.lt.s32.totalorder %s12, 2
    // Predicated region
    $region25: #{basic_block_forward.4} parent=5 // pred_check
      %p178 = pneg %p177
    $region26: #{basic_block_forward.4} parent=5 // pred_check_branch
      %180 = sbr.rel (%p178) target = $region28
    $region27: #{basic_block_forward.4} parent=5 // pred_region
      // Predicated region
      $region29: #{basic_block_forward.4} parent=27 // pred_check
        %p181 = pneg %p32
      $region30: #{basic_block_forward.4} parent=27 // pred_check_branch
        %183 = sbr.rel (%p181) target = $region32
      $region31: #{basic_block_forward.4} parent=27 // pred_region
        %p184 = scmp.lt.s32.totalorder %s12, 1
        %s185 = scalar_select %p184, %s12, 1
        %s186 = smul.addr %s185, 8
        %s187 = smul.addr %s186, 4
        %s188 = scalar_lea.vmem %s0, %s187
      $region32: #{basic_block_forward.4} parent=27 // pred_fallthru
        _
    $region28: #{basic_block_forward.4} parent=5 // pred_fallthru
      _
    %p189 = scmp.le.s32.totalorder 1, %s12
    %p190 = scmp.lt.s32.totalorder %s12, 3
    %p191 = pnand %p189, %p190
    %p192 = pneg %p191
    // Predicated region
    $region33: #{basic_block_forward.4} parent=5 // pred_check
      _
    $region34: #{basic_block_forward.4} parent=5 // pred_check_branch
      %194 = sbr.rel (%p191) target = $region36
    $region35: #{basic_block_forward.4} parent=5 // pred_region
      %s195 = ssub.s32 %s12, 1
      %p196 = scmp.lt.s32.totalorder %s17, 1
      %s197 = scalar_select %p196, %s17, 1
      %s198 = smul.addr %s197, 8
      %s199 = smul.addr %s198, 4
      %s200 = scalar_lea.vmem %s0, %s199
      %p201 = pneg %p38
      %p202 = pneg %p35
      %p203 = pneg %p59
      %p204 = pneg %p56
      %p205 = pneg %p80
      %p206 = pneg %p77
      %p207 = pneg %p101
      %p208 = pneg %p98
      %p209 = pneg %p127
      %p210 = pneg %p124
      %p211 = scmp.lt.s32.totalorder %s17, 1
      %s212 = scalar_select %p211, %s17, 1
      %s213 = smul.addr %s212, 8
      %s214 = smul.addr %s213, 4
      %s215 = scalar_lea.vmem %s4, %s214
      %p216 = pneg %p153
      %p217 = pneg %p150
      %p218 = scmp.lt.s32.totalorder %s17, 1
      %s219 = scalar_select %p218, %s17, 1
      %s220 = smul.addr %s219, 2
      %s221 = scalar_lea.vmem %s5, %s220
      %p222 = scmp.lt.s32.totalorder %s17, 1
      %s223 = scalar_select %p222, %s17, 1
      %s224 = smul.addr %s223, 8
      %s225 = smul.addr %s224, 4
      %s226 = scalar_lea.vmem %s0, %s225
      %p227 = scmp.lt.s32.totalorder %s17, 1
      %s228 = scalar_select %p227, %s17, 1
      %s229 = smul.addr %s228, 8
      %s230 = smul.addr %s229, 4
      %s231 = scalar_lea.vmem %s4, %s230
      %p232 = scmp.lt.s32.totalorder %s17, 1
      %s233 = scalar_select %p232, %s17, 1
      %s234 = smul.addr %s233, 2
      %s235 = scalar_lea.vmem %s5, %s234
      %v237 = vld [vmem:[%s226] sm:$0xf]
      %v238 = vld [vmem:[%s226 + $0x4] sm:$0xf]
      %v239 = vld [vmem:[%s226 + $0x8] sm:$0xf]
      %v240 = vld [vmem:[%s226 + $0xc] sm:$0xf]
      %v241 = vld [vmem:[%s226 + $0x10] sm:$0xf]
      %v242 = vld [vmem:[%s226 + $0x14] sm:$0xf]
      %v243 = vld [vmem:[%s226 + $0x18] sm:$0xf]
      %v244 = vld [vmem:[%s226 + $0x1c] sm:$0xf]
      %v245 = vunpack.c.l.bf16 %v237
      %v246 = vunpack.c.l.bf16 %v238
      %v247 = vunpack.c.l.bf16 %v239
      %v248 = vunpack.c.l.bf16 %v240
      %v249 = vunpack.c.l.bf16 %v241
      %v250 = vunpack.c.l.bf16 %v242
      %v251 = vunpack.c.l.bf16 %v243
      %v252 = vunpack.c.l.bf16 %v244
      %v253 = vld [vmem:[%s1] sm:$0x1]
      %v255 = vlaneseq
      %v256 = vshrl.u32 %v255, 7
      %v257 = vsub.s32 0, %v256
      %v258 = vrot.slane %v253, %v257
      %v260 = vmul.f32 %v245, %v258
      %v261 = vmul.f32 %v246, %v258
      %v262 = vmul.f32 %v247, %v258
      %v263 = vmul.f32 %v248, %v258
      %v264 = vmul.f32 %v249, %v258
      %v265 = vmul.f32 %v250, %v258
      %v266 = vmul.f32 %v251, %v258
      %v267 = vmul.f32 %v252, %v258
      %v268 = vld [vmem:[%s2] sm:$0x1]
      %v270 = vlaneseq
      %v271 = vshrl.u32 %v270, 7
      %v272 = vsub.s32 0, %v271
      %v273 = vrot.slane %v268, %v272
      %v275 = vadd.f32 %v260, %v273
      %v276 = vadd.f32 %v261, %v273
      %v277 = vadd.f32 %v262, %v273
      %v278 = vadd.f32 %v263, %v273
      %v279 = vadd.f32 %v264, %v273
      %v280 = vadd.f32 %v265, %v273
      %v281 = vadd.f32 %v266, %v273
      %v282 = vadd.f32 %v267, %v273
      %v283 = vmax.f32 %v275, 0.0
      %v284 = vmax.f32 %v276, 0.0
      %v285 = vmax.f32 %v277, 0.0
      %v286 = vmax.f32 %v278, 0.0
      %v287 = vmax.f32 %v279, 0.0
      %v288 = vmax.f32 %v280, 0.0
      %v289 = vmax.f32 %v281, 0.0
      %v290 = vmax.f32 %v282, 0.0
      %291 = vst [vmem:[#allocation2] sm:$0xff] 0.0
      %292 = vst [vmem:[#allocation2 + $0x8] sm:$0xff] 0.0
      %293 = vst [vmem:[#allocation2 + $0x10] sm:$0xff] 0.0
      %s294 = scalar_lea.vmem [#allocation2], 216
      %295 = vst [vmem:[%s294] sm:$0xff] 0.0
      %296 = vst [vmem:[%s294 + $0x8] sm:$0xff] 0.0
      %297 = vst [vmem:[%s294 + $0x10] sm:$0xff] 0.0
      %s298 = scalar_lea.vmem [#allocation2], 24
      %299 = vst [vmem:[%s298] sm:$0x1] 0.0
      %300 = vst [vmem:[%s298 + $0x18] sm:$0x1] 0.0
      %301 = vst [vmem:[%s298 + $0x30] sm:$0x1] 0.0
      %302 = vst [vmem:[%s298 + $0x48] sm:$0x1] 0.0
      %303 = vst [vmem:[%s298 + $0x60] sm:$0x1] 0.0
      %304 = vst [vmem:[%s298 + $0x78] sm:$0x1] 0.0
      %305 = vst [vmem:[%s298 + $0x90] sm:$0x1] 0.0
      %306 = vst [vmem:[%s298 + $0xa8] sm:$0x1] 0.0
      %307 = vst [vmem:[%s298 + $0x17] sm:$0x1] 0.0
      %308 = vst [vmem:[%s298 + $0x2f] sm:$0x1] 0.0
      %309 = vst [vmem:[%s298 + $0x47] sm:$0x1] 0.0
      %310 = vst [vmem:[%s298 + $0x5f] sm:$0x1] 0.0
      %311 = vst [vmem:[%s298 + $0x77] sm:$0x1] 0.0
      %312 = vst [vmem:[%s298 + $0x8f] sm:$0x1] 0.0
      %313 = vst [vmem:[%s298 + $0xa7] sm:$0x1] 0.0
      %314 = vst [vmem:[%s298 + $0xbf] sm:$0x1] 0.0
      %v323 = vrot.slane %v283, 7
      %v324 = vrot.slane %v284, 7
      %v325 = vrot.slane %v285, 7
      %v326 = vrot.slane %v286, 7
      %v327 = vrot.slane %v287, 7
      %v328 = vrot.slane %v288, 7
      %v329 = vrot.slane %v289, 7
      %v330 = vrot.slane %v290, 7
      %339 = vst [vmem:[%s298] sm:$0xfe] %v323
      %340 = vst [vmem:[%s298 + $0x18] sm:$0xfe] %v324
      %341 = vst [vmem:[%s298 + $0x30] sm:$0xfe] %v325
      %342 = vst [vmem:[%s298 + $0x48] sm:$0xfe] %v326
      %343 = vst [vmem:[%s298 + $0x60] sm:$0xfe] %v327
      %344 = vst [vmem:[%s298 + $0x78] sm:$0xfe] %v328
      %345 = vst [vmem:[%s298 + $0x90] sm:$0xfe] %v329
      %346 = vst [vmem:[%s298 + $0xa8] sm:$0xfe] %v330
      %347 = vst [vmem:[%s298 + $0x8] sm:$0xff] %v283
      %348 = vst [vmem:[%s298 + $0x20] sm:$0xff] %v284
      %349 = vst [vmem:[%s298 + $0x38] sm:$0xff] %v285
      %350 = vst [vmem:[%s298 + $0x50] sm:$0xff] %v286
      %351 = vst [vmem:[%s298 + $0x68] sm:$0xff] %v287
      %352 = vst [vmem:[%s298 + $0x80] sm:$0xff] %v288
      %353 = vst [vmem:[%s298 + $0x98] sm:$0xff] %v289
      %354 = vst [vmem:[%s298 + $0xb0] sm:$0xff] %v290
      %v355 = vrot.slane %v283, 1
      %v356 = vrot.slane %v284, 1
      %v357 = vrot.slane %v285, 1
      %v358 = vrot.slane %v286, 1
      %v359 = vrot.slane %v287, 1
      %v360 = vrot.slane %v288, 1
      %v361 = vrot.slane %v289, 1
      %v362 = vrot.slane %v290, 1
      %371 = vst [vmem:[%s298 + $0x10] sm:$0x7f] %v355
      %372 = vst [vmem:[%s298 + $0x28] sm:$0x7f] %v356
      %373 = vst [vmem:[%s298 + $0x40] sm:$0x7f] %v357
      %374 = vst [vmem:[%s298 + $0x58] sm:$0x7f] %v358
      %375 = vst [vmem:[%s298 + $0x70] sm:$0x7f] %v359
      %376 = vst [vmem:[%s298 + $0x88] sm:$0x7f] %v360
      %377 = vst [vmem:[%s298 + $0xa0] sm:$0x7f] %v361
      %378 = vst [vmem:[%s298 + $0xb8] sm:$0x7f] %v362
      %v379 = vld [vmem:[#allocation2] sm:$0xff]
      %v380 = vld [vmem:[#allocation2 + $0x8] sm:$0xff]
      %v381 = vld [vmem:[#allocation2 + $0x10] sm:$0xff]
      %v382 = vld [vmem:[#allocation2 + $0x18] sm:$0xff]
      %v383 = vld [vmem:[#allocation2 + $0x20] sm:$0xff]
      %v384 = vld [vmem:[#allocation2 + $0x28] sm:$0xff]
      %v385 = vld [vmem:[#allocation2 + $0x30] sm:$0xff]
      %v386 = vld [vmem:[#allocation2 + $0x38] sm:$0xff]
      %v387 = vld [vmem:[#allocation2 + $0x40] sm:$0xff]
      %v388 = vld [vmem:[#allocation2 + $0x48] sm:$0xff]
      %v389 = vld [vmem:[#allocation2 + $0x50] sm:$0xff]
      %v390 = vld [vmem:[#allocation2 + $0x58] sm:$0xff]
      %v391 = vld [vmem:[#allocation2 + $0x60] sm:$0xff]
      %v392 = vld [vmem:[#allocation2 + $0x68] sm:$0xff]
      %v393 = vld [vmem:[#allocation2 + $0x70] sm:$0xff]
      %v394 = vld [vmem:[#allocation2 + $0x78] sm:$0xff]
      %v395 = vld [vmem:[#allocation2 + $0x80] sm:$0xff]
      %v396 = vld [vmem:[#allocation2 + $0x88] sm:$0xff]
      %v397 = vld [vmem:[#allocation2 + $0x90] sm:$0xff]
      %v398 = vld [vmem:[#allocation2 + $0x98] sm:$0xff]
      %v399 = vld [vmem:[#allocation2 + $0xa0] sm:$0xff]
      %v400 = vld [vmem:[#allocation2 + $0xa8] sm:$0xff]
      %v401 = vld [vmem:[#allocation2 + $0xb0] sm:$0xff]
      %v402 = vld [vmem:[#allocation2 + $0xb8] sm:$0xff]
      %v403 = vpack.c.bf16 %v382, %v379
      %v404 = vpack.c.bf16 %v383, %v380
      %v405 = vpack.c.bf16 %v384, %v381
      %v406 = vpack.c.bf16 %v388, %v385
      %v407 = vpack.c.bf16 %v389, %v386
      %v408 = vpack.c.bf16 %v390, %v387
      %v409 = vpack.c.bf16 %v394, %v391
      %v410 = vpack.c.bf16 %v395, %v392
      %v411 = vpack.c.bf16 %v396, %v393
      %v412 = vpack.c.bf16 %v400, %v397
      %v413 = vpack.c.bf16 %v401, %v398
      %v414 = vpack.c.bf16 %v402, %v399
      %v415 = vld [vmem:[%s3] sm:$0xf]
      %v416 = vld [vmem:[%s3 + $0x4] sm:$0xf]
      %v417 = vld [vmem:[%s3 + $0x8] sm:$0xf]
      %v418 = vld [vmem:[%s3 + $0xc] sm:$0xf]
      %v419 = vld [vmem:[%s3 + $0x10] sm:$0xf]
      %v420 = vld [vmem:[%s3 + $0x14] sm:$0xf]
      %v421 = vld [vmem:[%s3 + $0x18] sm:$0xf]
      %v422 = vld [vmem:[%s3 + $0x1c] sm:$0xf]
      %v423 = vld [vmem:[%s3 + $0x20] sm:$0xf]
      %v424 = vld [vmem:[%s3 + $0x24] sm:$0xf]
      %v425 = vld [vmem:[%s3 + $0x28] sm:$0xf]
      %v426 = vld [vmem:[%s3 + $0x2c] sm:$0xf]
      %v427 = vld [vmem:[%s3 + $0x30] sm:$0xf]
      %v428 = vld [vmem:[%s3 + $0x34] sm:$0xf]
      %v429 = vld [vmem:[%s3 + $0x38] sm:$0xf]
      %v430 = vld [vmem:[%s3 + $0x3c] sm:$0xf]
      %v431 = vld [vmem:[%s3 + $0x40] sm:$0xf]
      %v432 = vld [vmem:[%s3 + $0x44] sm:$0xf]
      %v433 = vld [vmem:[%s3 + $0x48] sm:$0xf]
      %v434 = vld [vmem:[%s3 + $0x4c] sm:$0xf]
      %v435 = vld [vmem:[%s3 + $0x50] sm:$0xf]
      %v436 = vld [vmem:[%s3 + $0x54] sm:$0xf]
      %v437 = vld [vmem:[%s3 + $0x58] sm:$0xf]
      %v438 = vld [vmem:[%s3 + $0x5c] sm:$0xf]
      %v439 = vld [vmem:[%s3 + $0x60] sm:$0xf]
      %v440 = vld [vmem:[%s3 + $0x64] sm:$0xf]
      %v441 = vld [vmem:[%s3 + $0x68] sm:$0xf]
      %v442 = vld [vmem:[%s3 + $0x6c] sm:$0xf]
      %v443 = vld [vmem:[%s3 + $0x70] sm:$0xf]
      %v444 = vld [vmem:[%s3 + $0x74] sm:$0xf]
      %v445 = vld [vmem:[%s3 + $0x78] sm:$0xf]
      %v446 = vld [vmem:[%s3 + $0x7c] sm:$0xf]
      %v447 = vld [vmem:[%s3 + $0x80] sm:$0xf]
      %v448 = vld [vmem:[%s3 + $0x84] sm:$0xf]
      %v449 = vld [vmem:[%s3 + $0x88] sm:$0xf]
      %v450 = vld [vmem:[%s3 + $0x8c] sm:$0xf]
      %v451 = vld [vmem:[%s3 + $0x90] sm:$0xf]
      %v452 = vld [vmem:[%s3 + $0x94] sm:$0xf]
      %v453 = vld [vmem:[%s3 + $0x98] sm:$0xf]
      %v454 = vld [vmem:[%s3 + $0x9c] sm:$0xf]
      %v455 = vld [vmem:[%s3 + $0xa0] sm:$0xf]
      %v456 = vld [vmem:[%s3 + $0xa4] sm:$0xf]
      %v457 = vld [vmem:[%s3 + $0xa8] sm:$0xf]
      %v458 = vld [vmem:[%s3 + $0xac] sm:$0xf]
      %v459 = vld [vmem:[%s3 + $0xb0] sm:$0xf]
      %v460 = vld [vmem:[%s3 + $0xb4] sm:$0xf]
      %v461 = vld [vmem:[%s3 + $0xb8] sm:$0xf]
      %v462 = vld [vmem:[%s3 + $0xbc] sm:$0xf]
      %v463 = vld [vmem:[%s298] sm:$0xff]
      %v464 = vld [vmem:[%s298 + $0x8] sm:$0xff]
      %v465 = vld [vmem:[%s298 + $0x10] sm:$0xff]
      %v466 = vld [vmem:[%s298 + $0x18] sm:$0xff]
      %v467 = vld [vmem:[%s298 + $0x20] sm:$0xff]
      %v468 = vld [vmem:[%s298 + $0x28] sm:$0xff]
      %v469 = vld [vmem:[%s298 + $0x30] sm:$0xff]
      %v470 = vld [vmem:[%s298 + $0x38] sm:$0xff]
      %v471 = vld [vmem:[%s298 + $0x40] sm:$0xff]
      %v472 = vld [vmem:[%s298 + $0x48] sm:$0xff]
      %v473 = vld [vmem:[%s298 + $0x50] sm:$0xff]
      %v474 = vld [vmem:[%s298 + $0x58] sm:$0xff]
      %v475 = vld [vmem:[%s298 + $0x60] sm:$0xff]
      %v476 = vld [vmem:[%s298 + $0x68] sm:$0xff]
      %v477 = vld [vmem:[%s298 + $0x70] sm:$0xff]
      %v478 = vld [vmem:[%s298 + $0x78] sm:$0xff]
      %v479 = vld [vmem:[%s298 + $0x80] sm:$0xff]
      %v480 = vld [vmem:[%s298 + $0x88] sm:$0xff]
      %v481 = vld [vmem:[%s298 + $0x90] sm:$0xff]
      %v482 = vld [vmem:[%s298 + $0x98] sm:$0xff]
      %v483 = vld [vmem:[%s298 + $0xa0] sm:$0xff]
      %v484 = vld [vmem:[%s298 + $0xa8] sm:$0xff]
      %v485 = vld [vmem:[%s298 + $0xb0] sm:$0xff]
      %v486 = vld [vmem:[%s298 + $0xb8] sm:$0xff]
      %v487 = vpack.c.bf16 %v466, %v463
      %v488 = vpack.c.bf16 %v467, %v464
      %v489 = vpack.c.bf16 %v468, %v465
      %v490 = vpack.c.bf16 %v472, %v469
      %v491 = vpack.c.bf16 %v473, %v470
      %v492 = vpack.c.bf16 %v474, %v471
      %v493 = vpack.c.bf16 %v478, %v475
      %v494 = vpack.c.bf16 %v479, %v476
      %v495 = vpack.c.bf16 %v480, %v477
      %v496 = vpack.c.bf16 %v484, %v481
      %v497 = vpack.c.bf16 %v485, %v482
      %v498 = vpack.c.bf16 %v486, %v483
      %s499 = scalar_lea.vmem %s3, 192
      %v500 = vld [vmem:[%s499] sm:$0xf]
      %v501 = vld [vmem:[%s499 + $0x4] sm:$0xf]
      %v502 = vld [vmem:[%s499 + $0x8] sm:$0xf]
      %v503 = vld [vmem:[%s499 + $0xc] sm:$0xf]
      %v504 = vld [vmem:[%s499 + $0x10] sm:$0xf]
      %v505 = vld [vmem:[%s499 + $0x14] sm:$0xf]
      %v506 = vld [vmem:[%s499 + $0x18] sm:$0xf]
      %v507 = vld [vmem:[%s499 + $0x1c] sm:$0xf]
      %v508 = vld [vmem:[%s499 + $0x20] sm:$0xf]
      %v509 = vld [vmem:[%s499 + $0x24] sm:$0xf]
      %v510 = vld [vmem:[%s499 + $0x28] sm:$0xf]
      %v511 = vld [vmem:[%s499 + $0x2c] sm:$0xf]
      %v512 = vld [vmem:[%s499 + $0x30] sm:$0xf]
      %v513 = vld [vmem:[%s499 + $0x34] sm:$0xf]
      %v514 = vld [vmem:[%s499 + $0x38] sm:$0xf]
      %v515 = vld [vmem:[%s499 + $0x3c] sm:$0xf]
      %v516 = vld [vmem:[%s499 + $0x40] sm:$0xf]
      %v517 = vld [vmem:[%s499 + $0x44] sm:$0xf]
      %v518 = vld [vmem:[%s499 + $0x48] sm:$0xf]
      %v519 = vld [vmem:[%s499 + $0x4c] sm:$0xf]
      %v520 = vld [vmem:[%s499 + $0x50] sm:$0xf]
      %v521 = vld [vmem:[%s499 + $0x54] sm:$0xf]
      %v522 = vld [vmem:[%s499 + $0x58] sm:$0xf]
      %v523 = vld [vmem:[%s499 + $0x5c] sm:$0xf]
      %v524 = vld [vmem:[%s499 + $0x60] sm:$0xf]
      %v525 = vld [vmem:[%s499 + $0x64] sm:$0xf]
      %v526 = vld [vmem:[%s499 + $0x68] sm:$0xf]
      %v527 = vld [vmem:[%s499 + $0x6c] sm:$0xf]
      %v528 = vld [vmem:[%s499 + $0x70] sm:$0xf]
      %v529 = vld [vmem:[%s499 + $0x74] sm:$0xf]
      %v530 = vld [vmem:[%s499 + $0x78] sm:$0xf]
      %v531 = vld [vmem:[%s499 + $0x7c] sm:$0xf]
      %v532 = vld [vmem:[%s499 + $0x80] sm:$0xf]
      %v533 = vld [vmem:[%s499 + $0x84] sm:$0xf]
      %v534 = vld [vmem:[%s499 + $0x88] sm:$0xf]
      %v535 = vld [vmem:[%s499 + $0x8c] sm:$0xf]
      %v536 = vld [vmem:[%s499 + $0x90] sm:$0xf]
      %v537 = vld [vmem:[%s499 + $0x94] sm:$0xf]
      %v538 = vld [vmem:[%s499 + $0x98] sm:$0xf]
      %v539 = vld [vmem:[%s499 + $0x9c] sm:$0xf]
      %v540 = vld [vmem:[%s499 + $0xa0] sm:$0xf]
      %v541 = vld [vmem:[%s499 + $0xa4] sm:$0xf]
      %v542 = vld [vmem:[%s499 + $0xa8] sm:$0xf]
      %v543 = vld [vmem:[%s499 + $0xac] sm:$0xf]
      %v544 = vld [vmem:[%s499 + $0xb0] sm:$0xf]
      %v545 = vld [vmem:[%s499 + $0xb4] sm:$0xf]
      %v546 = vld [vmem:[%s499 + $0xb8] sm:$0xf]
      %v547 = vld [vmem:[%s499 + $0xbc] sm:$0xf]
      %v596 = vunpack.c.l.b16 %v500
      %v597 = vunpack.c.l.b16 %v501
      %v598 = vunpack.c.l.b16 %v502
      %v599 = vunpack.c.l.b16 %v503
      %v600 = vunpack.c.l.b16 %v504
      %v601 = vunpack.c.l.b16 %v505
      %v602 = vunpack.c.l.b16 %v506
      %v603 = vunpack.c.l.b16 %v507
      %v604 = vunpack.c.l.b16 %v508
      %v605 = vunpack.c.l.b16 %v509
      %v606 = vunpack.c.l.b16 %v510
      %v607 = vunpack.c.l.b16 %v511
      %v608 = vunpack.c.l.b16 %v512
      %v609 = vunpack.c.l.b16 %v513
      %v610 = vunpack.c.l.b16 %v514
      %v611 = vunpack.c.l.b16 %v515
      %v612 = vunpack.c.l.b16 %v516
      %v613 = vunpack.c.l.b16 %v517
      %v614 = vunpack.c.l.b16 %v518
      %v615 = vunpack.c.l.b16 %v519
      %v616 = vunpack.c.l.b16 %v520
      %v617 = vunpack.c.l.b16 %v521
      %v618 = vunpack.c.l.b16 %v522
      %v619 = vunpack.c.l.b16 %v523
      %v620 = vunpack.c.l.b16 %v524
      %v621 = vunpack.c.l.b16 %v525
      %v622 = vunpack.c.l.b16 %v526
      %v623 = vunpack.c.l.b16 %v527
      %v624 = vunpack.c.l.b16 %v528
      %v625 = vunpack.c.l.b16 %v529
      %v626 = vunpack.c.l.b16 %v530
      %v627 = vunpack.c.l.b16 %v531
      %v628 = vunpack.c.l.b16 %v532
      %v629 = vunpack.c.l.b16 %v533
      %v630 = vunpack.c.l.b16 %v534
      %v631 = vunpack.c.l.b16 %v535
      %v632 = vunpack.c.l.b16 %v536
      %v633 = vunpack.c.l.b16 %v537
      %v634 = vunpack.c.l.b16 %v538
      %v635 = vunpack.c.l.b16 %v539
      %v636 = vunpack.c.l.b16 %v540
      %v637 = vunpack.c.l.b16 %v541
      %v638 = vunpack.c.l.b16 %v542
      %v639 = vunpack.c.l.b16 %v543
      %v640 = vunpack.c.l.b16 %v544
      %v641 = vunpack.c.l.b16 %v545
      %v642 = vunpack.c.l.b16 %v546
      %v643 = vunpack.c.l.b16 %v547
      %v644 = vpack.c.b16 %v597, %v596
      %v645 = vpack.c.b16 %v599, %v598
      %v646 = vpack.c.b16 %v601, %v600
      %v647 = vpack.c.b16 %v603, %v602
      %v648 = vpack.c.b16 %v605, %v604
      %v649 = vpack.c.b16 %v607, %v606
      %v650 = vpack.c.b16 %v609, %v608
      %v651 = vpack.c.b16 %v611, %v610
      %v652 = vpack.c.b16 %v613, %v612
      %v653 = vpack.c.b16 %v615, %v614
      %v654 = vpack.c.b16 %v617, %v616
      %v655 = vpack.c.b16 %v619, %v618
      %v656 = vpack.c.b16 %v621, %v620
      %v657 = vpack.c.b16 %v623, %v622
      %v658 = vpack.c.b16 %v625, %v624
      %v659 = vpack.c.b16 %v627, %v626
      %v660 = vpack.c.b16 %v629, %v628
      %v661 = vpack.c.b16 %v631, %v630
      %v662 = vpack.c.b16 %v633, %v632
      %v663 = vpack.c.b16 %v635, %v634
      %v664 = vpack.c.b16 %v637, %v636
      %v665 = vpack.c.b16 %v639, %v638
      %v666 = vpack.c.b16 %v641, %v640
      %v667 = vpack.c.b16 %v643, %v642
      %692 = vmatprep.subr.bf16.mxu0 0
      %693 = vmatpush1.bf16.msra.mxu0 %v644
      %694 = vmatprep.subr.bf16.mxu0 0
      %695 = vmatpush1.bf16.msra.mxu0 %v645
      %696 = vmatprep.subr.bf16.mxu0 0
      %697 = vmatpush1.bf16.msra.mxu0 %v646
      %698 = vmatprep.subr.bf16.mxu0 0
      %699 = vmatpush1.bf16.msra.mxu0 %v647
      %700 = vmatprep.subr.bf16.mxu0 0
      %701 = vmatpush1.bf16.msra.mxu0 %v648
      %702 = vmatprep.subr.bf16.mxu0 0
      %703 = vmatpush1.bf16.msra.mxu0 %v649
      %704 = vmatprep.subr.bf16.mxu0 0
      %705 = vmatpush1.bf16.msra.mxu0 %v650
      %706 = vmatprep.subr.bf16.mxu0 0
      %707 = vmatpush1.bf16.msra.mxu0 %v651
      %708 = vmatprep.subr.bf16.mxu0 0
      %709 = vmatpush1.bf16.msra.mxu0 %v652
      %710 = vmatprep.subr.bf16.mxu0 0
      %711 = vmatpush1.bf16.msra.mxu0 %v653
      %712 = vmatprep.subr.bf16.mxu0 0
      %713 = vmatpush1.bf16.msra.mxu0 %v654
      %714 = vmatprep.subr.bf16.mxu0 0
      %715 = vmatpush1.bf16.msra.mxu0 %v655
      %716 = vmatprep.subr.bf16.mxu0 0
      %717 = vmatpush1.bf16.msra.mxu0 %v656
      %718 = vmatprep.subr.bf16.mxu0 0
      %719 = vmatpush1.bf16.msra.mxu0 %v657
      %720 = vmatprep.subr.bf16.mxu0 0
      %721 = vmatpush1.bf16.msra.mxu0 %v658
      %722 = vmatprep.subr.bf16.mxu0 0
      %723 = vmatpush1.bf16.msra.mxu0 %v659
      %724 = vmatprep.mubr.bf16.mxu0 %v488
      %725 = vmatmul.mubr.bf16.gmra.mrb[0].mxu0 %v487
      %v726 = vpop.f32.mrb[0].mxu0
      %v727 = vadd.f32 0.0, %v726
      %v728 = vpop.f32.mrb[0].mxu0
      %v729 = vpop.f32.mrb[0].mxu0
      %v730 = vadd.f32 0.0, %v729
      %v731 = vpop.f32.mrb[0].mxu0
      %732 = vmatprep.mubr.bf16.mxu0 %v491
      %733 = vmatmul.mubr.bf16.gmra.mrb[0].mxu0 %v490
      %v734 = vpop.f32.mrb[0].mxu0
      %v735 = vadd.f32 0.0, %v734
      %v736 = vpop.f32.mrb[0].mxu0
      %v737 = vpop.f32.mrb[0].mxu0
      %v738 = vadd.f32 0.0, %v737
      %v739 = vpop.f32.mrb[0].mxu0
      %740 = vmatprep.mubr.bf16.mxu0 %v494
      %741 = vmatmul.mubr.bf16.gmra.mrb[0].mxu0 %v493
      %v742 = vpop.f32.mrb[0].mxu0
      %v743 = vadd.f32 0.0, %v742
      %v744 = vpop.f32.mrb[0].mxu0
      %v745 = vpop.f32.mrb[0].mxu0
      %v746 = vadd.f32 0.0, %v745
      %v747 = vpop.f32.mrb[0].mxu0
      %748 = vmatprep.mubr.bf16.mxu0 %v497
      %749 = vmatmul.mubr.bf16.gmra.mrb[0].mxu0 %v496
      %v750 = vpop.f32.mrb[0].mxu0
      %v751 = vadd.f32 0.0, %v750
      %v752 = vpop.f32.mrb[0].mxu0
      %v753 = vpop.f32.mrb[0].mxu0
      %v754 = vadd.f32 0.0, %v753
      %v755 = vpop.f32.mrb[0].mxu0
      %756 = vdwg.mxu0
      %757 = vmatprep.subr.bf16.mxu0 0
      %758 = vmatpush1.bf16.msra.mxu0 %v660
      %759 = vmatprep.subr.bf16.mxu0 0
      %760 = vmatpush1.bf16.msra.mxu0 %v661
      %761 = vmatprep.subr.bf16.mxu0 0
      %762 = vmatpush1.bf16.msra.mxu0 %v662
      %763 = vmatprep.subr.bf16.mxu0 0
      %764 = vmatpush1.bf16.msra.mxu0 %v663
      %765 = vmatprep.subr.bf16.mxu0 0
      %766 = vmatpush1.bf16.msra.mxu0 %v664
      %767 = vmatprep.subr.bf16.mxu0 0
      %768 = vmatpush1.bf16.msra.mxu0 %v665
      %769 = vmatprep.subr.bf16.mxu0 0
      %770 = vmatpush1.bf16.msra.mxu0 %v666
      %771 = vmatprep.subr.bf16.mxu0 0
      %772 = vmatpush1.bf16.msra.mxu0 %v667
      %773 = vmatprep.subr.bf16.mxu0 0
      %774 = vmatpush1.bf16.msra.mxu0 0
      %775 = vmatprep.subr.bf16.mxu0 0
      %776 = vmatpush1.bf16.msra.mxu0 0
      %777 = vmatprep.subr.bf16.mxu0 0
      %778 = vmatpush1.bf16.msra.mxu0 0
      %779 = vmatprep.subr.bf16.mxu0 0
      %780 = vmatpush1.bf16.msra.mxu0 0
      %781 = vmatprep.subr.bf16.mxu0 0
      %782 = vmatpush1.bf16.msra.mxu0 0
      %783 = vmatprep.subr.bf16.mxu0 0
      %784 = vmatpush1.bf16.msra.mxu0 0
      %785 = vmatprep.subr.bf16.mxu0 0
      %786 = vmatpush1.bf16.msra.mxu0 0
      %787 = vmatprep.subr.bf16.mxu0 0
      %788 = vmatpush1.bf16.msra.mxu0 0
      %789 = vmatprep.mubr.bf16.mxu0 0
      %790 = vmatmul.mubr.bf16.gmra.mrb[0].mxu0 %v489
      %v791 = vpop.f32.mrb[0].mxu0
      %v792 = vadd.f32 %v727, %v791
      %v793 = vpop.f32.mrb[0].mxu0
      %v794 = vpop.f32.mrb[0].mxu0
      %v795 = vadd.f32 %v730, %v794
      %v796 = vpop.f32.mrb[0].mxu0
      %797 = vmatprep.mubr.bf16.mxu0 0
      %798 = vmatmul.mubr.bf16.gmra.mrb[0].mxu0 %v492
      %v799 = vpop.f32.mrb[0].mxu0
      %v800 = vadd.f32 %v735, %v799
      %v801 = vpop.f32.mrb[0].mxu0
      %v802 = vpop.f32.mrb[0].mxu0
      %v803 = vadd.f32 %v738, %v802
      %v804 = vpop.f32.mrb[0].mxu0
      %805 = vmatprep.mubr.bf16.mxu0 0
      %806 = vmatmul.mubr.bf16.gmra.mrb[0].mxu0 %v495
      %v807 = vpop.f32.mrb[0].mxu0
      %v808 = vadd.f32 %v743, %v807
      %v809 = vpop.f32.mrb[0].mxu0
      %v810 = vpop.f32.mrb[0].mxu0
      %v811 = vadd.f32 %v746, %v810
      %v812 = vpop.f32.mrb[0].mxu0
      %813 = vmatprep.mubr.bf16.mxu0 0
      %814 = vmatmul.mubr.bf16.gmra.mrb[0].mxu0 %v498
      %v815 = vpop.f32.mrb[0].mxu0
      %v816 = vadd.f32 %v751, %v815
      %v817 = vpop.f32.mrb[0].mxu0
      %v818 = vpop.f32.mrb[0].mxu0
      %v819 = vadd.f32 %v754, %v818
      %v820 = vpop.f32.mrb[0].mxu0
      %821 = vdwg.mxu0
      %v870 = vunpack.c.l.b16 %v415
      %v871 = vunpack.c.l.b16 %v416
      %v872 = vunpack.c.l.b16 %v417
      %v873 = vunpack.c.l.b16 %v418
      %v874 = vunpack.c.l.b16 %v419
      %v875 = vunpack.c.l.b16 %v420
      %v876 = vunpack.c.l.b16 %v421
      %v877 = vunpack.c.l.b16 %v422
      %v878 = vunpack.c.l.b16 %v423
      %v879 = vunpack.c.l.b16 %v424
      %v880 = vunpack.c.l.b16 %v425
      %v881 = vunpack.c.l.b16 %v426
      %v882 = vunpack.c.l.b16 %v427
      %v883 = vunpack.c.l.b16 %v428
      %v884 = vunpack.c.l.b16 %v429
      %v885 = vunpack.c.l.b16 %v430
      %v886 = vunpack.c.l.b16 %v431
      %v887 = vunpack.c.l.b16 %v432
      %v888 = vunpack.c.l.b16 %v433
      %v889 = vunpack.c.l.b16 %v434
      %v890 = vunpack.c.l.b16 %v435
      %v891 = vunpack.c.l.b16 %v436
      %v892 = vunpack.c.l.b16 %v437
      %v893 = vunpack.c.l.b16 %v438
      %v894 = vunpack.c.l.b16 %v439
      %v895 = vunpack.c.l.b16 %v440
      %v896 = vunpack.c.l.b16 %v441
      %v897 = vunpack.c.l.b16 %v442
      %v898 = vunpack.c.l.b16 %v443
      %v899 = vunpack.c.l.b16 %v444
      %v900 = vunpack.c.l.b16 %v445
      %v901 = vunpack.c.l.b16 %v446
      %v902 = vunpack.c.l.b16 %v447
      %v903 = vunpack.c.l.b16 %v448
      %v904 = vunpack.c.l.b16 %v449
      %v905 = vunpack.c.l.b16 %v450
      %v906 = vunpack.c.l.b16 %v451
      %v907 = vunpack.c.l.b16 %v452
      %v908 = vunpack.c.l.b16 %v453
      %v909 = vunpack.c.l.b16 %v454
      %v910 = vunpack.c.l.b16 %v455
      %v911 = vunpack.c.l.b16 %v456
      %v912 = vunpack.c.l.b16 %v457
      %v913 = vunpack.c.l.b16 %v458
      %v914 = vunpack.c.l.b16 %v459
      %v915 = vunpack.c.l.b16 %v460
      %v916 = vunpack.c.l.b16 %v461
      %v917 = vunpack.c.l.b16 %v462
      %v918 = vpack.c.b16 %v871, %v870
      %v919 = vpack.c.b16 %v873, %v872
      %v920 = vpack.c.b16 %v875, %v874
      %v921 = vpack.c.b16 %v877, %v876
      %v922 = vpack.c.b16 %v879, %v878
      %v923 = vpack.c.b16 %v881, %v880
      %v924 = vpack.c.b16 %v883, %v882
      %v925 = vpack.c.b16 %v885, %v884
      %v926 = vpack.c.b16 %v887, %v886
      %v927 = vpack.c.b16 %v889, %v888
      %v928 = vpack.c.b16 %v891, %v890
      %v929 = vpack.c.b16 %v893, %v892
      %v930 = vpack.c.b16 %v895, %v894
      %v931 = vpack.c.b16 %v897, %v896
      %v932 = vpack.c.b16 %v899, %v898
      %v933 = vpack.c.b16 %v901, %v900
      %v934 = vpack.c.b16 %v903, %v902
      %v935 = vpack.c.b16 %v905, %v904
      %v936 = vpack.c.b16 %v907, %v906
      %v937 = vpack.c.b16 %v909, %v908
      %v938 = vpack.c.b16 %v911, %v910
      %v939 = vpack.c.b16 %v913, %v912
      %v940 = vpack.c.b16 %v915, %v914
      %v941 = vpack.c.b16 %v917, %v916
      %966 = vmatprep.subr.bf16.mxu0 0
      %967 = vmatpush1.bf16.msra.mxu0 %v918
      %968 = vmatprep.subr.bf16.mxu0 0
      %969 = vmatpush1.bf16.msra.mxu0 %v919
      %970 = vmatprep.subr.bf16.mxu0 0
      %971 = vmatpush1.bf16.msra.mxu0 %v920
      %972 = vmatprep.subr.bf16.mxu0 0
      %973 = vmatpush1.bf16.msra.mxu0 %v921
      %974 = vmatprep.subr.bf16.mxu0 0
      %975 = vmatpush1.bf16.msra.mxu0 %v922
      %976 = vmatprep.subr.bf16.mxu0 0
      %977 = vmatpush1.bf16.msra.mxu0 %v923
      %978 = vmatprep.subr.bf16.mxu0 0
      %979 = vmatpush1.bf16.msra.mxu0 %v924
      %980 = vmatprep.subr.bf16.mxu0 0
      %981 = vmatpush1.bf16.msra.mxu0 %v925
      %982 = vmatprep.subr.bf16.mxu0 0
      %983 = vmatpush1.bf16.msra.mxu0 %v926
      %984 = vmatprep.subr.bf16.mxu0 0
      %985 = vmatpush1.bf16.msra.mxu0 %v927
      %986 = vmatprep.subr.bf16.mxu0 0
      %987 = vmatpush1.bf16.msra.mxu0 %v928
      %988 = vmatprep.subr.bf16.mxu0 0
      %989 = vmatpush1.bf16.msra.mxu0 %v929
      %990 = vmatprep.subr.bf16.mxu0 0
      %991 = vmatpush1.bf16.msra.mxu0 %v930
      %992 = vmatprep.subr.bf16.mxu0 0
      %993 = vmatpush1.bf16.msra.mxu0 %v931
      %994 = vmatprep.subr.bf16.mxu0 0
      %995 = vmatpush1.bf16.msra.mxu0 %v932
      %996 = vmatprep.subr.bf16.mxu0 0
      %997 = vmatpush1.bf16.msra.mxu0 %v933
      %998 = vmatprep.mubr.bf16.mxu0 %v404
      %999 = vmatmul.mubr.bf16.gmra.mrb[0].mxu0 %v403
      %v1000 = vpop.f32.mrb[0].mxu0
      %v1001 = vadd.f32 %v792, %v1000
      %v1002 = vpop.f32.mrb[0].mxu0
      %v1003 = vpop.f32.mrb[0].mxu0
      %v1004 = vadd.f32 %v795, %v1003
      %v1005 = vpop.f32.mrb[0].mxu0
      %1006 = vmatprep.mubr.bf16.mxu0 %v407
      %1007 = vmatmul.mubr.bf16.gmra.mrb[0].mxu0 %v406
      %v1008 = vpop.f32.mrb[0].mxu0
      %v1009 = vadd.f32 %v800, %v1008
      %v1010 = vpop.f32.mrb[0].mxu0
      %v1011 = vpop.f32.mrb[0].mxu0
      %v1012 = vadd.f32 %v803, %v1011
      %v1013 = vpop.f32.mrb[0].mxu0
      %1014 = vmatprep.mubr.bf16.mxu0 %v410
      %1015 = vmatmul.mubr.bf16.gmra.mrb[0].mxu0 %v409
      %v1016 = vpop.f32.mrb[0].mxu0
      %v1017 = vadd.f32 %v808, %v1016
      %v1018 = vpop.f32.mrb[0].mxu0
      %v1019 = vpop.f32.mrb[0].mxu0
      %v1020 = vadd.f32 %v811, %v1019
      %v1021 = vpop.f32.mrb[0].mxu0
      %1022 = vmatprep.mubr.bf16.mxu0 %v413
      %1023 = vmatmul.mubr.bf16.gmra.mrb[0].mxu0 %v412
      %v1024 = vpop.f32.mrb[0].mxu0
      %v1025 = vadd.f32 %v816, %v1024
      %v1026 = vpop.f32.mrb[0].mxu0
      %v1027 = vpop.f32.mrb[0].mxu0
      %v1028 = vadd.f32 %v819, %v1027
      %v1029 = vpop.f32.mrb[0].mxu0
      %1030 = vdwg.mxu0
      %1031 = vmatprep.subr.bf16.mxu0 0
      %1032 = vmatpush1.bf16.msra.mxu0 %v934
      %1033 = vmatprep.subr.bf16.mxu0 0
      %1034 = vmatpush1.bf16.msra.mxu0 %v935
      %1035 = vmatprep.subr.bf16.mxu0 0
      %1036 = vmatpush1.bf16.msra.mxu0 %v936
      %1037 = vmatprep.subr.bf16.mxu0 0
      %1038 = vmatpush1.bf16.msra.mxu0 %v937
      %1039 = vmatprep.subr.bf16.mxu0 0
      %1040 = vmatpush1.bf16.msra.mxu0 %v938
      %1041 = vmatprep.subr.bf16.mxu0 0
      %1042 = vmatpush1.bf16.msra.mxu0 %v939
      %1043 = vmatprep.subr.bf16.mxu0 0
      %1044 = vmatpush1.bf16.msra.mxu0 %v940
      %1045 = vmatprep.subr.bf16.mxu0 0
      %1046 = vmatpush1.bf16.msra.mxu0 %v941
      %1047 = vmatprep.subr.bf16.mxu0 0
      %1048 = vmatpush1.bf16.msra.mxu0 0
      %1049 = vmatprep.subr.bf16.mxu0 0
      %1050 = vmatpush1.bf16.msra.mxu0 0
      %1051 = vmatprep.subr.bf16.mxu0 0
      %1052 = vmatpush1.bf16.msra.mxu0 0
      %1053 = vmatprep.subr.bf16.mxu0 0
      %1054 = vmatpush1.bf16.msra.mxu0 0
      %1055 = vmatprep.subr.bf16.mxu0 0
      %1056 = vmatpush1.bf16.msra.mxu0 0
      %1057 = vmatprep.subr.bf16.mxu0 0
      %1058 = vmatpush1.bf16.msra.mxu0 0
      %1059 = vmatprep.subr.bf16.mxu0 0
      %1060 = vmatpush1.bf16.msra.mxu0 0
      %1061 = vmatprep.subr.bf16.mxu0 0
      %1062 = vmatpush1.bf16.msra.mxu0 0
      %1063 = vmatprep.mubr.bf16.mxu0 0
      %1064 = vmatmul.mubr.bf16.gmra.mrb[0].mxu0 %v405
      %v1065 = vpop.f32.mrb[0].mxu0
      %v1066 = vadd.f32 %v1001, %v1065
      %v1067 = vpop.f32.mrb[0].mxu0
      %v1068 = vpop.f32.mrb[0].mxu0
      %v1069 = vadd.f32 %v1004, %v1068
      %v1070 = vpop.f32.mrb[0].mxu0
      %1071 = vmatprep.mubr.bf16.mxu0 0
      %1072 = vmatmul.mubr.bf16.gmra.mrb[0].mxu0 %v408
      %v1073 = vpop.f32.mrb[0].mxu0
      %v1074 = vadd.f32 %v1009, %v1073
      %v1075 = vpop.f32.mrb[0].mxu0
      %v1076 = vpop.f32.mrb[0].mxu0
      %v1077 = vadd.f32 %v1012, %v1076
      %v1078 = vpop.f32.mrb[0].mxu0
      %1079 = vmatprep.mubr.bf16.mxu0 0
      %1080 = vmatmul.mubr.bf16.gmra.mrb[0].mxu0 %v411
      %v1081 = vpop.f32.mrb[0].mxu0
      %v1082 = vadd.f32 %v1017, %v1081
      %v1083 = vpop.f32.mrb[0].mxu0
      %v1084 = vpop.f32.mrb[0].mxu0
      %v1085 = vadd.f32 %v1020, %v1084
      %v1086 = vpop.f32.mrb[0].mxu0
      %1087 = vmatprep.mubr.bf16.mxu0 0
      %1088 = vmatmul.mubr.bf16.gmra.mrb[0].mxu0 %v414
      %v1089 = vpop.f32.mrb[0].mxu0
      %v1090 = vadd.f32 %v1025, %v1089
      %v1091 = vpop.f32.mrb[0].mxu0
      %v1092 = vpop.f32.mrb[0].mxu0
      %v1093 = vadd.f32 %v1028, %v1092
      %v1094 = vpop.f32.mrb[0].mxu0
      %1095 = vdwg.mxu0
      %s1096 = scalar_lea.vmem [#allocation2], 48
      %v1097 = vld [vmem:[%s1096] sm:$0xff]
      %v1098 = vld [vmem:[%s1096 + $0x8] sm:$0xff]
      %v1099 = vld [vmem:[%s1096 + $0x10] sm:$0xff]
      %v1100 = vld [vmem:[%s1096 + $0x18] sm:$0xff]
      %v1101 = vld [vmem:[%s1096 + $0x20] sm:$0xff]
      %v1102 = vld [vmem:[%s1096 + $0x28] sm:$0xff]
      %v1103 = vld [vmem:[%s1096 + $0x30] sm:$0xff]
      %v1104 = vld [vmem:[%s1096 + $0x38] sm:$0xff]
      %v1105 = vld [vmem:[%s1096 + $0x40] sm:$0xff]
      %v1106 = vld [vmem:[%s1096 + $0x48] sm:$0xff]
      %v1107 = vld [vmem:[%s1096 + $0x50] sm:$0xff]
      %v1108 = vld [vmem:[%s1096 + $0x58] sm:$0xff]
      %v1109 = vld [vmem:[%s1096 + $0x60] sm:$0xff]
      %v1110 = vld [vmem:[%s1096 + $0x68] sm:$0xff]
      %v1111 = vld [vmem:[%s1096 + $0x70] sm:$0xff]
      %v1112 = vld [vmem:[%s1096 + $0x78] sm:$0xff]
      %v1113 = vld [vmem:[%s1096 + $0x80] sm:$0xff]
      %v1114 = vld [vmem:[%s1096 + $0x88] sm:$0xff]
      %v1115 = vld [vmem:[%s1096 + $0x90] sm:$0xff]
      %v1116 = vld [vmem:[%s1096 + $0x98] sm:$0xff]
      %v1117 = vld [vmem:[%s1096 + $0xa0] sm:$0xff]
      %v1118 = vld [vmem:[%s1096 + $0xa8] sm:$0xff]
      %v1119 = vld [vmem:[%s1096 + $0xb0] sm:$0xff]
      %v1120 = vld [vmem:[%s1096 + $0xb8] sm:$0xff]
      %v1121 = vpack.c.bf16 %v1100, %v1097
      %v1122 = vpack.c.bf16 %v1101, %v1098
      %v1123 = vpack.c.bf16 %v1102, %v1099
      %v1124 = vpack.c.bf16 %v1106, %v1103
      %v1125 = vpack.c.bf16 %v1107, %v1104
      %v1126 = vpack.c.bf16 %v1108, %v1105
      %v1127 = vpack.c.bf16 %v1112, %v1109
      %v1128 = vpack.c.bf16 %v1113, %v1110
      %v1129 = vpack.c.bf16 %v1114, %v1111
      %v1130 = vpack.c.bf16 %v1118, %v1115
      %v1131 = vpack.c.bf16 %v1119, %v1116
      %v1132 = vpack.c.bf16 %v1120, %v1117
      %s1133 = scalar_lea.vmem %s3, 384
      %v1134 = vld [vmem:[%s1133] sm:$0xf]
      %v1135 = vld [vmem:[%s1133 + $0x4] sm:$0xf]
      %v1136 = vld [vmem:[%s1133 + $0x8] sm:$0xf]
      %v1137 = vld [vmem:[%s1133 + $0xc] sm:$0xf]
      %v1138 = vld [vmem:[%s1133 + $0x10] sm:$0xf]
      %v1139 = vld [vmem:[%s1133 + $0x14] sm:$0xf]
      %v1140 = vld [vmem:[%s1133 + $0x18] sm:$0xf]
      %v1141 = vld [vmem:[%s1133 + $0x1c] sm:$0xf]
      %v1142 = vld [vmem:[%s1133 + $0x20] sm:$0xf]
      %v1143 = vld [vmem:[%s1133 + $0x24] sm:$0xf]
      %v1144 = vld [vmem:[%s1133 + $0x28] sm:$0xf]
      %v1145 = vld [vmem:[%s1133 + $0x2c] sm:$0xf]
      %v1146 = vld [vmem:[%s1133 + $0x30] sm:$0xf]
      %v1147 = vld [vmem:[%s1133 + $0x34] sm:$0xf]
      %v1148 = vld [vmem:[%s1133 + $0x38] sm:$0xf]
      %v1149 = vld [vmem:[%s1133 + $0x3c] sm:$0xf]
      %v1150 = vld [vmem:[%s1133 + $0x40] sm:$0xf]
      %v1151 = vld [vmem:[%s1133 + $0x44] sm:$0xf]
      %v1152 = vld [vmem:[%s1133 + $0x48] sm:$0xf]
      %v1153 = vld [vmem:[%s1133 + $0x4c] sm:$0xf]
      %v1154 = vld [vmem:[%s1133 + $0x50] sm:$0xf]
      %v1155 = vld [vmem:[%s1133 + $0x54] sm:$0xf]
      %v1156 = vld [vmem:[%s1133 + $0x58] sm:$0xf]
      %v1157 = vld [vmem:[%s1133 + $0x5c] sm:$0xf]
      %v1158 = vld [vmem:[%s1133 + $0x60] sm:$0xf]
      %v1159 = vld [vmem:[%s1133 + $0x64] sm:$0xf]
      %v1160 = vld [vmem:[%s1133 + $0x68] sm:$0xf]
      %v1161 = vld [vmem:[%s1133 + $0x6c] sm:$0xf]
      %v1162 = vld [vmem:[%s1133 + $0x70] sm:$0xf]
      %v1163 = vld [vmem:[%s1133 + $0x74] sm:$0xf]
      %v1164 = vld [vmem:[%s1133 + $0x78] sm:$0xf]
      %v1165 = vld [vmem:[%s1133 + $0x7c] sm:$0xf]
      %v1166 = vld [vmem:[%s1133 + $0x80] sm:$0xf]
      %v1167 = vld [vmem:[%s1133 + $0x84] sm:$0xf]
      %v1168 = vld [vmem:[%s1133 + $0x88] sm:$0xf]
      %v1169 = vld [vmem:[%s1133 + $0x8c] sm:$0xf]
      %v1170 = vld [vmem:[%s1133 + $0x90] sm:$0xf]
      %v1171 = vld [vmem:[%s1133 + $0x94] sm:$0xf]
      %v1172 = vld [vmem:[%s1133 + $0x98] sm:$0xf]
      %v1173 = vld [vmem:[%s1133 + $0x9c] sm:$0xf]
      %v1174 = vld [vmem:[%s1133 + $0xa0] sm:$0xf]
      %v1175 = vld [vmem:[%s1133 + $0xa4] sm:$0xf]
      %v1176 = vld [vmem:[%s1133 + $0xa8] sm:$0xf]
      %v1177 = vld [vmem:[%s1133 + $0xac] sm:$0xf]
      %v1178 = vld [vmem:[%s1133 + $0xb0] sm:$0xf]
      %v1179 = vld [vmem:[%s1133 + $0xb4] sm:$0xf]
      %v1180 = vld [vmem:[%s1133 + $0xb8] sm:$0xf]
      %v1181 = vld [vmem:[%s1133 + $0xbc] sm:$0xf]
      %v1230 = vunpack.c.l.b16 %v1134
      %v1231 = vunpack.c.l.b16 %v1135
      %v1232 = vunpack.c.l.b16 %v1136
      %v1233 = vunpack.c.l.b16 %v1137
      %v1234 = vunpack.c.l.b16 %v1138
      %v1235 = vunpack.c.l.b16 %v1139
      %v1236 = vunpack.c.l.b16 %v1140
      %v1237 = vunpack.c.l.b16 %v1141
      %v1238 = vunpack.c.l.b16 %v1142
      %v1239 = vunpack.c.l.b16 %v1143
      %v1240 = vunpack.c.l.b16 %v1144
      %v1241 = vunpack.c.l.b16 %v1145
      %v1242 = vunpack.c.l.b16 %v1146
      %v1243 = vunpack.c.l.b16 %v1147
      %v1244 = vunpack.c.l.b16 %v1148
      %v1245 = vunpack.c.l.b16 %v1149
      %v1246 = vunpack.c.l.b16 %v1150
      %v1247 = vunpack.c.l.b16 %v1151
      %v1248 = vunpack.c.l.b16 %v1152
      %v1249 = vunpack.c.l.b16 %v1153
      %v1250 = vunpack.c.l.b16 %v1154
      %v1251 = vunpack.c.l.b16 %v1155
      %v1252 = vunpack.c.l.b16 %v1156
      %v1253 = vunpack.c.l.b16 %v1157
      %v1254 = vunpack.c.l.b16 %v1158
      %v1255 = vunpack.c.l.b16 %v1159
      %v1256 = vunpack.c.l.b16 %v1160
      %v1257 = vunpack.c.l.b16 %v1161
      %v1258 = vunpack.c.l.b16 %v1162
      %v1259 = vunpack.c.l.b16 %v1163
      %v1260 = vunpack.c.l.b16 %v1164
      %v1261 = vunpack.c.l.b16 %v1165
      %v1262 = vunpack.c.l.b16 %v1166
      %v1263 = vunpack.c.l.b16 %v1167
      %v1264 = vunpack.c.l.b16 %v1168
      %v1265 = vunpack.c.l.b16 %v1169
      %v1266 = vunpack.c.l.b16 %v1170
      %v1267 = vunpack.c.l.b16 %v1171
      %v1268 = vunpack.c.l.b16 %v1172
      %v1269 = vunpack.c.l.b16 %v1173
      %v1270 = vunpack.c.l.b16 %v1174
      %v1271 = vunpack.c.l.b16 %v1175
      %v1272 = vunpack.c.l.b16 %v1176
      %v1273 = vunpack.c.l.b16 %v1177
      %v1274 = vunpack.c.l.b16 %v1178
      %v1275 = vunpack.c.l.b16 %v1179
      %v1276 = vunpack.c.l.b16 %v1180
      %v1277 = vunpack.c.l.b16 %v1181
      %v1278 = vpack.c.b16 %v1231, %v1230
      %v1279 = vpack.c.b16 %v1233, %v1232
      %v1280 = vpack.c.b16 %v1235, %v1234
      %v1281 = vpack.c.b16 %v1237, %v1236
      %v1282 = vpack.c.b16 %v1239, %v1238
      %v1283 = vpack.c.b16 %v1241, %v1240
      %v1284 = vpack.c.b16 %v1243, %v1242
      %v1285 = vpack.c.b16 %v1245, %v1244
      %v1286 = vpack.c.b16 %v1247, %v1246
      %v1287 = vpack.c.b16 %v1249, %v1248
      %v1288 = vpack.c.b16 %v1251, %v1250
      %v1289 = vpack.c.b16 %v1253, %v1252
      %v1290 = vpack.c.b16 %v1255, %v1254
      %v1291 = vpack.c.b16 %v1257, %v1256
      %v1292 = vpack.c.b16 %v1259, %v1258
      %v1293 = vpack.c.b16 %v1261, %v1260
      %v1294 = vpack.c.b16 %v1263, %v1262
      %v1295 = vpack.c.b16 %v1265, %v1264
      %v1296 = vpack.c.b16 %v1267, %v1266
      %v1297 = vpack.c.b16 %v1269, %v1268
      %v1298 = vpack.c.b16 %v1271, %v1270
      %v1299 = vpack.c.b16 %v1273, %v1272
      %v1300 = vpack.c.b16 %v1275, %v1274
      %v1301 = vpack.c.b16 %v1277, %v1276
      %1326 = vmatprep.subr.bf16.mxu0 0
      %1327 = vmatpush1.bf16.msra.mxu0 %v1278
      %1328 = vmatprep.subr.bf16.mxu0 0
      %1329 = vmatpush1.bf16.msra.mxu0 %v1279
      %1330 = vmatprep.subr.bf16.mxu0 0
      %1331 = vmatpush1.bf16.msra.mxu0 %v1280
      %1332 = vmatprep.subr.bf16.mxu0 0
      %1333 = vmatpush1.bf16.msra.mxu0 %v1281
      %1334 = vmatprep.subr.bf16.mxu0 0
      %1335 = vmatpush1.bf16.msra.mxu0 %v1282
      %1336 = vmatprep.subr.bf16.mxu0 0
      %1337 = vmatpush1.bf16.msra.mxu0 %v1283
      %1338 = vmatprep.subr.bf16.mxu0 0
      %1339 = vmatpush1.bf16.msra.mxu0 %v1284
      %1340 = vmatprep.subr.bf16.mxu0 0
      %1341 = vmatpush1.bf16.msra.mxu0 %v1285
      %1342 = vmatprep.subr.bf16.mxu0 0
      %1343 = vmatpush1.bf16.msra.mxu0 %v1286
      %1344 = vmatprep.subr.bf16.mxu0 0
      %1345 = vmatpush1.bf16.msra.mxu0 %v1287
      %1346 = vmatprep.subr.bf16.mxu0 0
      %1347 = vmatpush1.bf16.msra.mxu0 %v1288
      %1348 = vmatprep.subr.bf16.mxu0 0
      %1349 = vmatpush1.bf16.msra.mxu0 %v1289
      %1350 = vmatprep.subr.bf16.mxu0 0
      %1351 = vmatpush1.bf16.msra.mxu0 %v1290
      %1352 = vmatprep.subr.bf16.mxu0 0
      %1353 = vmatpush1.bf16.msra.mxu0 %v1291
      %1354 = vmatprep.subr.bf16.mxu0 0
      %1355 = vmatpush1.bf16.msra.mxu0 %v1292
      %1356 = vmatprep.subr.bf16.mxu0 0
      %1357 = vmatpush1.bf16.msra.mxu0 %v1293
      %1358 = vmatprep.mubr.bf16.mxu0 %v1122
      %1359 = vmatmul.mubr.bf16.gmra.mrb[0].mxu0 %v1121
      %v1360 = vpop.f32.mrb[0].mxu0
      %v1361 = vadd.f32 0.0, %v1360
      %v1362 = vpop.f32.mrb[0].mxu0
      %v1363 = vpop.f32.mrb[0].mxu0
      %v1364 = vadd.f32 0.0, %v1363
      %v1365 = vpop.f32.mrb[0].mxu0
      %1366 = vmatprep.mubr.bf16.mxu0 %v1125
      %1367 = vmatmul.mubr.bf16.gmra.mrb[0].mxu0 %v1124
      %v1368 = vpop.f32.mrb[0].mxu0
      %v1369 = vadd.f32 0.0, %v1368
      %v1370 = vpop.f32.mrb[0].mxu0
      %v1371 = vpop.f32.mrb[0].mxu0
      %v1372 = vadd.f32 0.0, %v1371
      %v1373 = vpop.f32.mrb[0].mxu0
      %1374 = vmatprep.mubr.bf16.mxu0 %v1128
      %1375 = vmatmul.mubr.bf16.gmra.mrb[0].mxu0 %v1127
      %v1376 = vpop.f32.mrb[0].mxu0
      %v1377 = vadd.f32 0.0, %v1376
      %v1378 = vpop.f32.mrb[0].mxu0
      %v1379 = vpop.f32.mrb[0].mxu0
      %v1380 = vadd.f32 0.0, %v1379
      %v1381 = vpop.f32.mrb[0].mxu0
      %1382 = vmatprep.mubr.bf16.mxu0 %v1131
      %1383 = vmatmul.mubr.bf16.gmra.mrb[0].mxu0 %v1130
      %v1384 = vpop.f32.mrb[0].mxu0
      %v1385 = vadd.f32 0.0, %v1384
      %v1386 = vpop.f32.mrb[0].mxu0
      %v1387 = vpop.f32.mrb[0].mxu0
      %v1388 = vadd.f32 0.0, %v1387
      %v1389 = vpop.f32.mrb[0].mxu0
      %1390 = vdwg.mxu0
      %1391 = vmatprep.subr.bf16.mxu0 0
      %1392 = vmatpush1.bf16.msra.mxu0 %v1294
      %1393 = vmatprep.subr.bf16.mxu0 0
      %1394 = vmatpush1.bf16.msra.mxu0 %v1295
      %1395 = vmatprep.subr.bf16.mxu0 0
      %1396 = vmatpush1.bf16.msra.mxu0 %v1296
      %1397 = vmatprep.subr.bf16.mxu0 0
      %1398 = vmatpush1.bf16.msra.mxu0 %v1297
      %1399 = vmatprep.subr.bf16.mxu0 0
      %1400 = vmatpush1.bf16.msra.mxu0 %v1298
      %1401 = vmatprep.subr.bf16.mxu0 0
      %1402 = vmatpush1.bf16.msra.mxu0 %v1299
      %1403 = vmatprep.subr.bf16.mxu0 0
      %1404 = vmatpush1.bf16.msra.mxu0 %v1300
      %1405 = vmatprep.subr.bf16.mxu0 0
      %1406 = vmatpush1.bf16.msra.mxu0 %v1301
      %1407 = vmatprep.subr.bf16.mxu0 0
      %1408 = vmatpush1.bf16.msra.mxu0 0
      %1409 = vmatprep.subr.bf16.mxu0 0
      %1410 = vmatpush1.bf16.msra.mxu0 0
      %1411 = vmatprep.subr.bf16.mxu0 0
      %1412 = vmatpush1.bf16.msra.mxu0 0
      %1413 = vmatprep.subr.bf16.mxu0 0
      %1414 = vmatpush1.bf16.msra.mxu0 0
      %1415 = vmatprep.subr.bf16.mxu0 0
      %1416 = vmatpush1.bf16.msra.mxu0 0
      %1417 = vmatprep.subr.bf16.mxu0 0
      %1418 = vmatpush1.bf16.msra.mxu0 0
      %1419 = vmatprep.subr.bf16.mxu0 0
      %1420 = vmatpush1.bf16.msra.mxu0 0
      %1421 = vmatprep.subr.bf16.mxu0 0
      %1422 = vmatpush1.bf16.msra.mxu0 0
      %1423 = vmatprep.mubr.bf16.mxu0 0
      %1424 = vmatmul.mubr.bf16.gmra.mrb[0].mxu0 %v1123
      %v1425 = vpop.f32.mrb[0].mxu0
      %v1426 = vadd.f32 %v1361, %v1425
      %v1427 = vpop.f32.mrb[0].mxu0
      %v1428 = vpop.f32.mrb[0].mxu0
      %v1429 = vadd.f32 %v1364, %v1428
      %v1430 = vpop.f32.mrb[0].mxu0
      %1431 = vmatprep.mubr.bf16.mxu0 0
      %1432 = vmatmul.mubr.bf16.gmra.mrb[0].mxu0 %v1126
      %v1433 = vpop.f32.mrb[0].mxu0
      %v1434 = vadd.f32 %v1369, %v1433
      %v1435 = vpop.f32.mrb[0].mxu0
      %v1436 = vpop.f32.mrb[0].mxu0
      %v1437 = vadd.f32 %v1372, %v1436
      %v1438 = vpop.f32.mrb[0].mxu0
      %1439 = vmatprep.mubr.bf16.mxu0 0
      %1440 = vmatmul.mubr.bf16.gmra.mrb[0].mxu0 %v1129
      %v1441 = vpop.f32.mrb[0].mxu0
      %v1442 = vadd.f32 %v1377, %v1441
      %v1443 = vpop.f32.mrb[0].mxu0
      %v1444 = vpop.f32.mrb[0].mxu0
      %v1445 = vadd.f32 %v1380, %v1444
      %v1446 = vpop.f32.mrb[0].mxu0
      %1447 = vmatprep.mubr.bf16.mxu0 0
      %1448 = vmatmul.mubr.bf16.gmra.mrb[0].mxu0 %v1132
      %v1449 = vpop.f32.mrb[0].mxu0
      %v1450 = vadd.f32 %v1385, %v1449
      %v1451 = vpop.f32.mrb[0].mxu0
      %v1452 = vpop.f32.mrb[0].mxu0
      %v1453 = vadd.f32 %v1388, %v1452
      %v1454 = vpop.f32.mrb[0].mxu0
      %1455 = vdwg.mxu0
      %v1456 = vadd.f32 %v1066, %v1426
      %v1457 = vadd.f32 %v1069, %v1429
      %v1458 = vadd.f32 %v1074, %v1434
      %v1459 = vadd.f32 %v1077, %v1437
      %v1460 = vadd.f32 %v1082, %v1442
      %v1461 = vadd.f32 %v1085, %v1445
      %v1462 = vadd.f32 %v1090, %v1450
      %v1463 = vadd.f32 %v1093, %v1453
      %v1464 = vpack.c.bf16 %v1456, %v1456
      %v1465 = vpack.c.bf16 %v1457, %v1457
      %v1466 = vpack.c.bf16 %v1458, %v1458
      %v1467 = vpack.c.bf16 %v1459, %v1459
      %v1468 = vpack.c.bf16 %v1460, %v1460
      %v1469 = vpack.c.bf16 %v1461, %v1461
      %v1470 = vpack.c.bf16 %v1462, %v1462
      %v1471 = vpack.c.bf16 %v1463, %v1463
      %1472 = vst [vmem:[%s231] sm:$0xf] %v1464
      %1473 = vst [vmem:[%s231 + $0x4] sm:$0xf] %v1465
      %1474 = vst [vmem:[%s231 + $0x8] sm:$0xf] %v1466
      %1475 = vst [vmem:[%s231 + $0xc] sm:$0xf] %v1467
      %1476 = vst [vmem:[%s231 + $0x10] sm:$0xf] %v1468
      %1477 = vst [vmem:[%s231 + $0x14] sm:$0xf] %v1469
      %1478 = vst [vmem:[%s231 + $0x18] sm:$0xf] %v1470
      %1479 = vst [vmem:[%s231 + $0x1c] sm:$0xf] %v1471
      %v1480 = vadd.f32 %v1456, %v1457
      %v1481 = vadd.f32 %v1480, %v1458
      %v1482 = vadd.f32 %v1481, %v1459
      %v1483 = vadd.f32 %v1482, %v1460
      %v1484 = vadd.f32 %v1483, %v1461
      %v1485 = vadd.f32 %v1484, %v1462
      %v1486 = vadd.f32 %v1485, %v1463
      %v1487 = vrot.slane %v1486, 4
      %v1488 = vadd.f32 %v1486, %v1487
      %v1489 = vrot.slane %v1488, 2
      %v1490 = vadd.f32 %v1488, %v1489
      %v1491 = vrot.slane %v1490, 1
      %v1492 = vadd.f32 %v1490, %v1491
      %v1493 = vmul.f32 %v1456, %v1456
      %v1494 = vmul.f32 %v1457, %v1457
      %v1495 = vmul.f32 %v1458, %v1458
      %v1496 = vmul.f32 %v1459, %v1459
      %v1497 = vmul.f32 %v1460, %v1460
      %v1498 = vmul.f32 %v1461, %v1461
      %v1499 = vmul.f32 %v1462, %v1462
      %v1500 = vmul.f32 %v1463, %v1463
      %v1501 = vadd.f32 %v1493, %v1494
      %v1502 = vadd.f32 %v1501, %v1495
      %v1503 = vadd.f32 %v1502, %v1496
      %v1504 = vadd.f32 %v1503, %v1497
      %v1505 = vadd.f32 %v1504, %v1498
      %v1506 = vadd.f32 %v1505, %v1499
      %v1507 = vadd.f32 %v1506, %v1500
      %v1508 = vrot.slane %v1507, 4
      %v1509 = vadd.f32 %v1507, %v1508
      %v1510 = vrot.slane %v1509, 2
      %v1511 = vadd.f32 %v1509, %v1510
      %v1512 = vrot.slane %v1511, 1
      %v1513 = vadd.f32 %v1511, %v1512
      %vm1514 = vcmask 1040384
      %v1515 = vsel %vm1514, %v1492, %v1513
      %1516 = vst [vmem:[%s235] sm:$0x3] %v1515
      %p1517 = scmp.lt.s32.totalorder %s17, 1
      %s1518 = scalar_select %p1517, %s17, 1
      %s1519 = smul.addr %s1518, 8
      %s1520 = smul.addr %s1519, 4
      %s1521 = scalar_lea.vmem %s4, %s1520
      %p1522 = scmp.lt.s32.totalorder %s17, 1
      %s1523 = scalar_select %p1522, %s17, 1
      %s1524 = smul.addr %s1523, 2
      %s1525 = scalar_lea.vmem %s5, %s1524
      // Predicated region
      $region37: #{basic_block_forward.4} parent=35 // pred_check
        %p1526 = pneg %p124
      $region38: #{basic_block_forward.4} parent=35 // pred_check_branch
        %1528 = sbr.rel (%p1526) target = $region40
      $region39: #{basic_block_forward.4} parent=35 // pred_region
        _
      $region40: #{basic_block_forward.4} parent=35 // pred_fallthru
        _
      // Predicated region
      $region41: #{basic_block_forward.4} parent=35 // pred_check
        %p1529 = pneg %p150
      $region42: #{basic_block_forward.4} parent=35 // pred_check_branch
        %1531 = sbr.rel (%p1529) target = $region44
      $region43: #{basic_block_forward.4} parent=35 // pred_region
        _
      $region44: #{basic_block_forward.4} parent=35 // pred_fallthru
        _
    $region36: #{basic_block_forward.4} parent=5 // pred_fallthru
      _
    %p1532 = scmp.le.s32.totalorder 2, %s12
    // Predicated region
    $region45: #{basic_block_forward.4} parent=5 // pred_check
      %p1533 = pneg %p1532
    $region46: #{basic_block_forward.4} parent=5 // pred_check_branch
      %1535 = sbr.rel (%p1533) target = $region48
    $region47: #{basic_block_forward.4} parent=5 // pred_region
      %s1536 = ssub.s32 %s12, 2
      // Predicated region
      $region49: #{basic_block_forward.4} parent=47 // pred_check
        %p1537 = pneg %p130
      $region50: #{basic_block_forward.4} parent=47 // pred_check_branch
        %1539 = sbr.rel (%p1537) target = $region52
      $region51: #{basic_block_forward.4} parent=47 // pred_region
        %p1540 = scmp.lt.s32.totalorder %s18, 1
        %s1541 = scalar_select %p1540, %s18, 1
        %s1542 = smul.addr %s1541, 8
        %s1543 = smul.addr %s1542, 4
        %s1544 = scalar_lea.vmem %s4, %s1543
      $region52: #{basic_block_forward.4} parent=47 // pred_fallthru
        _
      // Predicated region
      $region53: #{basic_block_forward.4} parent=47 // pred_check
        %p1545 = pneg %p156
      $region54: #{basic_block_forward.4} parent=47 // pred_check_branch
        %1547 = sbr.rel (%p1545) target = $region56
      $region55: #{basic_block_forward.4} parent=47 // pred_region
        %p1548 = scmp.lt.s32.totalorder %s18, 1
        %s1549 = scalar_select %p1548, %s18, 1
        %s1550 = smul.addr %s1549, 2
        %s1551 = scalar_lea.vmem %s5, %s1550
      $region56: #{basic_block_forward.4} parent=47 // pred_fallthru
        _
    $region48: #{basic_block_forward.4} parent=5 // pred_fallthru
      _
  $region6: #{basic_block_forward.4} parent=0 // loop_footer
    %s16 = sadd.s32 1, %s12
  $region7: #{basic_block_forward.4} parent=0 // loop_footer_branch
    %11 = sbr.rel target = $region3
  $region8: #{basic_block_forward.4} parent=0 // loop_exit
    _

// kernel: basic_block_forward.3
$region0: #{basic_block_forward.3}
  #allocation0 [shape = 'u32[]', space=smem, size = 0x4, offset = 0x4, fixed_abs, tag = 'smem constant byte address 0x4 - core index']
  #allocation1 [shape = 'u32[144,128]{1,0:T(1,128)}', space=vmem, size = 0x12000, scoped, tag = 'internal scratch']
  #allocation2 [shape = 'f32[2,9,8,384]{3,2,1,0:T(8,128)}', space=vmem, size = 0x36000, scoped, tag = 'scratch operand']
  %s0 = inlined_call_operand.vmem [shape: bf16[4,2,9,9,128], index: 0, kind: input, shape index: {}]
  %s1 = inlined_call_operand.vmem [shape: bf16[3,384,128], index: 1, kind: input, shape index: {}]
  %s2 = inlined_call_operand.vmem [shape: bf16[128,128], index: 2, kind: input, shape index: {}]
  %s3 = inlined_call_operand.vmem [shape: bf16[2,8,8,128], index: 3, kind: output, shape index: {0}]
  %s4 = inlined_call_operand.vmem [shape: f32[2,2,128], index: 4, kind: output, shape index: {1}]
  %s5 = inlined_call_operand.vmem [shape: bf16[2,8,8,128], index: 5, kind: output, shape index: {2}]
  %s6 = inlined_call_operand.vmem [shape: f32[2,2,128], index: 6, kind: output, shape index: {3}]
  %7 = xla_tuple %s3, %s4, %s5, %s6
  %s8 = sld [smem:[#allocation0]]
  $region110: #{basic_block_forward.3} parent=0
    _
  %s10 = ssub.s32 1, %s8
  %s11 = scalar_select 0, %s10, %s8
  $region1: #{basic_block_forward.3} parent=0
    #allocation3 [shape = 'u8[294912]{0}', space=vmem, size = 0x48000, scoped, tag = 'input window, operand 0']
    loop: start=0, step=1, limit=4
    $region2: #{basic_block_forward.3} parent=1 // loop_pre_header
      _
    $region3: #{basic_block_forward.3} parent=1 // loop_header
      %s13 = sphi 0, %s17
      %p14 = scmp.ge.s32.totalorder %s13, 4
      %s23 = sphi 0, %s25
      %s26 = sphi 0, %s23
      %s27 = sphi 0, %s26
      %s43 = sphi 0, %s27
      %s47 = sphi 0, %s47
      %s49 = sphi 0, %s47
      %s50 = sphi 0, %s49
      %s64 = sphi 0, %s50
      %s68 = sphi 0, %s68
      %s70 = sphi 0, %s68
      %s71 = sphi 0, %s70
      %s85 = sphi 0, %s71
      %s91 = sphi 0, %s93
      %s94 = sphi 0, %s91
      %s95 = sphi 0, %s94
      %s111 = sphi 0, %s95
      %s117 = sphi 0, %s119
      %s120 = sphi 0, %s117
      %s121 = sphi 0, %s120
      %s137 = sphi 0, %s121
      %s143 = sphi 0, %s145
      %s146 = sphi 0, %s143
      %s147 = sphi 0, %s146
      %s163 = sphi 0, %s147
      %s169 = sphi 0, %s171
      %s172 = sphi 0, %s169
      %s173 = sphi 0, %s172
      %s189 = sphi 0, %s173
    $region4: #{basic_block_forward.3} parent=1 // loop_header_branch
      %16 = sbr.rel (%p14) target = $region8
    $region5: #{basic_block_forward.3} parent=1 // loop_body
      %s18 = ssub.s32 %s13, 1
      %s19 = ssub.s32 %s13, 2
      %s20 = sadd.s32 %s13, 1
      %s21 = ssub.s32 %s13, %s20
      %p22 = scmp.eq.s32.totalorder %s21, 0
      %s24 = sadd.s32 %s23, 1
      %s25 = scalar_select %p22, %s23, %s24
      %p28 = pneg %p22
      %p29 = scmp.eq.s32.totalorder %s13, 1
      %p30 = por %p28, %p29
      %p31 = scmp.ne.s32.totalorder %s23, %s26
      %p32 = scmp.eq.s32.totalorder %s13, 0
      %p33 = por %p31, %p32
      %p34 = scmp.ne.s32.totalorder %s23, %s26
      %p35 = scmp.eq.s32.totalorder %s18, 1
      %p36 = por %p34, %p35
      %p37 = scmp.ne.s32.totalorder %s26, %s27
      %p38 = scmp.eq.s32.totalorder %s18, 0
      %p39 = por %p37, %p38
      %p40 = scmp.ne.s32.totalorder %s26, %s27
      %p41 = scmp.eq.s32.totalorder %s19, 1
      %p42 = por %p40, %p41
      %p44 = scmp.ne.s32.totalorder %s27, %s43
      %p45 = scmp.eq.s32.totalorder %s19, 0
      %p46 = por %p44, %p45
      %s48 = sadd.s32 %s47, 1
      %p51 = scmp.eq.s32.totalorder %s13, 1
      %p52 = scmp.ne.s32.totalorder %s47, %s49
      %p53 = scmp.eq.s32.totalorder %s13, 0
      %p54 = por %p52, %p53
      %p55 = scmp.ne.s32.totalorder %s47, %s49
      %p56 = scmp.eq.s32.totalorder %s18, 1
      %p57 = por %p55, %p56
      %p58 = scmp.ne.s32.totalorder %s49, %s50
      %p59 = scmp.eq.s32.totalorder %s18, 0
      %p60 = por %p58, %p59
      %p61 = scmp.ne.s32.totalorder %s49, %s50
      %p62 = scmp.eq.s32.totalorder %s19, 1
      %p63 = por %p61, %p62
      %p65 = scmp.ne.s32.totalorder %s50, %s64
      %p66 = scmp.eq.s32.totalorder %s19, 0
      %p67 = por %p65, %p66
      %s69 = sadd.s32 %s68, 1
      %p72 = scmp.eq.s32.totalorder %s13, 1
      %p73 = scmp.ne.s32.totalorder %s68, %s70
      %p74 = scmp.eq.s32.totalorder %s13, 0
      %p75 = por %p73, %p74
      %p76 = scmp.ne.s32.totalorder %s68, %s70
      %p77 = scmp.eq.s32.totalorder %s18, 1
      %p78 = por %p76, %p77
      %p79 = scmp.ne.s32.totalorder %s70, %s71
      %p80 = scmp.eq.s32.totalorder %s18, 0
      %p81 = por %p79, %p80
      %p82 = scmp.ne.s32.totalorder %s70, %s71
      %p83 = scmp.eq.s32.totalorder %s19, 1
      %p84 = por %p82, %p83
      %p86 = scmp.ne.s32.totalorder %s71, %s85
      %p87 = scmp.eq.s32.totalorder %s19, 0
      %p88 = por %p86, %p87
      %s89 = ssub.s32 %s13, %s20
      %p90 = scmp.eq.s32.totalorder %s89, 0
      %s92 = sadd.s32 %s91, 1
      %s93 = scalar_select %p90, %s91, %s92
      %p96 = pneg %p90
      %p97 = scmp.eq.s32.totalorder %s13, 1
      %p98 = por %p96, %p97
      %p99 = scmp.ne.s32.totalorder %s91, %s94
      %p100 = scmp.eq.s32.totalorder %s13, 0
      %p101 = por %p99, %p100
      %p102 = scmp.ne.s32.totalorder %s91, %s94
      %p103 = scmp.eq.s32.totalorder %s18, 1
      %p104 = por %p102, %p103
      %p105 = scmp.ne.s32.totalorder %s94, %s95
      %p106 = scmp.eq.s32.totalorder %s18, 0
      %p107 = por %p105, %p106
      %p108 = scmp.ne.s32.totalorder %s94, %s95
      %p109 = scmp.eq.s32.totalorder %s19, 1
      %p110 = por %p108, %p109
      %p112 = scmp.ne.s32.totalorder %s95, %s111
      %p113 = scmp.eq.s32.totalorder %s19, 0
      %p114 = por %p112, %p113
      %s115 = ssub.s32 %s13, %s20
      %p116 = scmp.eq.s32.totalorder %s115, 0
      %s118 = sadd.s32 %s117, 1
      %s119 = scalar_select %p116, %s117, %s118
      %p122 = pneg %p116
      %p123 = scmp.eq.s32.totalorder %s13, 1
      %p124 = por %p122, %p123
      %p125 = scmp.ne.s32.totalorder %s117, %s120
      %p126 = scmp.eq.s32.totalorder %s13, 0
      %p127 = por %p125, %p126
      %p128 = scmp.ne.s32.totalorder %s117, %s120
      %p129 = scmp.eq.s32.totalorder %s18, 1
      %p130 = por %p128, %p129
      %p131 = scmp.ne.s32.totalorder %s120, %s121
      %p132 = scmp.eq.s32.totalorder %s18, 0
      %p133 = por %p131, %p132
      %p134 = scmp.ne.s32.totalorder %s120, %s121
      %p135 = scmp.eq.s32.totalorder %s19, 1
      %p136 = por %p134, %p135
      %p138 = scmp.ne.s32.totalorder %s121, %s137
      %p139 = scmp.eq.s32.totalorder %s19, 0
      %p140 = por %p138, %p139
      %s141 = ssub.s32 %s13, %s20
      %p142 = scmp.eq.s32.totalorder %s141, 0
      %s144 = sadd.s32 %s143, 1
      %s145 = scalar_select %p142, %s143, %s144
      %p148 = pneg %p142
      %p149 = scmp.eq.s32.totalorder %s13, 1
      %p150 = por %p148, %p149
      %p151 = scmp.ne.s32.totalorder %s143, %s146
      %p152 = scmp.eq.s32.totalorder %s13, 0
      %p153 = por %p151, %p152
      %p154 = scmp.ne.s32.totalorder %s143, %s146
      %p155 = scmp.eq.s32.totalorder %s18, 1
      %p156 = por %p154, %p155
      %p157 = scmp.ne.s32.totalorder %s146, %s147
      %p158 = scmp.eq.s32.totalorder %s18, 0
      %p159 = por %p157, %p158
      %p160 = scmp.ne.s32.totalorder %s146, %s147
      %p161 = scmp.eq.s32.totalorder %s19, 1
      %p162 = por %p160, %p161
      %p164 = scmp.ne.s32.totalorder %s147, %s163
      %p165 = scmp.eq.s32.totalorder %s19, 0
      %p166 = por %p164, %p165
      %s167 = ssub.s32 %s13, %s20
      %p168 = scmp.eq.s32.totalorder %s167, 0
      %s170 = sadd.s32 %s169, 1
      %s171 = scalar_select %p168, %s169, %s170
      %p174 = pneg %p168
      %p175 = scmp.eq.s32.totalorder %s13, 1
      %p176 = por %p174, %p175
      %p177 = scmp.ne.s32.totalorder %s169, %s172
      %p178 = scmp.eq.s32.totalorder %s13, 0
      %p179 = por %p177, %p178
      %p180 = scmp.ne.s32.totalorder %s169, %s172
      %p181 = scmp.eq.s32.totalorder %s18, 1
      %p182 = por %p180, %p181
      %p183 = scmp.ne.s32.totalorder %s172, %s173
      %p184 = scmp.eq.s32.totalorder %s18, 0
      %p185 = por %p183, %p184
      %p186 = scmp.ne.s32.totalorder %s172, %s173
      %p187 = scmp.eq.s32.totalorder %s19, 1
      %p188 = por %p186, %p187
      %p190 = scmp.ne.s32.totalorder %s173, %s189
      %p191 = scmp.eq.s32.totalorder %s19, 0
      %p192 = por %p190, %p191
      %p193 = scmp.le.s32.totalorder 1, %s13
      %p194 = scmp.lt.s32.totalorder %s13, 3
      %p195 = pnand %p193, %p194
      %p196 = pneg %p195
      // Predicated region
      $region9: #{basic_block_forward.3} parent=5 // pred_check
        _
      $region10: #{basic_block_forward.3} parent=5 // pred_check_branch
        %198 = sbr.rel (%p195) target = $region12
      $region11: #{basic_block_forward.3} parent=5 // pred_region
        %s199 = ssub.s32 %s13, 1
        // Predicated region
        $region13: #{basic_block_forward.3} parent=11 // pred_check
          %p200 = pneg %p60
        $region14: #{basic_block_forward.3} parent=11 // pred_check_branch
          %202 = sbr.rel (%p200) target = $region16
        $region15: #{basic_block_forward.3} parent=11 // pred_region
          _
        $region16: #{basic_block_forward.3} parent=11 // pred_fallthru
          _
        // Predicated region
        $region17: #{basic_block_forward.3} parent=11 // pred_check
          %p203 = pneg %p81
        $region18: #{basic_block_forward.3} parent=11 // pred_check_branch
          %205 = sbr.rel (%p203) target = $region20
        $region19: #{basic_block_forward.3} parent=11 // pred_region
          _
        $region20: #{basic_block_forward.3} parent=11 // pred_fallthru
          _
      $region12: #{basic_block_forward.3} parent=5 // pred_fallthru
        _
      %p206 = scmp.lt.s32.totalorder %s13, 2
      // Predicated region
      $region21: #{basic_block_forward.3} parent=5 // pred_check
        %p207 = pneg %p206
      $region22: #{basic_block_forward.3} parent=5 // pred_check_branch
        %209 = sbr.rel (%p207) target = $region24
      $region23: #{basic_block_forward.3} parent=5 // pred_region
        // Predicated region
        $region25: #{basic_block_forward.3} parent=23 // pred_check
          %p210 = pneg %p33
        $region26: #{basic_block_forward.3} parent=23 // pred_check_branch
          %212 = sbr.rel (%p210) target = $region28
        $region27: #{basic_block_forward.3} parent=23 // pred_region
          %s213 = sand.u32 %s23, 1
          %s214 = sand.u32 %s23, 1
          %s215 = smul.addr %s214, 288
          %s216 = scalar_lea.vmem [#allocation3], %s215
          %s217 = smul.addr %s13, 18
          %s218 = smul.addr %s217, 4
          %s219 = scalar_lea.vmem %s0, %s218
          // Predicated region
          $region29: #{basic_block_forward.3} parent=27 // pred_check
            _
          $region30: #{basic_block_forward.3} parent=27 // pred_check_branch
            %221 = sbr.rel (0) target = $region32
          $region31: #{basic_block_forward.3} parent=27 // pred_region
            // Predicated region
            $region33: #{basic_block_forward.3} parent=31 // pred_check
              _
            $region34: #{basic_block_forward.3} parent=31 // pred_check_branch
              %223 = sbr.rel target = $region36
            $region35: #{basic_block_forward.3} parent=31 // pred_region
              // Predicated region
              $region48: #{basic_block_forward.3} parent=35 // pred_check
                _
              $region49: #{basic_block_forward.3} parent=35 // pred_check_branch
                %380 = sbr.rel (0) target = $region51
              $region50: #{basic_block_forward.3} parent=35 // pred_region
                loop: start=0, step=1, limit=1
                $region52: #{basic_block_forward.3} parent=50 // loop_pre_header
                  _
                $region53: #{basic_block_forward.3} parent=50 // loop_header
                  %s382 = sphi 0, %s386
                  %p383 = scmp.ge.s32.totalorder %s382, 1
                  %s387 = sphi %s219, %s219
                  %s388 = sphi %s216, %s216
                $region54: #{basic_block_forward.3} parent=50 // loop_header_branch
                  %385 = sbr.rel (%p383) target = $region58
                $region55: #{basic_block_forward.3} parent=50 // loop_body
                  _
                $region56: #{basic_block_forward.3} parent=50 // loop_footer
                  %s386 = sadd.s32 1, %s382
                $region57: #{basic_block_forward.3} parent=50 // loop_footer_branch
                  %381 = sbr.rel target = $region53
                $region58: #{basic_block_forward.3} parent=50 // loop_exit
                  _
                loop: start=0, step=1, limit=1
                $region59: #{basic_block_forward.3} parent=50 // loop_pre_header
                  _
                $region60: #{basic_block_forward.3} parent=50 // loop_header
                  %s391 = sphi 0, %s395
                  %p392 = scmp.ge.s32.totalorder %s391, 1
                  %s396 = sphi %s219, %s219
                  %s397 = sphi %s216, %s216
                $region61: #{basic_block_forward.3} parent=50 // loop_header_branch
                  %394 = sbr.rel (%p392) target = $region65
                $region62: #{basic_block_forward.3} parent=50 // loop_body
                  %v398 = vld [vmem:[%s396] sm:$0xf]
                  %399 = vst [vmem:[%s397] sm:$0xf] %v398
                  %v400 = vld [vmem:[%s396 + $0x4] sm:$0xf]
                  %401 = vst [vmem:[%s397 + $0x4] sm:$0xf] %v400
                  %v402 = vld [vmem:[%s396 + $0x8] sm:$0xf]
                  %403 = vst [vmem:[%s397 + $0x8] sm:$0xf] %v402
                  %v404 = vld [vmem:[%s396 + $0xc] sm:$0xf]
                  %405 = vst [vmem:[%s397 + $0xc] sm:$0xf] %v404
                  %v406 = vld [vmem:[%s396 + $0x10] sm:$0xf]
                  %407 = vst [vmem:[%s397 + $0x10] sm:$0xf] %v406
                  %v408 = vld [vmem:[%s396 + $0x14] sm:$0xf]
                  %409 = vst [vmem:[%s397 + $0x14] sm:$0xf] %v408
                  %v410 = vld [vmem:[%s396 + $0x18] sm:$0xf]
                  %411 = vst [vmem:[%s397 + $0x18] sm:$0xf] %v410
                  %v412 = vld [vmem:[%s396 + $0x1c] sm:$0xf]
                  %413 = vst [vmem:[%s397 + $0x1c] sm:$0xf] %v412
                  %v414 = vld [vmem:[%s396 + $0x20] sm:$0xf]
                  %415 = vst [vmem:[%s397 + $0x20] sm:$0xf] %v414
                  %v416 = vld [vmem:[%s396 + $0x24] sm:$0xf]
                  %417 = vst [vmem:[%s397 + $0x24] sm:$0xf] %v416
                  %v418 = vld [vmem:[%s396 + $0x28] sm:$0xf]
                  %419 = vst [vmem:[%s397 + $0x28] sm:$0xf] %v418
                  %v420 = vld [vmem:[%s396 + $0x2c] sm:$0xf]
                  %421 = vst [vmem:[%s397 + $0x2c] sm:$0xf] %v420
                  %v422 = vld [vmem:[%s396 + $0x30] sm:$0xf]
                  %423 = vst [vmem:[%s397 + $0x30] sm:$0xf] %v422
                  %v424 = vld [vmem:[%s396 + $0x34] sm:$0xf]
                  %425 = vst [vmem:[%s397 + $0x34] sm:$0xf] %v424
                  %v426 = vld [vmem:[%s396 + $0x38] sm:$0xf]
                  %427 = vst [vmem:[%s397 + $0x38] sm:$0xf] %v426
                  %v428 = vld [vmem:[%s396 + $0x3c] sm:$0xf]
                  %429 = vst [vmem:[%s397 + $0x3c] sm:$0xf] %v428
                  %v430 = vld [vmem:[%s396 + $0x40] sm:$0xf]
                  %431 = vst [vmem:[%s397 + $0x40] sm:$0xf] %v430
                  %v432 = vld [vmem:[%s396 + $0x44] sm:$0xf]
                  %433 = vst [vmem:[%s397 + $0x44] sm:$0xf] %v432
                  %v434 = vld [vmem:[%s396 + $0x90] sm:$0xf]
                  %435 = vst [vmem:[%s397 + $0x48] sm:$0xf] %v434
                  %v436 = vld [vmem:[%s396 + $0x94] sm:$0xf]
                  %437 = vst [vmem:[%s397 + $0x4c] sm:$0xf] %v436
                  %v438 = vld [vmem:[%s396 + $0x98] sm:$0xf]
                  %439 = vst [vmem:[%s397 + $0x50] sm:$0xf] %v438
                  %v440 = vld [vmem:[%s396 + $0x9c] sm:$0xf]
                  %441 = vst [vmem:[%s397 + $0x54] sm:$0xf] %v440
                  %v442 = vld [vmem:[%s396 + $0xa0] sm:$0xf]
                  %443 = vst [vmem:[%s397 + $0x58] sm:$0xf] %v442
                  %v444 = vld [vmem:[%s396 + $0xa4] sm:$0xf]
                  %445 = vst [vmem:[%s397 + $0x5c] sm:$0xf] %v444
                  %v446 = vld [vmem:[%s396 + $0xa8] sm:$0xf]
                  %447 = vst [vmem:[%s397 + $0x60] sm:$0xf] %v446
                  %v448 = vld [vmem:[%s396 + $0xac] sm:$0xf]
                  %449 = vst [vmem:[%s397 + $0x64] sm:$0xf] %v448
                  %v450 = vld [vmem:[%s396 + $0xb0] sm:$0xf]
                  %451 = vst [vmem:[%s397 + $0x68] sm:$0xf] %v450
                  %v452 = vld [vmem:[%s396 + $0xb4] sm:$0xf]
                  %453 = vst [vmem:[%s397 + $0x6c] sm:$0xf] %v452
                  %v454 = vld [vmem:[%s396 + $0xb8] sm:$0xf]
                  %455 = vst [vmem:[%s397 + $0x70] sm:$0xf] %v454
                  %v456 = vld [vmem:[%s396 + $0xbc] sm:$0xf]
                  %457 = vst [vmem:[%s397 + $0x74] sm:$0xf] %v456
                  %v458 = vld [vmem:[%s396 + $0xc0] sm:$0xf]
                  %459 = vst [vmem:[%s397 + $0x78] sm:$0xf] %v458
                  %v460 = vld [vmem:[%s396 + $0xc4] sm:$0xf]
                  %461 = vst [vmem:[%s397 + $0x7c] sm:$0xf] %v460
                  %v462 = vld [vmem:[%s396 + $0xc8] sm:$0xf]
                  %463 = vst [vmem:[%s397 + $0x80] sm:$0xf] %v462
                  %v464 = vld [vmem:[%s396 + $0xcc] sm:$0xf]
                  %465 = vst [vmem:[%s397 + $0x84] sm:$0xf] %v464
                  %v466 = vld [vmem:[%s396 + $0xd0] sm:$0xf]
                  %467 = vst [vmem:[%s397 + $0x88] sm:$0xf] %v466
                  %v468 = vld [vmem:[%s396 + $0xd4] sm:$0xf]
                  %469 = vst [vmem:[%s397 + $0x8c] sm:$0xf] %v468
                  %v470 = vld [vmem:[%s396 + $0x120] sm:$0xf]
                  %471 = vst [vmem:[%s397 + $0x90] sm:$0xf] %v470
                  %v472 = vld [vmem:[%s396 + $0x124] sm:$0xf]
                  %473 = vst [vmem:[%s397 + $0x94] sm:$0xf] %v472
                  %v474 = vld [vmem:[%s396 + $0x128] sm:$0xf]
                  %475 = vst [vmem:[%s397 + $0x98] sm:$0xf] %v474
                  %v476 = vld [vmem:[%s396 + $0x12c] sm:$0xf]
                  %477 = vst [vmem:[%s397 + $0x9c] sm:$0xf] %v476
                  %v478 = vld [vmem:[%s396 + $0x130] sm:$0xf]
                  %479 = vst [vmem:[%s397 + $0xa0] sm:$0xf] %v478
                  %v480 = vld [vmem:[%s396 + $0x134] sm:$0xf]
                  %481 = vst [vmem:[%s397 + $0xa4] sm:$0xf] %v480
                  %v482 = vld [vmem:[%s396 + $0x138] sm:$0xf]
                  %483 = vst [vmem:[%s397 + $0xa8] sm:$0xf] %v482
                  %v484 = vld [vmem:[%s396 + $0x13c] sm:$0xf]
                  %485 = vst [vmem:[%s397 + $0xac] sm:$0xf] %v484
                  %v486 = vld [vmem:[%s396 + $0x140] sm:$0xf]
                  %487 = vst [vmem:[%s397 + $0xb0] sm:$0xf] %v486
                  %v488 = vld [vmem:[%s396 + $0x144] sm:$0xf]
                  %489 = vst [vmem:[%s397 + $0xb4] sm:$0xf] %v488
                  %v490 = vld [vmem:[%s396 + $0x148] sm:$0xf]
                  %491 = vst [vmem:[%s397 + $0xb8] sm:$0xf] %v490
                  %v492 = vld [vmem:[%s396 + $0x14c] sm:$0xf]
                  %493 = vst [vmem:[%s397 + $0xbc] sm:$0xf] %v492
                  %v494 = vld [vmem:[%s396 + $0x150] sm:$0xf]
                  %495 = vst [vmem:[%s397 + $0xc0] sm:$0xf] %v494
                  %v496 = vld [vmem:[%s396 + $0x154] sm:$0xf]
                  %497 = vst [vmem:[%s397 + $0xc4] sm:$0xf] %v496
                  %v498 = vld [vmem:[%s396 + $0x158] sm:$0xf]
                  %499 = vst [vmem:[%s397 + $0xc8] sm:$0xf] %v498
                  %v500 = vld [vmem:[%s396 + $0x15c] sm:$0xf]
                  %501 = vst [vmem:[%s397 + $0xcc] sm:$0xf] %v500
                  %v502 = vld [vmem:[%s396 + $0x160] sm:$0xf]
                  %503 = vst [vmem:[%s397 + $0xd0] sm:$0xf] %v502
                  %v504 = vld [vmem:[%s396 + $0x164] sm:$0xf]
                  %505 = vst [vmem:[%s397 + $0xd4] sm:$0xf] %v504
                  %v506 = vld [vmem:[%s396 + $0x1b0] sm:$0xf]
                  %507 = vst [vmem:[%s397 + $0xd8] sm:$0xf] %v506
                  %v508 = vld [vmem:[%s396 + $0x1b4] sm:$0xf]
                  %509 = vst [vmem:[%s397 + $0xdc] sm:$0xf] %v508
                  %v510 = vld [vmem:[%s396 + $0x1b8] sm:$0xf]
                  %511 = vst [vmem:[%s397 + $0xe0] sm:$0xf] %v510
                  %v512 = vld [vmem:[%s396 + $0x1bc] sm:$0xf]
                  %513 = vst [vmem:[%s397 + $0xe4] sm:$0xf] %v512
                  %v514 = vld [vmem:[%s396 + $0x1c0] sm:$0xf]
                  %515 = vst [vmem:[%s397 + $0xe8] sm:$0xf] %v514
                  %v516 = vld [vmem:[%s396 + $0x1c4] sm:$0xf]
                  %517 = vst [vmem:[%s397 + $0xec] sm:$0xf] %v516
                  %v518 = vld [vmem:[%s396 + $0x1c8] sm:$0xf]
                  %519 = vst [vmem:[%s397 + $0xf0] sm:$0xf] %v518
                  %v520 = vld [vmem:[%s396 + $0x1cc] sm:$0xf]
                  %521 = vst [vmem:[%s397 + $0xf4] sm:$0xf] %v520
                  %v522 = vld [vmem:[%s396 + $0x1d0] sm:$0xf]
                  %523 = vst [vmem:[%s397 + $0xf8] sm:$0xf] %v522
                  %v524 = vld [vmem:[%s396 + $0x1d4] sm:$0xf]
                  %525 = vst [vmem:[%s397 + $0xfc] sm:$0xf] %v524
                  %v526 = vld [vmem:[%s396 + $0x1d8] sm:$0xf]
                  %527 = vst [vmem:[%s397 + $0x100] sm:$0xf] %v526
                  %v528 = vld [vmem:[%s396 + $0x1dc] sm:$0xf]
                  %529 = vst [vmem:[%s397 + $0x104] sm:$0xf] %v528
                  %v530 = vld [vmem:[%s396 + $0x1e0] sm:$0xf]
                  %531 = vst [vmem:[%s397 + $0x108] sm:$0xf] %v530
                  %v532 = vld [vmem:[%s396 + $0x1e4] sm:$0xf]
                  %533 = vst [vmem:[%s397 + $0x10c] sm:$0xf] %v532
                  %v534 = vld [vmem:[%s396 + $0x1e8] sm:$0xf]
                  %535 = vst [vmem:[%s397 + $0x110] sm:$0xf] %v534
                  %v536 = vld [vmem:[%s396 + $0x1ec] sm:$0xf]
                  %537 = vst [vmem:[%s397 + $0x114] sm:$0xf] %v536
                  %v538 = vld [vmem:[%s396 + $0x1f0] sm:$0xf]
                  %539 = vst [vmem:[%s397 + $0x118] sm:$0xf] %v538
                  %v540 = vld [vmem:[%s396 + $0x1f4] sm:$0xf]
                  %541 = vst [vmem:[%s397 + $0x11c] sm:$0xf] %v540
                $region63: #{basic_block_forward.3} parent=50 // loop_footer
                  %s395 = sadd.s32 1, %s391
                $region64: #{basic_block_forward.3} parent=50 // loop_footer_branch
                  %390 = sbr.rel target = $region60
                $region65: #{basic_block_forward.3} parent=50 // loop_exit
                  _
              $region51: #{basic_block_forward.3} parent=35 // pred_fallthru
                _
            $region36: #{basic_block_forward.3} parent=31 // pred_fallthru
              _
            // Predicated region
            $region37: #{basic_block_forward.3} parent=31 // pred_check
              _
            $region38: #{basic_block_forward.3} parent=31 // pred_check_branch
              %225 = sbr.rel (0) target = $region40
            $region39: #{basic_block_forward.3} parent=31 // pred_region
              loop: start=0, step=1, limit=1
              $region41: #{basic_block_forward.3} parent=39 // loop_pre_header
                _
              $region42: #{basic_block_forward.3} parent=39 // loop_header
                %s228 = sphi 0, %s232
                %p229 = scmp.ge.s32.totalorder %s228, 1
                %s233 = sphi %s219, %s219
                %s234 = sphi %s216, %s216
              $region43: #{basic_block_forward.3} parent=39 // loop_header_branch
                %231 = sbr.rel (%p229) target = $region47
              $region44: #{basic_block_forward.3} parent=39 // loop_body
                %v235 = vld [vmem:[%s233] sm:$0xf]
                %236 = vst [vmem:[%s234] sm:$0xf] %v235
                %v237 = vld [vmem:[%s233 + $0x4] sm:$0xf]
                %238 = vst [vmem:[%s234 + $0x4] sm:$0xf] %v237
                %v239 = vld [vmem:[%s233 + $0x8] sm:$0xf]
                %240 = vst [vmem:[%s234 + $0x8] sm:$0xf] %v239
                %v241 = vld [vmem:[%s233 + $0xc] sm:$0xf]
                %242 = vst [vmem:[%s234 + $0xc] sm:$0xf] %v241
                %v243 = vld [vmem:[%s233 + $0x10] sm:$0xf]
                %244 = vst [vmem:[%s234 + $0x10] sm:$0xf] %v243
                %v245 = vld [vmem:[%s233 + $0x14] sm:$0xf]
                %246 = vst [vmem:[%s234 + $0x14] sm:$0xf] %v245
                %v247 = vld [vmem:[%s233 + $0x18] sm:$0xf]
                %248 = vst [vmem:[%s234 + $0x18] sm:$0xf] %v247
                %v249 = vld [vmem:[%s233 + $0x1c] sm:$0xf]
                %250 = vst [vmem:[%s234 + $0x1c] sm:$0xf] %v249
                %v251 = vld [vmem:[%s233 + $0x20] sm:$0xf]
                %252 = vst [vmem:[%s234 + $0x20] sm:$0xf] %v251
                %v253 = vld [vmem:[%s233 + $0x24] sm:$0xf]
                %254 = vst [vmem:[%s234 + $0x24] sm:$0xf] %v253
                %v255 = vld [vmem:[%s233 + $0x28] sm:$0xf]
                %256 = vst [vmem:[%s234 + $0x28] sm:$0xf] %v255
                %v257 = vld [vmem:[%s233 + $0x2c] sm:$0xf]
                %258 = vst [vmem:[%s234 + $0x2c] sm:$0xf] %v257
                %v259 = vld [vmem:[%s233 + $0x30] sm:$0xf]
                %260 = vst [vmem:[%s234 + $0x30] sm:$0xf] %v259
                %v261 = vld [vmem:[%s233 + $0x34] sm:$0xf]
                %262 = vst [vmem:[%s234 + $0x34] sm:$0xf] %v261
                %v263 = vld [vmem:[%s233 + $0x38] sm:$0xf]
                %264 = vst [vmem:[%s234 + $0x38] sm:$0xf] %v263
                %v265 = vld [vmem:[%s233 + $0x3c] sm:$0xf]
                %266 = vst [vmem:[%s234 + $0x3c] sm:$0xf] %v265
                %v267 = vld [vmem:[%s233 + $0x40] sm:$0xf]
                %268 = vst [vmem:[%s234 + $0x40] sm:$0xf] %v267
                %v269 = vld [vmem:[%s233 + $0x44] sm:$0xf]
                %270 = vst [vmem:[%s234 + $0x44] sm:$0xf] %v269
                %v271 = vld [vmem:[%s233 + $0x90] sm:$0xf]
                %272 = vst [vmem:[%s234 + $0x48] sm:$0xf] %v271
                %v273 = vld [vmem:[%s233 + $0x94] sm:$0xf]
                %274 = vst [vmem:[%s234 + $0x4c] sm:$0xf] %v273
                %v275 = vld [vmem:[%s233 + $0x98] sm:$0xf]
                %276 = vst [vmem:[%s234 + $0x50] sm:$0xf] %v275
                %v277 = vld [vmem:[%s233 + $0x9c] sm:$0xf]
                %278 = vst [vmem:[%s234 + $0x54] sm:$0xf] %v277
                %v279 = vld [vmem:[%s233 + $0xa0] sm:$0xf]
                %280 = vst [vmem:[%s234 + $0x58] sm:$0xf] %v279
                %v281 = vld [vmem:[%s233 + $0xa4] sm:$0xf]
                %282 = vst [vmem:[%s234 + $0x5c] sm:$0xf] %v281
                %v283 = vld [vmem:[%s233 + $0xa8] sm:$0xf]
                %284 = vst [vmem:[%s234 + $0x60] sm:$0xf] %v283
                %v285 = vld [vmem:[%s233 + $0xac] sm:$0xf]
                %286 = vst [vmem:[%s234 + $0x64] sm:$0xf] %v285
                %v287 = vld [vmem:[%s233 + $0xb0] sm:$0xf]
                %288 = vst [vmem:[%s234 + $0x68] sm:$0xf] %v287
                %v289 = vld [vmem:[%s233 + $0xb4] sm:$0xf]
                %290 = vst [vmem:[%s234 + $0x6c] sm:$0xf] %v289
                %v291 = vld [vmem:[%s233 + $0xb8] sm:$0xf]
                %292 = vst [vmem:[%s234 + $0x70] sm:$0xf] %v291
                %v293 = vld [vmem:[%s233 + $0xbc] sm:$0xf]
                %294 = vst [vmem:[%s234 + $0x74] sm:$0xf] %v293
                %v295 = vld [vmem:[%s233 + $0xc0] sm:$0xf]
                %296 = vst [vmem:[%s234 + $0x78] sm:$0xf] %v295
                %v297 = vld [vmem:[%s233 + $0xc4] sm:$0xf]
                %298 = vst [vmem:[%s234 + $0x7c] sm:$0xf] %v297
                %v299 = vld [vmem:[%s233 + $0xc8] sm:$0xf]
                %300 = vst [vmem:[%s234 + $0x80] sm:$0xf] %v299
                %v301 = vld [vmem:[%s233 + $0xcc] sm:$0xf]
                %302 = vst [vmem:[%s234 + $0x84] sm:$0xf] %v301
                %v303 = vld [vmem:[%s233 + $0xd0] sm:$0xf]
                %304 = vst [vmem:[%s234 + $0x88] sm:$0xf] %v303
                %v305 = vld [vmem:[%s233 + $0xd4] sm:$0xf]
                %306 = vst [vmem:[%s234 + $0x8c] sm:$0xf] %v305
                %v307 = vld [vmem:[%s233 + $0x120] sm:$0xf]
                %308 = vst [vmem:[%s234 + $0x90] sm:$0xf] %v307
                %v309 = vld [vmem:[%s233 + $0x124] sm:$0xf]
                %310 = vst [vmem:[%s234 + $0x94] sm:$0xf] %v309
                %v311 = vld [vmem:[%s233 + $0x128] sm:$0xf]
                %312 = vst [vmem:[%s234 + $0x98] sm:$0xf] %v311
                %v313 = vld [vmem:[%s233 + $0x12c] sm:$0xf]
                %314 = vst [vmem:[%s234 + $0x9c] sm:$0xf] %v313
                %v315 = vld [vmem:[%s233 + $0x130] sm:$0xf]
                %316 = vst [vmem:[%s234 + $0xa0] sm:$0xf] %v315
                %v317 = vld [vmem:[%s233 + $0x134] sm:$0xf]
                %318 = vst [vmem:[%s234 + $0xa4] sm:$0xf] %v317
                %v319 = vld [vmem:[%s233 + $0x138] sm:$0xf]
                %320 = vst [vmem:[%s234 + $0xa8] sm:$0xf] %v319
                %v321 = vld [vmem:[%s233 + $0x13c] sm:$0xf]
                %322 = vst [vmem:[%s234 + $0xac] sm:$0xf] %v321
                %v323 = vld [vmem:[%s233 + $0x140] sm:$0xf]
                %324 = vst [vmem:[%s234 + $0xb0] sm:$0xf] %v323
                %v325 = vld [vmem:[%s233 + $0x144] sm:$0xf]
                %326 = vst [vmem:[%s234 + $0xb4] sm:$0xf] %v325
                %v327 = vld [vmem:[%s233 + $0x148] sm:$0xf]
                %328 = vst [vmem:[%s234 + $0xb8] sm:$0xf] %v327
                %v329 = vld [vmem:[%s233 + $0x14c] sm:$0xf]
                %330 = vst [vmem:[%s234 + $0xbc] sm:$0xf] %v329
                %v331 = vld [vmem:[%s233 + $0x150] sm:$0xf]
                %332 = vst [vmem:[%s234 + $0xc0] sm:$0xf] %v331
                %v333 = vld [vmem:[%s233 + $0x154] sm:$0xf]
                %334 = vst [vmem:[%s234 + $0xc4] sm:$0xf] %v333
                %v335 = vld [vmem:[%s233 + $0x158] sm:$0xf]
                %336 = vst [vmem:[%s234 + $0xc8] sm:$0xf] %v335
                %v337 = vld [vmem:[%s233 + $0x15c] sm:$0xf]
                %338 = vst [vmem:[%s234 + $0xcc] sm:$0xf] %v337
                %v339 = vld [vmem:[%s233 + $0x160] sm:$0xf]
                %340 = vst [vmem:[%s234 + $0xd0] sm:$0xf] %v339
                %v341 = vld [vmem:[%s233 + $0x164] sm:$0xf]
                %342 = vst [vmem:[%s234 + $0xd4] sm:$0xf] %v341
                %v343 = vld [vmem:[%s233 + $0x1b0] sm:$0xf]
                %344 = vst [vmem:[%s234 + $0xd8] sm:$0xf] %v343
                %v345 = vld [vmem:[%s233 + $0x1b4] sm:$0xf]
                %346 = vst [vmem:[%s234 + $0xdc] sm:$0xf] %v345
                %v347 = vld [vmem:[%s233 + $0x1b8] sm:$0xf]
                %348 = vst [vmem:[%s234 + $0xe0] sm:$0xf] %v347
                %v349 = vld [vmem:[%s233 + $0x1bc] sm:$0xf]
                %350 = vst [vmem:[%s234 + $0xe4] sm:$0xf] %v349
                %v351 = vld [vmem:[%s233 + $0x1c0] sm:$0xf]
                %352 = vst [vmem:[%s234 + $0xe8] sm:$0xf] %v351
                %v353 = vld [vmem:[%s233 + $0x1c4] sm:$0xf]
                %354 = vst [vmem:[%s234 + $0xec] sm:$0xf] %v353
                %v355 = vld [vmem:[%s233 + $0x1c8] sm:$0xf]
                %356 = vst [vmem:[%s234 + $0xf0] sm:$0xf] %v355
                %v357 = vld [vmem:[%s233 + $0x1cc] sm:$0xf]
                %358 = vst [vmem:[%s234 + $0xf4] sm:$0xf] %v357
                %v359 = vld [vmem:[%s233 + $0x1d0] sm:$0xf]
                %360 = vst [vmem:[%s234 + $0xf8] sm:$0xf] %v359
                %v361 = vld [vmem:[%s233 + $0x1d4] sm:$0xf]
                %362 = vst [vmem:[%s234 + $0xfc] sm:$0xf] %v361
                %v363 = vld [vmem:[%s233 + $0x1d8] sm:$0xf]
                %364 = vst [vmem:[%s234 + $0x100] sm:$0xf] %v363
                %v365 = vld [vmem:[%s233 + $0x1dc] sm:$0xf]
                %366 = vst [vmem:[%s234 + $0x104] sm:$0xf] %v365
                %v367 = vld [vmem:[%s233 + $0x1e0] sm:$0xf]
                %368 = vst [vmem:[%s234 + $0x108] sm:$0xf] %v367
                %v369 = vld [vmem:[%s233 + $0x1e4] sm:$0xf]
                %370 = vst [vmem:[%s234 + $0x10c] sm:$0xf] %v369
                %v371 = vld [vmem:[%s233 + $0x1e8] sm:$0xf]
                %372 = vst [vmem:[%s234 + $0x110] sm:$0xf] %v371
                %v373 = vld [vmem:[%s233 + $0x1ec] sm:$0xf]
                %374 = vst [vmem:[%s234 + $0x114] sm:$0xf] %v373
                %v375 = vld [vmem:[%s233 + $0x1f0] sm:$0xf]
                %376 = vst [vmem:[%s234 + $0x118] sm:$0xf] %v375
                %v377 = vld [vmem:[%s233 + $0x1f4] sm:$0xf]
                %378 = vst [vmem:[%s234 + $0x11c] sm:$0xf] %v377
              $region45: #{basic_block_forward.3} parent=39 // loop_footer
                %s232 = sadd.s32 1, %s228
              $region46: #{basic_block_forward.3} parent=39 // loop_footer_branch
                %227 = sbr.rel target = $region42
              $region47: #{basic_block_forward.3} parent=39 // loop_exit
                _
            $region40: #{basic_block_forward.3} parent=31 // pred_fallthru
              _
          $region32: #{basic_block_forward.3} parent=27 // pred_fallthru
            _
          %542 = vnop
        $region28: #{basic_block_forward.3} parent=23 // pred_fallthru
          _
      $region24: #{basic_block_forward.3} parent=5 // pred_fallthru
        _
      %p543 = scmp.le.s32.totalorder 1, %s13
      %p544 = scmp.lt.s32.totalorder %s13, 3
      %p545 = pnand %p543, %p544
      %p546 = pneg %p545
      // Predicated region
      $region66: #{basic_block_forward.3} parent=5 // pred_check
        _
      $region67: #{basic_block_forward.3} parent=5 // pred_check_branch
        %548 = sbr.rel (%p545) target = $region69
      $region68: #{basic_block_forward.3} parent=5 // pred_region
        %s549 = ssub.s32 %s13, 1
        %s550 = sand.u32 %s26, 1
        %s551 = sand.u32 %s26, 1
        %s552 = smul.addr %s551, 288
        %s553 = scalar_lea.vmem [#allocation3], %s552
        // Predicated region
        $region70: #{basic_block_forward.3} parent=68 // pred_check
          %p554 = pneg %p39
        $region71: #{basic_block_forward.3} parent=68 // pred_check_branch
          %556 = sbr.rel (%p554) target = $region73
        $region72: #{basic_block_forward.3} parent=68 // pred_region
          _
        $region73: #{basic_block_forward.3} parent=68 // pred_fallthru
          _
        %s557 = sand.u32 %s26, 1
        %s558 = sand.u32 %s26, 1
        %s559 = smul.addr %s558, 288
        %s560 = scalar_lea.vmem [#allocation3], %s559
        %p561 = pneg %p39
        %p562 = pneg %p36
        %p563 = pneg %p60
        %p564 = pneg %p57
        %p565 = pneg %p81
        %p566 = pneg %p78
        %p567 = pneg %p107
        %p568 = pneg %p104
        %p569 = scmp.lt.s32.totalorder %s18, 1
        %s570 = scalar_select %p569, %s18, 1
        %s571 = smul.addr %s570, 8
        %s572 = smul.addr %s571, 4
        %s573 = scalar_lea.vmem %s3, %s572
        %p574 = pneg %p133
        %p575 = pneg %p130
        %p576 = scmp.lt.s32.totalorder %s18, 1
        %s577 = scalar_select %p576, %s18, 1
        %s578 = smul.addr %s577, 2
        %s579 = scalar_lea.vmem %s4, %s578
        %p580 = pneg %p159
        %p581 = pneg %p156
        %p582 = scmp.lt.s32.totalorder %s18, 1
        %s583 = scalar_select %p582, %s18, 1
        %s584 = smul.addr %s583, 8
        %s585 = smul.addr %s584, 4
        %s586 = scalar_lea.vmem %s5, %s585
        %p587 = pneg %p185
        %p588 = pneg %p182
        %p589 = scmp.lt.s32.totalorder %s18, 1
        %s590 = scalar_select %p589, %s18, 1
        %s591 = smul.addr %s590, 2
        %s592 = scalar_lea.vmem %s6, %s591
        %p593 = scmp.lt.s32.totalorder %s18, 1
        %s594 = scalar_select %p593, %s18, 1
        %s595 = smul.addr %s594, 8
        %s596 = smul.addr %s595, 4
        %s597 = scalar_lea.vmem %s3, %s596
        %p598 = scmp.lt.s32.totalorder %s18, 1
        %s599 = scalar_select %p598, %s18, 1
        %s600 = smul.addr %s599, 2
        %s601 = scalar_lea.vmem %s4, %s600
        %p602 = scmp.lt.s32.totalorder %s18, 1
        %s603 = scalar_select %p602, %s18, 1
        %s604 = smul.addr %s603, 8
        %s605 = smul.addr %s604, 4
        %s606 = scalar_lea.vmem %s5, %s605
        %p607 = scmp.lt.s32.totalorder %s18, 1
        %s608 = scalar_select %p607, %s18, 1
        %s609 = smul.addr %s608, 2
        %s610 = scalar_lea.vmem %s6, %s609
        %v612 = vld [vmem:[%s553] sm:$0xf]
        %v613 = vld [vmem:[%s553 + $0x8] sm:$0xf]
        %v614 = vld [vmem:[%s553 + $0x10] sm:$0xf]
        %v615 = vld [vmem:[%s553 + $0x18] sm:$0xf]
        %v616 = vld [vmem:[%s553 + $0x20] sm:$0xf]
        %v617 = vld [vmem:[%s553 + $0x28] sm:$0xf]
        %v618 = vld [vmem:[%s553 + $0x30] sm:$0xf]
        %v619 = vld [vmem:[%s553 + $0x38] sm:$0xf]
        %v620 = vld [vmem:[%s553 + $0x40] sm:$0xf]
        %v621 = vunpack.c.l.bf16 %v612
        %v622 = vunpack.c.l.bf16 %v613
        %v623 = vunpack.c.l.bf16 %v614
        %v624 = vunpack.c.l.bf16 %v615
        %v625 = vunpack.c.l.bf16 %v616
        %v626 = vunpack.c.l.bf16 %v617
        %v627 = vunpack.c.l.bf16 %v618
        %v628 = vunpack.c.l.bf16 %v619
        %v629 = vunpack.c.l.bf16 %v620
        %630 = vst [vmem:[#allocation2] sm:$0xff] %v621
        %631 = vst [vmem:[#allocation2 + $0x18] sm:$0xff] %v622
        %632 = vst [vmem:[#allocation2 + $0x30] sm:$0xff] %v623
        %633 = vst [vmem:[#allocation2 + $0x48] sm:$0xff] %v624
        %634 = vst [vmem:[#allocation2 + $0x60] sm:$0xff] %v625
        %635 = vst [vmem:[#allocation2 + $0x78] sm:$0xff] %v626
        %636 = vst [vmem:[#allocation2 + $0x90] sm:$0xff] %v627
        %637 = vst [vmem:[#allocation2 + $0xa8] sm:$0xff] %v628
        %638 = vst [vmem:[#allocation2 + $0xc0] sm:$0xff] %v629
        %s639 = scalar_lea.vmem %s553, 72 [#allocation3]
        %v640 = vld [vmem:[%s639] sm:$0xf]
        %v641 = vld [vmem:[%s639 + $0x8] sm:$0xf]
        %v642 = vld [vmem:[%s639 + $0x10] sm:$0xf]
        %v643 = vld [vmem:[%s639 + $0x18] sm:$0xf]
        %v644 = vld [vmem:[%s639 + $0x20] sm:$0xf]
        %v645 = vld [vmem:[%s639 + $0x28] sm:$0xf]
        %v646 = vld [vmem:[%s639 + $0x30] sm:$0xf]
        %v647 = vld [vmem:[%s639 + $0x38] sm:$0xf]
        %v648 = vld [vmem:[%s639 + $0x40] sm:$0xf]
        %v649 = vunpack.c.l.bf16 %v640
        %v650 = vunpack.c.l.bf16 %v641
        %v651 = vunpack.c.l.bf16 %v642
        %v652 = vunpack.c.l.bf16 %v643
        %v653 = vunpack.c.l.bf16 %v644
        %v654 = vunpack.c.l.bf16 %v645
        %v655 = vunpack.c.l.bf16 %v646
        %v656 = vunpack.c.l.bf16 %v647
        %v657 = vunpack.c.l.bf16 %v648
        %658 = vst [vmem:[#allocation2 + $0x8] sm:$0xff] %v649
        %659 = vst [vmem:[#allocation2 + $0x20] sm:$0xff] %v650
        %660 = vst [vmem:[#allocation2 + $0x38] sm:$0xff] %v651
        %661 = vst [vmem:[#allocation2 + $0x50] sm:$0xff] %v652
        %662 = vst [vmem:[#allocation2 + $0x68] sm:$0xff] %v653
        %663 = vst [vmem:[#allocation2 + $0x80] sm:$0xff] %v654
        %664 = vst [vmem:[#allocation2 + $0x98] sm:$0xff] %v655
        %665 = vst [vmem:[#allocation2 + $0xb0] sm:$0xff] %v656
        %666 = vst [vmem:[#allocation2 + $0xc8] sm:$0xff] %v657
        %v667 = vld [vmem:[%s553] sm:$0xf]
        %v668 = vld [vmem:[%s553 + $0x4] sm:$0x1]
        %v669 = vld [vmem:[%s553 + $0x8] sm:$0xf]
        %v670 = vld [vmem:[%s553 + $0xc] sm:$0x1]
        %v671 = vld [vmem:[%s553 + $0x10] sm:$0xf]
        %v672 = vld [vmem:[%s553 + $0x14] sm:$0x1]
        %v673 = vld [vmem:[%s553 + $0x18] sm:$0xf]
        %v674 = vld [vmem:[%s553 + $0x1c] sm:$0x1]
        %v675 = vld [vmem:[%s553 + $0x20] sm:$0xf]
        %v676 = vld [vmem:[%s553 + $0x24] sm:$0x1]
        %v677 = vld [vmem:[%s553 + $0x28] sm:$0xf]
        %v678 = vld [vmem:[%s553 + $0x2c] sm:$0x1]
        %v679 = vld [vmem:[%s553 + $0x30] sm:$0xf]
        %v680 = vld [vmem:[%s553 + $0x34] sm:$0x1]
        %v681 = vld [vmem:[%s553 + $0x38] sm:$0xf]
        %v682 = vld [vmem:[%s553 + $0x3c] sm:$0x1]
        %v683 = vld [vmem:[%s553 + $0x40] sm:$0xf]
        %v684 = vld [vmem:[%s553 + $0x44] sm:$0x1]
        %v685 = vunpack.c.l.bf16 %v667
        %v686 = vunpack.c.l.bf16 %v668
        %v687 = vunpack.c.l.bf16 %v669
        %v688 = vunpack.c.l.bf16 %v670
        %v689 = vunpack.c.l.bf16 %v671
        %v690 = vunpack.c.l.bf16 %v672
        %v691 = vunpack.c.l.bf16 %v673
        %v692 = vunpack.c.l.bf16 %v674
        %v693 = vunpack.c.l.bf16 %v675
        %v694 = vunpack.c.l.bf16 %v676
        %v695 = vunpack.c.l.bf16 %v677
        %v696 = vunpack.c.l.bf16 %v678
        %v697 = vunpack.c.l.bf16 %v679
        %v698 = vunpack.c.l.bf16 %v680
        %v699 = vunpack.c.l.bf16 %v681
        %v700 = vunpack.c.l.bf16 %v682
        %v701 = vunpack.c.l.bf16 %v683
        %v702 = vunpack.c.l.bf16 %v684
        %vm721 = vcmask 1046528
        %v722 = vrot.slane %v685, 1
        %v723 = vrot.slane %v686, 1
        %v724 = vsel %vm721, %v722, %v723
        %v725 = vrot.slane %v687, 1
        %v726 = vrot.slane %v688, 1
        %v727 = vsel %vm721, %v725, %v726
        %v728 = vrot.slane %v689, 1
        %v729 = vrot.slane %v690, 1
        %v730 = vsel %vm721, %v728, %v729
        %v731 = vrot.slane %v691, 1
        %v732 = vrot.slane %v692, 1
        %v733 = vsel %vm721, %v731, %v732
        %v734 = vrot.slane %v693, 1
        %v735 = vrot.slane %v694, 1
        %v736 = vsel %vm721, %v734, %v735
        %v737 = vrot.slane %v695, 1
        %v738 = vrot.slane %v696, 1
        %v739 = vsel %vm721, %v737, %v738
        %v740 = vrot.slane %v697, 1
        %v741 = vrot.slane %v698, 1
        %v742 = vsel %vm721, %v740, %v741
        %v743 = vrot.slane %v699, 1
        %v744 = vrot.slane %v700, 1
        %v745 = vsel %vm721, %v743, %v744
        %v746 = vrot.slane %v701, 1
        %v747 = vrot.slane %v702, 1
        %v748 = vsel %vm721, %v746, %v747
        %758 = vst [vmem:[#allocation2 + $0x10] sm:$0xff] %v724
        %759 = vst [vmem:[#allocation2 + $0x28] sm:$0xff] %v727
        %760 = vst [vmem:[#allocation2 + $0x40] sm:$0xff] %v730
        %761 = vst [vmem:[#allocation2 + $0x58] sm:$0xff] %v733
        %762 = vst [vmem:[#allocation2 + $0x70] sm:$0xff] %v736
        %763 = vst [vmem:[#allocation2 + $0x88] sm:$0xff] %v739
        %764 = vst [vmem:[#allocation2 + $0xa0] sm:$0xff] %v742
        %765 = vst [vmem:[#allocation2 + $0xb8] sm:$0xff] %v745
        %766 = vst [vmem:[#allocation2 + $0xd0] sm:$0xff] %v748
        %s767 = scalar_lea.vmem %s553, 144 [#allocation3]
        %v768 = vld [vmem:[%s767] sm:$0xf]
        %v769 = vld [vmem:[%s767 + $0x8] sm:$0xf]
        %v770 = vld [vmem:[%s767 + $0x10] sm:$0xf]
        %v771 = vld [vmem:[%s767 + $0x18] sm:$0xf]
        %v772 = vld [vmem:[%s767 + $0x20] sm:$0xf]
        %v773 = vld [vmem:[%s767 + $0x28] sm:$0xf]
        %v774 = vld [vmem:[%s767 + $0x30] sm:$0xf]
        %v775 = vld [vmem:[%s767 + $0x38] sm:$0xf]
        %v776 = vld [vmem:[%s767 + $0x40] sm:$0xf]
        %v777 = vunpack.c.l.bf16 %v768
        %v778 = vunpack.c.l.bf16 %v769
        %v779 = vunpack.c.l.bf16 %v770
        %v780 = vunpack.c.l.bf16 %v771
        %v781 = vunpack.c.l.bf16 %v772
        %v782 = vunpack.c.l.bf16 %v773
        %v783 = vunpack.c.l.bf16 %v774
        %v784 = vunpack.c.l.bf16 %v775
        %v785 = vunpack.c.l.bf16 %v776
        %s786 = scalar_lea.vmem [#allocation2], 216
        %787 = vst [vmem:[%s786] sm:$0xff] %v777
        %788 = vst [vmem:[%s786 + $0x18] sm:$0xff] %v778
        %789 = vst [vmem:[%s786 + $0x30] sm:$0xff] %v779
        %790 = vst [vmem:[%s786 + $0x48] sm:$0xff] %v780
        %791 = vst [vmem:[%s786 + $0x60] sm:$0xff] %v781
        %792 = vst [vmem:[%s786 + $0x78] sm:$0xff] %v782
        %793 = vst [vmem:[%s786 + $0x90] sm:$0xff] %v783
        %794 = vst [vmem:[%s786 + $0xa8] sm:$0xff] %v784
        %795 = vst [vmem:[%s786 + $0xc0] sm:$0xff] %v785
        %s796 = scalar_lea.vmem %s553, 216 [#allocation3]
        %v797 = vld [vmem:[%s796] sm:$0xf]
        %v798 = vld [vmem:[%s796 + $0x8] sm:$0xf]
        %v799 = vld [vmem:[%s796 + $0x10] sm:$0xf]
        %v800 = vld [vmem:[%s796 + $0x18] sm:$0xf]
        %v801 = vld [vmem:[%s796 + $0x20] sm:$0xf]
        %v802 = vld [vmem:[%s796 + $0x28] sm:$0xf]
        %v803 = vld [vmem:[%s796 + $0x30] sm:$0xf]
        %v804 = vld [vmem:[%s796 + $0x38] sm:$0xf]
        %v805 = vld [vmem:[%s796 + $0x40] sm:$0xf]
        %v806 = vunpack.c.l.bf16 %v797
        %v807 = vunpack.c.l.bf16 %v798
        %v808 = vunpack.c.l.bf16 %v799
        %v809 = vunpack.c.l.bf16 %v800
        %v810 = vunpack.c.l.bf16 %v801
        %v811 = vunpack.c.l.bf16 %v802
        %v812 = vunpack.c.l.bf16 %v803
        %v813 = vunpack.c.l.bf16 %v804
        %v814 = vunpack.c.l.bf16 %v805
        %815 = vst [vmem:[%s786 + $0x8] sm:$0xff] %v806
        %816 = vst [vmem:[%s786 + $0x20] sm:$0xff] %v807
        %817 = vst [vmem:[%s786 + $0x38] sm:$0xff] %v808
        %818 = vst [vmem:[%s786 + $0x50] sm:$0xff] %v809
        %819 = vst [vmem:[%s786 + $0x68] sm:$0xff] %v810
        %820 = vst [vmem:[%s786 + $0x80] sm:$0xff] %v811
        %821 = vst [vmem:[%s786 + $0x98] sm:$0xff] %v812
        %822 = vst [vmem:[%s786 + $0xb0] sm:$0xff] %v813
        %823 = vst [vmem:[%s786 + $0xc8] sm:$0xff] %v814
        %v824 = vld [vmem:[%s767] sm:$0xf]
        %v825 = vld [vmem:[%s767 + $0x4] sm:$0x1]
        %v826 = vld [vmem:[%s767 + $0x8] sm:$0xf]
        %v827 = vld [vmem:[%s767 + $0xc] sm:$0x1]
        %v828 = vld [vmem:[%s767 + $0x10] sm:$0xf]
        %v829 = vld [vmem:[%s767 + $0x14] sm:$0x1]
        %v830 = vld [vmem:[%s767 + $0x18] sm:$0xf]
        %v831 = vld [vmem:[%s767 + $0x1c] sm:$0x1]
        %v832 = vld [vmem:[%s767 + $0x20] sm:$0xf]
        %v833 = vld [vmem:[%s767 + $0x24] sm:$0x1]
        %v834 = vld [vmem:[%s767 + $0x28] sm:$0xf]
        %v835 = vld [vmem:[%s767 + $0x2c] sm:$0x1]
        %v836 = vld [vmem:[%s767 + $0x30] sm:$0xf]
        %v837 = vld [vmem:[%s767 + $0x34] sm:$0x1]
        %v838 = vld [vmem:[%s767 + $0x38] sm:$0xf]
        %v839 = vld [vmem:[%s767 + $0x3c] sm:$0x1]
        %v840 = vld [vmem:[%s767 + $0x40] sm:$0xf]
        %v841 = vld [vmem:[%s767 + $0x44] sm:$0x1]
        %v842 = vunpack.c.l.bf16 %v824
        %v843 = vunpack.c.l.bf16 %v825
        %v844 = vunpack.c.l.bf16 %v826
        %v845 = vunpack.c.l.bf16 %v827
        %v846 = vunpack.c.l.bf16 %v828
        %v847 = vunpack.c.l.bf16 %v829
        %v848 = vunpack.c.l.bf16 %v830
        %v849 = vunpack.c.l.bf16 %v831
        %v850 = vunpack.c.l.bf16 %v832
        %v851 = vunpack.c.l.bf16 %v833
        %v852 = vunpack.c.l.bf16 %v834
        %v853 = vunpack.c.l.bf16 %v835
        %v854 = vunpack.c.l.bf16 %v836
        %v855 = vunpack.c.l.bf16 %v837
        %v856 = vunpack.c.l.bf16 %v838
        %v857 = vunpack.c.l.bf16 %v839
        %v858 = vunpack.c.l.bf16 %v840
        %v859 = vunpack.c.l.bf16 %v841
        %v878 = vrot.slane %v842, 1
        %v879 = vrot.slane %v843, 1
        %v880 = vsel %vm721, %v878, %v879
        %v881 = vrot.slane %v844, 1
        %v882 = vrot.slane %v845, 1
        %v883 = vsel %vm721, %v881, %v882
        %v884 = vrot.slane %v846, 1
        %v885 = vrot.slane %v847, 1
        %v886 = vsel %vm721, %v884, %v885
        %v887 = vrot.slane %v848, 1
        %v888 = vrot.slane %v849, 1
        %v889 = vsel %vm721, %v887, %v888
        %v890 = vrot.slane %v850, 1
        %v891 = vrot.slane %v851, 1
        %v892 = vsel %vm721, %v890, %v891
        %v893 = vrot.slane %v852, 1
        %v894 = vrot.slane %v853, 1
        %v895 = vsel %vm721, %v893, %v894
        %v896 = vrot.slane %v854, 1
        %v897 = vrot.slane %v855, 1
        %v898 = vsel %vm721, %v896, %v897
        %v899 = vrot.slane %v856, 1
        %v900 = vrot.slane %v857, 1
        %v901 = vsel %vm721, %v899, %v900
        %v902 = vrot.slane %v858, 1
        %v903 = vrot.slane %v859, 1
        %v904 = vsel %vm721, %v902, %v903
        %914 = vst [vmem:[%s786 + $0x10] sm:$0xff] %v880
        %915 = vst [vmem:[%s786 + $0x28] sm:$0xff] %v883
        %916 = vst [vmem:[%s786 + $0x40] sm:$0xff] %v886
        %917 = vst [vmem:[%s786 + $0x58] sm:$0xff] %v889
        %918 = vst [vmem:[%s786 + $0x70] sm:$0xff] %v892
        %919 = vst [vmem:[%s786 + $0x88] sm:$0xff] %v895
        %920 = vst [vmem:[%s786 + $0xa0] sm:$0xff] %v898
        %921 = vst [vmem:[%s786 + $0xb8] sm:$0xff] %v901
        %922 = vst [vmem:[%s786 + $0xd0] sm:$0xff] %v904
        %v923 = vld [vmem:[#allocation2] sm:$0xff]
        %v924 = vld [vmem:[#allocation2 + $0x8] sm:$0xff]
        %v925 = vld [vmem:[#allocation2 + $0x10] sm:$0xff]
        %v926 = vld [vmem:[#allocation2 + $0x18] sm:$0xff]
        %v927 = vld [vmem:[#allocation2 + $0x20] sm:$0xff]
        %v928 = vld [vmem:[#allocation2 + $0x28] sm:$0xff]
        %v929 = vld [vmem:[#allocation2 + $0x30] sm:$0xff]
        %v930 = vld [vmem:[#allocation2 + $0x38] sm:$0xff]
        %v931 = vld [vmem:[#allocation2 + $0x40] sm:$0xff]
        %v932 = vld [vmem:[#allocation2 + $0x48] sm:$0xff]
        %v933 = vld [vmem:[#allocation2 + $0x50] sm:$0xff]
        %v934 = vld [vmem:[#allocation2 + $0x58] sm:$0xff]
        %v935 = vld [vmem:[#allocation2 + $0x60] sm:$0xff]
        %v936 = vld [vmem:[#allocation2 + $0x68] sm:$0xff]
        %v937 = vld [vmem:[#allocation2 + $0x70] sm:$0xff]
        %v938 = vld [vmem:[#allocation2 + $0x78] sm:$0xff]
        %v939 = vld [vmem:[#allocation2 + $0x80] sm:$0xff]
        %v940 = vld [vmem:[#allocation2 + $0x88] sm:$0xff]
        %v941 = vld [vmem:[#allocation2 + $0x90] sm:$0xff]
        %v942 = vld [vmem:[#allocation2 + $0x98] sm:$0xff]
        %v943 = vld [vmem:[#allocation2 + $0xa0] sm:$0xff]
        %v944 = vld [vmem:[#allocation2 + $0xa8] sm:$0xff]
        %v945 = vld [vmem:[#allocation2 + $0xb0] sm:$0xff]
        %v946 = vld [vmem:[#allocation2 + $0xb8] sm:$0xff]
        %v947 = vpack.c.bf16 %v926, %v923
        %v948 = vpack.c.bf16 %v927, %v924
        %v949 = vpack.c.bf16 %v928, %v925
        %v950 = vpack.c.bf16 %v932, %v929
        %v951 = vpack.c.bf16 %v933, %v930
        %v952 = vpack.c.bf16 %v934, %v931
        %v953 = vpack.c.bf16 %v938, %v935
        %v954 = vpack.c.bf16 %v939, %v936
        %v955 = vpack.c.bf16 %v940, %v937
        %v956 = vpack.c.bf16 %v944, %v941
        %v957 = vpack.c.bf16 %v945, %v942
        %v958 = vpack.c.bf16 %v946, %v943
        %v959 = vld [vmem:[%s1] sm:$0xf]
        %v960 = vld [vmem:[%s1 + $0x4] sm:$0xf]
        %v961 = vld [vmem:[%s1 + $0x8] sm:$0xf]
        %v962 = vld [vmem:[%s1 + $0xc] sm:$0xf]
        %v963 = vld [vmem:[%s1 + $0x10] sm:$0xf]
        %v964 = vld [vmem:[%s1 + $0x14] sm:$0xf]
        %v965 = vld [vmem:[%s1 + $0x18] sm:$0xf]
        %v966 = vld [vmem:[%s1 + $0x1c] sm:$0xf]
        %v967 = vld [vmem:[%s1 + $0x20] sm:$0xf]
        %v968 = vld [vmem:[%s1 + $0x24] sm:$0xf]
        %v969 = vld [vmem:[%s1 + $0x28] sm:$0xf]
        %v970 = vld [vmem:[%s1 + $0x2c] sm:$0xf]
        %v971 = vld [vmem:[%s1 + $0x30] sm:$0xf]
        %v972 = vld [vmem:[%s1 + $0x34] sm:$0xf]
        %v973 = vld [vmem:[%s1 + $0x38] sm:$0xf]
        %v974 = vld [vmem:[%s1 + $0x3c] sm:$0xf]
        %v975 = vld [vmem:[%s1 + $0x40] sm:$0xf]
        %v976 = vld [vmem:[%s1 + $0x44] sm:$0xf]
        %v977 = vld [vmem:[%s1 + $0x48] sm:$0xf]
        %v978 = vld [vmem:[%s1 + $0x4c] sm:$0xf]
        %v979 = vld [vmem:[%s1 + $0x50] sm:$0xf]
        %v980 = vld [vmem:[%s1 + $0x54] sm:$0xf]
        %v981 = vld [vmem:[%s1 + $0x58] sm:$0xf]
        %v982 = vld [vmem:[%s1 + $0x5c] sm:$0xf]
        %v983 = vld [vmem:[%s1 + $0x60] sm:$0xf]
        %v984 = vld [vmem:[%s1 + $0x64] sm:$0xf]
        %v985 = vld [vmem:[%s1 + $0x68] sm:$0xf]
        %v986 = vld [vmem:[%s1 + $0x6c] sm:$0xf]
        %v987 = vld [vmem:[%s1 + $0x70] sm:$0xf]
        %v988 = vld [vmem:[%s1 + $0x74] sm:$0xf]
        %v989 = vld [vmem:[%s1 + $0x78] sm:$0xf]
        %v990 = vld [vmem:[%s1 + $0x7c] sm:$0xf]
        %v991 = vld [vmem:[%s1 + $0x80] sm:$0xf]
        %v992 = vld [vmem:[%s1 + $0x84] sm:$0xf]
        %v993 = vld [vmem:[%s1 + $0x88] sm:$0xf]
        %v994 = vld [vmem:[%s1 + $0x8c] sm:$0xf]
        %v995 = vld [vmem:[%s1 + $0x90] sm:$0xf]
        %v996 = vld [vmem:[%s1 + $0x94] sm:$0xf]
        %v997 = vld [vmem:[%s1 + $0x98] sm:$0xf]
        %v998 = vld [vmem:[%s1 + $0x9c] sm:$0xf]
        %v999 = vld [vmem:[%s1 + $0xa0] sm:$0xf]
        %v1000 = vld [vmem:[%s1 + $0xa4] sm:$0xf]
        %v1001 = vld [vmem:[%s1 + $0xa8] sm:$0xf]
        %v1002 = vld [vmem:[%s1 + $0xac] sm:$0xf]
        %v1003 = vld [vmem:[%s1 + $0xb0] sm:$0xf]
        %v1004 = vld [vmem:[%s1 + $0xb4] sm:$0xf]
        %v1005 = vld [vmem:[%s1 + $0xb8] sm:$0xf]
        %v1006 = vld [vmem:[%s1 + $0xbc] sm:$0xf]
        %v1007 = vld [vmem:[%s786] sm:$0xff]
        %v1008 = vld [vmem:[%s786 + $0x8] sm:$0xff]
        %v1009 = vld [vmem:[%s786 + $0x10] sm:$0xff]
        %v1010 = vld [vmem:[%s786 + $0x18] sm:$0xff]
        %v1011 = vld [vmem:[%s786 + $0x20] sm:$0xff]
        %v1012 = vld [vmem:[%s786 + $0x28] sm:$0xff]
        %v1013 = vld [vmem:[%s786 + $0x30] sm:$0xff]
        %v1014 = vld [vmem:[%s786 + $0x38] sm:$0xff]
        %v1015 = vld [vmem:[%s786 + $0x40] sm:$0xff]
        %v1016 = vld [vmem:[%s786 + $0x48] sm:$0xff]
        %v1017 = vld [vmem:[%s786 + $0x50] sm:$0xff]
        %v1018 = vld [vmem:[%s786 + $0x58] sm:$0xff]
        %v1019 = vld [vmem:[%s786 + $0x60] sm:$0xff]
        %v1020 = vld [vmem:[%s786 + $0x68] sm:$0xff]
        %v1021 = vld [vmem:[%s786 + $0x70] sm:$0xff]
        %v1022 = vld [vmem:[%s786 + $0x78] sm:$0xff]
        %v1023 = vld [vmem:[%s786 + $0x80] sm:$0xff]
        %v1024 = vld [vmem:[%s786 + $0x88] sm:$0xff]
        %v1025 = vld [vmem:[%s786 + $0x90] sm:$0xff]
        %v1026 = vld [vmem:[%s786 + $0x98] sm:$0xff]
        %v1027 = vld [vmem:[%s786 + $0xa0] sm:$0xff]
        %v1028 = vld [vmem:[%s786 + $0xa8] sm:$0xff]
        %v1029 = vld [vmem:[%s786 + $0xb0] sm:$0xff]
        %v1030 = vld [vmem:[%s786 + $0xb8] sm:$0xff]
        %v1031 = vpack.c.bf16 %v1010, %v1007
        %v1032 = vpack.c.bf16 %v1011, %v1008
        %v1033 = vpack.c.bf16 %v1012, %v1009
        %v1034 = vpack.c.bf16 %v1016, %v1013
        %v1035 = vpack.c.bf16 %v1017, %v1014
        %v1036 = vpack.c.bf16 %v1018, %v1015
        %v1037 = vpack.c.bf16 %v1022, %v1019
        %v1038 = vpack.c.bf16 %v1023, %v1020
        %v1039 = vpack.c.bf16 %v1024, %v1021
        %v1040 = vpack.c.bf16 %v1028, %v1025
        %v1041 = vpack.c.bf16 %v1029, %v1026
        %v1042 = vpack.c.bf16 %v1030, %v1027
        %s1043 = scalar_lea.vmem %s1, 192
        %v1044 = vld [vmem:[%s1043] sm:$0xf]
        %v1045 = vld [vmem:[%s1043 + $0x4] sm:$0xf]
        %v1046 = vld [vmem:[%s1043 + $0x8] sm:$0xf]
        %v1047 = vld [vmem:[%s1043 + $0xc] sm:$0xf]
        %v1048 = vld [vmem:[%s1043 + $0x10] sm:$0xf]
        %v1049 = vld [vmem:[%s1043 + $0x14] sm:$0xf]
        %v1050 = vld [vmem:[%s1043 + $0x18] sm:$0xf]
        %v1051 = vld [vmem:[%s1043 + $0x1c] sm:$0xf]
        %v1052 = vld [vmem:[%s1043 + $0x20] sm:$0xf]
        %v1053 = vld [vmem:[%s1043 + $0x24] sm:$0xf]
        %v1054 = vld [vmem:[%s1043 + $0x28] sm:$0xf]
        %v1055 = vld [vmem:[%s1043 + $0x2c] sm:$0xf]
        %v1056 = vld [vmem:[%s1043 + $0x30] sm:$0xf]
        %v1057 = vld [vmem:[%s1043 + $0x34] sm:$0xf]
        %v1058 = vld [vmem:[%s1043 + $0x38] sm:$0xf]
        %v1059 = vld [vmem:[%s1043 + $0x3c] sm:$0xf]
        %v1060 = vld [vmem:[%s1043 + $0x40] sm:$0xf]
        %v1061 = vld [vmem:[%s1043 + $0x44] sm:$0xf]
        %v1062 = vld [vmem:[%s1043 + $0x48] sm:$0xf]
        %v1063 = vld [vmem:[%s1043 + $0x4c] sm:$0xf]
        %v1064 = vld [vmem:[%s1043 + $0x50] sm:$0xf]
        %v1065 = vld [vmem:[%s1043 + $0x54] sm:$0xf]
        %v1066 = vld [vmem:[%s1043 + $0x58] sm:$0xf]
        %v1067 = vld [vmem:[%s1043 + $0x5c] sm:$0xf]
        %v1068 = vld [vmem:[%s1043 + $0x60] sm:$0xf]
        %v1069 = vld [vmem:[%s1043 + $0x64] sm:$0xf]
        %v1070 = vld [vmem:[%s1043 + $0x68] sm:$0xf]
        %v1071 = vld [vmem:[%s1043 + $0x6c] sm:$0xf]
        %v1072 = vld [vmem:[%s1043 + $0x70] sm:$0xf]
        %v1073 = vld [vmem:[%s1043 + $0x74] sm:$0xf]
        %v1074 = vld [vmem:[%s1043 + $0x78] sm:$0xf]
        %v1075 = vld [vmem:[%s1043 + $0x7c] sm:$0xf]
        %v1076 = vld [vmem:[%s1043 + $0x80] sm:$0xf]
        %v1077 = vld [vmem:[%s1043 + $0x84] sm:$0xf]
        %v1078 = vld [vmem:[%s1043 + $0x88] sm:$0xf]
        %v1079 = vld [vmem:[%s1043 + $0x8c] sm:$0xf]
        %v1080 = vld [vmem:[%s1043 + $0x90] sm:$0xf]
        %v1081 = vld [vmem:[%s1043 + $0x94] sm:$0xf]
        %v1082 = vld [vmem:[%s1043 + $0x98] sm:$0xf]
        %v1083 = vld [vmem:[%s1043 + $0x9c] sm:$0xf]
        %v1084 = vld [vmem:[%s1043 + $0xa0] sm:$0xf]
        %v1085 = vld [vmem:[%s1043 + $0xa4] sm:$0xf]
        %v1086 = vld [vmem:[%s1043 + $0xa8] sm:$0xf]
        %v1087 = vld [vmem:[%s1043 + $0xac] sm:$0xf]
        %v1088 = vld [vmem:[%s1043 + $0xb0] sm:$0xf]
        %v1089 = vld [vmem:[%s1043 + $0xb4] sm:$0xf]
        %v1090 = vld [vmem:[%s1043 + $0xb8] sm:$0xf]
        %v1091 = vld [vmem:[%s1043 + $0xbc] sm:$0xf]
        %v1140 = vunpack.c.l.b16 %v1044
        %v1141 = vunpack.c.l.b16 %v1045
        %v1142 = vunpack.c.l.b16 %v1046
        %v1143 = vunpack.c.l.b16 %v1047
        %v1144 = vunpack.c.l.b16 %v1048
        %v1145 = vunpack.c.l.b16 %v1049
        %v1146 = vunpack.c.l.b16 %v1050
        %v1147 = vunpack.c.l.b16 %v1051
        %v1148 = vunpack.c.l.b16 %v1052
        %v1149 = vunpack.c.l.b16 %v1053
        %v1150 = vunpack.c.l.b16 %v1054
        %v1151 = vunpack.c.l.b16 %v1055
        %v1152 = vunpack.c.l.b16 %v1056
        %v1153 = vunpack.c.l.b16 %v1057
        %v1154 = vunpack.c.l.b16 %v1058
        %v1155 = vunpack.c.l.b16 %v1059
        %v1156 = vunpack.c.l.b16 %v1060
        %v1157 = vunpack.c.l.b16 %v1061
        %v1158 = vunpack.c.l.b16 %v1062
        %v1159 = vunpack.c.l.b16 %v1063
        %v1160 = vunpack.c.l.b16 %v1064
        %v1161 = vunpack.c.l.b16 %v1065
        %v1162 = vunpack.c.l.b16 %v1066
        %v1163 = vunpack.c.l.b16 %v1067
        %v1164 = vunpack.c.l.b16 %v1068
        %v1165 = vunpack.c.l.b16 %v1069
        %v1166 = vunpack.c.l.b16 %v1070
        %v1167 = vunpack.c.l.b16 %v1071
        %v1168 = vunpack.c.l.b16 %v1072
        %v1169 = vunpack.c.l.b16 %v1073
        %v1170 = vunpack.c.l.b16 %v1074
        %v1171 = vunpack.c.l.b16 %v1075
        %v1172 = vunpack.c.l.b16 %v1076
        %v1173 = vunpack.c.l.b16 %v1077
        %v1174 = vunpack.c.l.b16 %v1078
        %v1175 = vunpack.c.l.b16 %v1079
        %v1176 = vunpack.c.l.b16 %v1080
        %v1177 = vunpack.c.l.b16 %v1081
        %v1178 = vunpack.c.l.b16 %v1082
        %v1179 = vunpack.c.l.b16 %v1083
        %v1180 = vunpack.c.l.b16 %v1084
        %v1181 = vunpack.c.l.b16 %v1085
        %v1182 = vunpack.c.l.b16 %v1086
        %v1183 = vunpack.c.l.b16 %v1087
        %v1184 = vunpack.c.l.b16 %v1088
        %v1185 = vunpack.c.l.b16 %v1089
        %v1186 = vunpack.c.l.b16 %v1090
        %v1187 = vunpack.c.l.b16 %v1091
        %v1188 = vpack.c.b16 %v1141, %v1140
        %v1189 = vpack.c.b16 %v1143, %v1142
        %v1190 = vpack.c.b16 %v1145, %v1144
        %v1191 = vpack.c.b16 %v1147, %v1146
        %v1192 = vpack.c.b16 %v1149, %v1148
        %v1193 = vpack.c.b16 %v1151, %v1150
        %v1194 = vpack.c.b16 %v1153, %v1152
        %v1195 = vpack.c.b16 %v1155, %v1154
        %v1196 = vpack.c.b16 %v1157, %v1156
        %v1197 = vpack.c.b16 %v1159, %v1158
        %v1198 = vpack.c.b16 %v1161, %v1160
        %v1199 = vpack.c.b16 %v1163, %v1162
        %v1200 = vpack.c.b16 %v1165, %v1164
        %v1201 = vpack.c.b16 %v1167, %v1166
        %v1202 = vpack.c.b16 %v1169, %v1168
        %v1203 = vpack.c.b16 %v1171, %v1170
        %v1204 = vpack.c.b16 %v1173, %v1172
        %v1205 = vpack.c.b16 %v1175, %v1174
        %v1206 = vpack.c.b16 %v1177, %v1176
        %v1207 = vpack.c.b16 %v1179, %v1178
        %v1208 = vpack.c.b16 %v1181, %v1180
        %v1209 = vpack.c.b16 %v1183, %v1182
        %v1210 = vpack.c.b16 %v1185, %v1184
        %v1211 = vpack.c.b16 %v1187, %v1186
        %1236 = vmatprep.subr.bf16.mxu0 0
        %1237 = vmatpush1.bf16.msra.mxu0 %v1188
        %1238 = vmatprep.subr.bf16.mxu0 0
        %1239 = vmatpush1.bf16.msra.mxu0 %v1189
        %1240 = vmatprep.subr.bf16.mxu0 0
        %1241 = vmatpush1.bf16.msra.mxu0 %v1190
        %1242 = vmatprep.subr.bf16.mxu0 0
        %1243 = vmatpush1.bf16.msra.mxu0 %v1191
        %1244 = vmatprep.subr.bf16.mxu0 0
        %1245 = vmatpush1.bf16.msra.mxu0 %v1192
        %1246 = vmatprep.subr.bf16.mxu0 0
        %1247 = vmatpush1.bf16.msra.mxu0 %v1193
        %1248 = vmatprep.subr.bf16.mxu0 0
        %1249 = vmatpush1.bf16.msra.mxu0 %v1194
        %1250 = vmatprep.subr.bf16.mxu0 0
        %1251 = vmatpush1.bf16.msra.mxu0 %v1195
        %1252 = vmatprep.subr.bf16.mxu0 0
        %1253 = vmatpush1.bf16.msra.mxu0 %v1196
        %1254 = vmatprep.subr.bf16.mxu0 0
        %1255 = vmatpush1.bf16.msra.mxu0 %v1197
        %1256 = vmatprep.subr.bf16.mxu0 0
        %1257 = vmatpush1.bf16.msra.mxu0 %v1198
        %1258 = vmatprep.subr.bf16.mxu0 0
        %1259 = vmatpush1.bf16.msra.mxu0 %v1199
        %1260 = vmatprep.subr.bf16.mxu0 0
        %1261 = vmatpush1.bf16.msra.mxu0 %v1200
        %1262 = vmatprep.subr.bf16.mxu0 0
        %1263 = vmatpush1.bf16.msra.mxu0 %v1201
        %1264 = vmatprep.subr.bf16.mxu0 0
        %1265 = vmatpush1.bf16.msra.mxu0 %v1202
        %1266 = vmatprep.subr.bf16.mxu0 0
        %1267 = vmatpush1.bf16.msra.mxu0 %v1203
        %1268 = vmatprep.mubr.bf16.mxu0 %v1032
        %1269 = vmatmul.mubr.bf16.gmra.mrb[0].mxu0 %v1031
        %v1270 = vpop.f32.mrb[0].mxu0
        %v1271 = vadd.f32 0.0, %v1270
        %v1272 = vpop.f32.mrb[0].mxu0
        %v1273 = vpop.f32.mrb[0].mxu0
        %v1274 = vadd.f32 0.0, %v1273
        %v1275 = vpop.f32.mrb[0].mxu0
        %1276 = vmatprep.mubr.bf16.mxu0 %v1035
        %1277 = vmatmul.mubr.bf16.gmra.mrb[0].mxu0 %v1034
        %v1278 = vpop.f32.mrb[0].mxu0
        %v1279 = vadd.f32 0.0, %v1278
        %v1280 = vpop.f32.mrb[0].mxu0
        %v1281 = vpop.f32.mrb[0].mxu0
        %v1282 = vadd.f32 0.0, %v1281
        %v1283 = vpop.f32.mrb[0].mxu0
        %1284 = vmatprep.mubr.bf16.mxu0 %v1038
        %1285 = vmatmul.mubr.bf16.gmra.mrb[0].mxu0 %v1037
        %v1286 = vpop.f32.mrb[0].mxu0
        %v1287 = vadd.f32 0.0, %v1286
        %v1288 = vpop.f32.mrb[0].mxu0
        %v1289 = vpop.f32.mrb[0].mxu0
        %v1290 = vadd.f32 0.0, %v1289
        %v1291 = vpop.f32.mrb[0].mxu0
        %1292 = vmatprep.mubr.bf16.mxu0 %v1041
        %1293 = vmatmul.mubr.bf16.gmra.mrb[0].mxu0 %v1040
        %v1294 = vpop.f32.mrb[0].mxu0
        %v1295 = vadd.f32 0.0, %v1294
        %v1296 = vpop.f32.mrb[0].mxu0
        %v1297 = vpop.f32.mrb[0].mxu0
        %v1298 = vadd.f32 0.0, %v1297
        %v1299 = vpop.f32.mrb[0].mxu0
        %1300 = vdwg.mxu0
        %1301 = vmatprep.subr.bf16.mxu0 0
        %1302 = vmatpush1.bf16.msra.mxu0 %v1204
        %1303 = vmatprep.subr.bf16.mxu0 0
        %1304 = vmatpush1.bf16.msra.mxu0 %v1205
        %1305 = vmatprep.subr.bf16.mxu0 0
        %1306 = vmatpush1.bf16.msra.mxu0 %v1206
        %1307 = vmatprep.subr.bf16.mxu0 0
        %1308 = vmatpush1.bf16.msra.mxu0 %v1207
        %1309 = vmatprep.subr.bf16.mxu0 0
        %1310 = vmatpush1.bf16.msra.mxu0 %v1208
        %1311 = vmatprep.subr.bf16.mxu0 0
        %1312 = vmatpush1.bf16.msra.mxu0 %v1209
        %1313 = vmatprep.subr.bf16.mxu0 0
        %1314 = vmatpush1.bf16.msra.mxu0 %v1210
        %1315 = vmatprep.subr.bf16.mxu0 0
        %1316 = vmatpush1.bf16.msra.mxu0 %v1211
        %1317 = vmatprep.subr.bf16.mxu0 0
        %1318 = vmatpush1.bf16.msra.mxu0 0
        %1319 = vmatprep.subr.bf16.mxu0 0
        %1320 = vmatpush1.bf16.msra.mxu0 0
        %1321 = vmatprep.subr.bf16.mxu0 0
        %1322 = vmatpush1.bf16.msra.mxu0 0
        %1323 = vmatprep.subr.bf16.mxu0 0
        %1324 = vmatpush1.bf16.msra.mxu0 0
        %1325 = vmatprep.subr.bf16.mxu0 0
        %1326 = vmatpush1.bf16.msra.mxu0 0
        %1327 = vmatprep.subr.bf16.mxu0 0
        %1328 = vmatpush1.bf16.msra.mxu0 0
        %1329 = vmatprep.subr.bf16.mxu0 0
        %1330 = vmatpush1.bf16.msra.mxu0 0
        %1331 = vmatprep.subr.bf16.mxu0 0
        %1332 = vmatpush1.bf16.msra.mxu0 0
        %1333 = vmatprep.mubr.bf16.mxu0 0
        %1334 = vmatmul.mubr.bf16.gmra.mrb[0].mxu0 %v1033
        %v1335 = vpop.f32.mrb[0].mxu0
        %v1336 = vadd.f32 %v1271, %v1335
        %v1337 = vpop.f32.mrb[0].mxu0
        %v1338 = vpop.f32.mrb[0].mxu0
        %v1339 = vadd.f32 %v1274, %v1338
        %v1340 = vpop.f32.mrb[0].mxu0
        %1341 = vmatprep.mubr.bf16.mxu0 0
        %1342 = vmatmul.mubr.bf16.gmra.mrb[0].mxu0 %v1036
        %v1343 = vpop.f32.mrb[0].mxu0
        %v1344 = vadd.f32 %v1279, %v1343
        %v1345 = vpop.f32.mrb[0].mxu0
        %v1346 = vpop.f32.mrb[0].mxu0
        %v1347 = vadd.f32 %v1282, %v1346
        %v1348 = vpop.f32.mrb[0].mxu0
        %1349 = vmatprep.mubr.bf16.mxu0 0
        %1350 = vmatmul.mubr.bf16.gmra.mrb[0].mxu0 %v1039
        %v1351 = vpop.f32.mrb[0].mxu0
        %v1352 = vadd.f32 %v1287, %v1351
        %v1353 = vpop.f32.mrb[0].mxu0
        %v1354 = vpop.f32.mrb[0].mxu0
        %v1355 = vadd.f32 %v1290, %v1354
        %v1356 = vpop.f32.mrb[0].mxu0
        %1357 = vmatprep.mubr.bf16.mxu0 0
        %1358 = vmatmul.mubr.bf16.gmra.mrb[0].mxu0 %v1042
        %v1359 = vpop.f32.mrb[0].mxu0
        %v1360 = vadd.f32 %v1295, %v1359
        %v1361 = vpop.f32.mrb[0].mxu0
        %v1362 = vpop.f32.mrb[0].mxu0
        %v1363 = vadd.f32 %v1298, %v1362
        %v1364 = vpop.f32.mrb[0].mxu0
        %1365 = vdwg.mxu0
        %v1414 = vunpack.c.l.b16 %v959
        %v1415 = vunpack.c.l.b16 %v960
        %v1416 = vunpack.c.l.b16 %v961
        %v1417 = vunpack.c.l.b16 %v962
        %v1418 = vunpack.c.l.b16 %v963
        %v1419 = vunpack.c.l.b16 %v964
        %v1420 = vunpack.c.l.b16 %v965
        %v1421 = vunpack.c.l.b16 %v966
        %v1422 = vunpack.c.l.b16 %v967
        %v1423 = vunpack.c.l.b16 %v968
        %v1424 = vunpack.c.l.b16 %v969
        %v1425 = vunpack.c.l.b16 %v970
        %v1426 = vunpack.c.l.b16 %v971
        %v1427 = vunpack.c.l.b16 %v972
        %v1428 = vunpack.c.l.b16 %v973
        %v1429 = vunpack.c.l.b16 %v974
        %v1430 = vunpack.c.l.b16 %v975
        %v1431 = vunpack.c.l.b16 %v976
        %v1432 = vunpack.c.l.b16 %v977
        %v1433 = vunpack.c.l.b16 %v978
        %v1434 = vunpack.c.l.b16 %v979
        %v1435 = vunpack.c.l.b16 %v980
        %v1436 = vunpack.c.l.b16 %v981
        %v1437 = vunpack.c.l.b16 %v982
        %v1438 = vunpack.c.l.b16 %v983
        %v1439 = vunpack.c.l.b16 %v984
        %v1440 = vunpack.c.l.b16 %v985
        %v1441 = vunpack.c.l.b16 %v986
        %v1442 = vunpack.c.l.b16 %v987
        %v1443 = vunpack.c.l.b16 %v988
        %v1444 = vunpack.c.l.b16 %v989
        %v1445 = vunpack.c.l.b16 %v990
        %v1446 = vunpack.c.l.b16 %v991
        %v1447 = vunpack.c.l.b16 %v992
        %v1448 = vunpack.c.l.b16 %v993
        %v1449 = vunpack.c.l.b16 %v994
        %v1450 = vunpack.c.l.b16 %v995
        %v1451 = vunpack.c.l.b16 %v996
        %v1452 = vunpack.c.l.b16 %v997
        %v1453 = vunpack.c.l.b16 %v998
        %v1454 = vunpack.c.l.b16 %v999
        %v1455 = vunpack.c.l.b16 %v1000
        %v1456 = vunpack.c.l.b16 %v1001
        %v1457 = vunpack.c.l.b16 %v1002
        %v1458 = vunpack.c.l.b16 %v1003
        %v1459 = vunpack.c.l.b16 %v1004
        %v1460 = vunpack.c.l.b16 %v1005
        %v1461 = vunpack.c.l.b16 %v1006
        %v1462 = vpack.c.b16 %v1415, %v1414
        %v1463 = vpack.c.b16 %v1417, %v1416
        %v1464 = vpack.c.b16 %v1419, %v1418
        %v1465 = vpack.c.b16 %v1421, %v1420
        %v1466 = vpack.c.b16 %v1423, %v1422
        %v1467 = vpack.c.b16 %v1425, %v1424
        %v1468 = vpack.c.b16 %v1427, %v1426
        %v1469 = vpack.c.b16 %v1429, %v1428
        %v1470 = vpack.c.b16 %v1431, %v1430
        %v1471 = vpack.c.b16 %v1433, %v1432
        %v1472 = vpack.c.b16 %v1435, %v1434
        %v1473 = vpack.c.b16 %v1437, %v1436
        %v1474 = vpack.c.b16 %v1439, %v1438
        %v1475 = vpack.c.b16 %v1441, %v1440
        %v1476 = vpack.c.b16 %v1443, %v1442
        %v1477 = vpack.c.b16 %v1445, %v1444
        %v1478 = vpack.c.b16 %v1447, %v1446
        %v1479 = vpack.c.b16 %v1449, %v1448
        %v1480 = vpack.c.b16 %v1451, %v1450
        %v1481 = vpack.c.b16 %v1453, %v1452
        %v1482 = vpack.c.b16 %v1455, %v1454
        %v1483 = vpack.c.b16 %v1457, %v1456
        %v1484 = vpack.c.b16 %v1459, %v1458
        %v1485 = vpack.c.b16 %v1461, %v1460
        %1510 = vmatprep.subr.bf16.mxu0 0
        %1511 = vmatpush1.bf16.msra.mxu0 %v1462
        %1512 = vmatprep.subr.bf16.mxu0 0
        %1513 = vmatpush1.bf16.msra.mxu0 %v1463
        %1514 = vmatprep.subr.bf16.mxu0 0
        %1515 = vmatpush1.bf16.msra.mxu0 %v1464
        %1516 = vmatprep.subr.bf16.mxu0 0
        %1517 = vmatpush1.bf16.msra.mxu0 %v1465
        %1518 = vmatprep.subr.bf16.mxu0 0
        %1519 = vmatpush1.bf16.msra.mxu0 %v1466
        %1520 = vmatprep.subr.bf16.mxu0 0
        %1521 = vmatpush1.bf16.msra.mxu0 %v1467
        %1522 = vmatprep.subr.bf16.mxu0 0
        %1523 = vmatpush1.bf16.msra.mxu0 %v1468
        %1524 = vmatprep.subr.bf16.mxu0 0
        %1525 = vmatpush1.bf16.msra.mxu0 %v1469
        %1526 = vmatprep.subr.bf16.mxu0 0
        %1527 = vmatpush1.bf16.msra.mxu0 %v1470
        %1528 = vmatprep.subr.bf16.mxu0 0
        %1529 = vmatpush1.bf16.msra.mxu0 %v1471
        %1530 = vmatprep.subr.bf16.mxu0 0
        %1531 = vmatpush1.bf16.msra.mxu0 %v1472
        %1532 = vmatprep.subr.bf16.mxu0 0
        %1533 = vmatpush1.bf16.msra.mxu0 %v1473
        %1534 = vmatprep.subr.bf16.mxu0 0
        %1535 = vmatpush1.bf16.msra.mxu0 %v1474
        %1536 = vmatprep.subr.bf16.mxu0 0
        %1537 = vmatpush1.bf16.msra.mxu0 %v1475
        %1538 = vmatprep.subr.bf16.mxu0 0
        %1539 = vmatpush1.bf16.msra.mxu0 %v1476
        %1540 = vmatprep.subr.bf16.mxu0 0
        %1541 = vmatpush1.bf16.msra.mxu0 %v1477
        %1542 = vmatprep.mubr.bf16.mxu0 %v948
        %1543 = vmatmul.mubr.bf16.gmra.mrb[0].mxu0 %v947
        %v1544 = vpop.f32.mrb[0].mxu0
        %v1545 = vadd.f32 %v1336, %v1544
        %v1546 = vpop.f32.mrb[0].mxu0
        %v1547 = vpop.f32.mrb[0].mxu0
        %v1548 = vadd.f32 %v1339, %v1547
        %v1549 = vpop.f32.mrb[0].mxu0
        %1550 = vmatprep.mubr.bf16.mxu0 %v951
        %1551 = vmatmul.mubr.bf16.gmra.mrb[0].mxu0 %v950
        %v1552 = vpop.f32.mrb[0].mxu0
        %v1553 = vadd.f32 %v1344, %v1552
        %v1554 = vpop.f32.mrb[0].mxu0
        %v1555 = vpop.f32.mrb[0].mxu0
        %v1556 = vadd.f32 %v1347, %v1555
        %v1557 = vpop.f32.mrb[0].mxu0
        %1558 = vmatprep.mubr.bf16.mxu0 %v954
        %1559 = vmatmul.mubr.bf16.gmra.mrb[0].mxu0 %v953
        %v1560 = vpop.f32.mrb[0].mxu0
        %v1561 = vadd.f32 %v1352, %v1560
        %v1562 = vpop.f32.mrb[0].mxu0
        %v1563 = vpop.f32.mrb[0].mxu0
        %v1564 = vadd.f32 %v1355, %v1563
        %v1565 = vpop.f32.mrb[0].mxu0
        %1566 = vmatprep.mubr.bf16.mxu0 %v957
        %1567 = vmatmul.mubr.bf16.gmra.mrb[0].mxu0 %v956
        %v1568 = vpop.f32.mrb[0].mxu0
        %v1569 = vadd.f32 %v1360, %v1568
        %v1570 = vpop.f32.mrb[0].mxu0
        %v1571 = vpop.f32.mrb[0].mxu0
        %v1572 = vadd.f32 %v1363, %v1571
        %v1573 = vpop.f32.mrb[0].mxu0
        %1574 = vdwg.mxu0
        %1575 = vmatprep.subr.bf16.mxu0 0
        %1576 = vmatpush1.bf16.msra.mxu0 %v1478
        %1577 = vmatprep.subr.bf16.mxu0 0
        %1578 = vmatpush1.bf16.msra.mxu0 %v1479
        %1579 = vmatprep.subr.bf16.mxu0 0
        %1580 = vmatpush1.bf16.msra.mxu0 %v1480
        %1581 = vmatprep.subr.bf16.mxu0 0
        %1582 = vmatpush1.bf16.msra.mxu0 %v1481
        %1583 = vmatprep.subr.bf16.mxu0 0
        %1584 = vmatpush1.bf16.msra.mxu0 %v1482
        %1585 = vmatprep.subr.bf16.mxu0 0
        %1586 = vmatpush1.bf16.msra.mxu0 %v1483
        %1587 = vmatprep.subr.bf16.mxu0 0
        %1588 = vmatpush1.bf16.msra.mxu0 %v1484
        %1589 = vmatprep.subr.bf16.mxu0 0
        %1590 = vmatpush1.bf16.msra.mxu0 %v1485
        %1591 = vmatprep.subr.bf16.mxu0 0
        %1592 = vmatpush1.bf16.msra.mxu0 0
        %1593 = vmatprep.subr.bf16.mxu0 0
        %1594 = vmatpush1.bf16.msra.mxu0 0
        %1595 = vmatprep.subr.bf16.mxu0 0
        %1596 = vmatpush1.bf16.msra.mxu0 0
        %1597 = vmatprep.subr.bf16.mxu0 0
        %1598 = vmatpush1.bf16.msra.mxu0 0
        %1599 = vmatprep.subr.bf16.mxu0 0
        %1600 = vmatpush1.bf16.msra.mxu0 0
        %1601 = vmatprep.subr.bf16.mxu0 0
        %1602 = vmatpush1.bf16.msra.mxu0 0
        %1603 = vmatprep.subr.bf16.mxu0 0
        %1604 = vmatpush1.bf16.msra.mxu0 0
        %1605 = vmatprep.subr.bf16.mxu0 0
        %1606 = vmatpush1.bf16.msra.mxu0 0
        %1607 = vmatprep.mubr.bf16.mxu0 0
        %1608 = vmatmul.mubr.bf16.gmra.mrb[0].mxu0 %v949
        %v1609 = vpop.f32.mrb[0].mxu0
        %v1610 = vadd.f32 %v1545, %v1609
        %v1611 = vpop.f32.mrb[0].mxu0
        %v1612 = vpop.f32.mrb[0].mxu0
        %v1613 = vadd.f32 %v1548, %v1612
        %v1614 = vpop.f32.mrb[0].mxu0
        %1615 = vmatprep.mubr.bf16.mxu0 0
        %1616 = vmatmul.mubr.bf16.gmra.mrb[0].mxu0 %v952
        %v1617 = vpop.f32.mrb[0].mxu0
        %v1618 = vadd.f32 %v1553, %v1617
        %v1619 = vpop.f32.mrb[0].mxu0
        %v1620 = vpop.f32.mrb[0].mxu0
        %v1621 = vadd.f32 %v1556, %v1620
        %v1622 = vpop.f32.mrb[0].mxu0
        %1623 = vmatprep.mubr.bf16.mxu0 0
        %1624 = vmatmul.mubr.bf16.gmra.mrb[0].mxu0 %v955
        %v1625 = vpop.f32.mrb[0].mxu0
        %v1626 = vadd.f32 %v1561, %v1625
        %v1627 = vpop.f32.mrb[0].mxu0
        %v1628 = vpop.f32.mrb[0].mxu0
        %v1629 = vadd.f32 %v1564, %v1628
        %v1630 = vpop.f32.mrb[0].mxu0
        %1631 = vmatprep.mubr.bf16.mxu0 0
        %1632 = vmatmul.mubr.bf16.gmra.mrb[0].mxu0 %v958
        %v1633 = vpop.f32.mrb[0].mxu0
        %v1634 = vadd.f32 %v1569, %v1633
        %v1635 = vpop.f32.mrb[0].mxu0
        %v1636 = vpop.f32.mrb[0].mxu0
        %v1637 = vadd.f32 %v1572, %v1636
        %v1638 = vpop.f32.mrb[0].mxu0
        %1639 = vdwg.mxu0
        %s1640 = scalar_lea.vmem [#allocation2], 24
        %v1641 = vld [vmem:[%s1640] sm:$0xff]
        %v1642 = vld [vmem:[%s1640 + $0x8] sm:$0xff]
        %v1643 = vld [vmem:[%s1640 + $0x10] sm:$0xff]
        %v1644 = vld [vmem:[%s1640 + $0x18] sm:$0xff]
        %v1645 = vld [vmem:[%s1640 + $0x20] sm:$0xff]
        %v1646 = vld [vmem:[%s1640 + $0x28] sm:$0xff]
        %v1647 = vld [vmem:[%s1640 + $0x30] sm:$0xff]
        %v1648 = vld [vmem:[%s1640 + $0x38] sm:$0xff]
        %v1649 = vld [vmem:[%s1640 + $0x40] sm:$0xff]
        %v1650 = vld [vmem:[%s1640 + $0x48] sm:$0xff]
        %v1651 = vld [vmem:[%s1640 + $0x50] sm:$0xff]
        %v1652 = vld [vmem:[%s1640 + $0x58] sm:$0xff]
        %v1653 = vld [vmem:[%s1640 + $0x60] sm:$0xff]
        %v1654 = vld [vmem:[%s1640 + $0x68] sm:$0xff]
        %v1655 = vld [vmem:[%s1640 + $0x70] sm:$0xff]
        %v1656 = vld [vmem:[%s1640 + $0x78] sm:$0xff]
        %v1657 = vld [vmem:[%s1640 + $0x80] sm:$0xff]
        %v1658 = vld [vmem:[%s1640 + $0x88] sm:$0xff]
        %v1659 = vld [vmem:[%s1640 + $0x90] sm:$0xff]
        %v1660 = vld [vmem:[%s1640 + $0x98] sm:$0xff]
        %v1661 = vld [vmem:[%s1640 + $0xa0] sm:$0xff]
        %v1662 = vld [vmem:[%s1640 + $0xa8] sm:$0xff]
        %v1663 = vld [vmem:[%s1640 + $0xb0] sm:$0xff]
        %v1664 = vld [vmem:[%s1640 + $0xb8] sm:$0xff]
        %v1665 = vpack.c.bf16 %v1644, %v1641
        %v1666 = vpack.c.bf16 %v1645, %v1642
        %v1667 = vpack.c.bf16 %v1646, %v1643
        %v1668 = vpack.c.bf16 %v1650, %v1647
        %v1669 = vpack.c.bf16 %v1651, %v1648
        %v1670 = vpack.c.bf16 %v1652, %v1649
        %v1671 = vpack.c.bf16 %v1656, %v1653
        %v1672 = vpack.c.bf16 %v1657, %v1654
        %v1673 = vpack.c.bf16 %v1658, %v1655
        %v1674 = vpack.c.bf16 %v1662, %v1659
        %v1675 = vpack.c.bf16 %v1663, %v1660
        %v1676 = vpack.c.bf16 %v1664, %v1661
        %s1677 = scalar_lea.vmem %s1, 384
        %v1678 = vld [vmem:[%s1677] sm:$0xf]
        %v1679 = vld [vmem:[%s1677 + $0x4] sm:$0xf]
        %v1680 = vld [vmem:[%s1677 + $0x8] sm:$0xf]
        %v1681 = vld [vmem:[%s1677 + $0xc] sm:$0xf]
        %v1682 = vld [vmem:[%s1677 + $0x10] sm:$0xf]
        %v1683 = vld [vmem:[%s1677 + $0x14] sm:$0xf]
        %v1684 = vld [vmem:[%s1677 + $0x18] sm:$0xf]
        %v1685 = vld [vmem:[%s1677 + $0x1c] sm:$0xf]
        %v1686 = vld [vmem:[%s1677 + $0x20] sm:$0xf]
        %v1687 = vld [vmem:[%s1677 + $0x24] sm:$0xf]
        %v1688 = vld [vmem:[%s1677 + $0x28] sm:$0xf]
        %v1689 = vld [vmem:[%s1677 + $0x2c] sm:$0xf]
        %v1690 = vld [vmem:[%s1677 + $0x30] sm:$0xf]
        %v1691 = vld [vmem:[%s1677 + $0x34] sm:$0xf]
        %v1692 = vld [vmem:[%s1677 + $0x38] sm:$0xf]
        %v1693 = vld [vmem:[%s1677 + $0x3c] sm:$0xf]
        %v1694 = vld [vmem:[%s1677 + $0x40] sm:$0xf]
        %v1695 = vld [vmem:[%s1677 + $0x44] sm:$0xf]
        %v1696 = vld [vmem:[%s1677 + $0x48] sm:$0xf]
        %v1697 = vld [vmem:[%s1677 + $0x4c] sm:$0xf]
        %v1698 = vld [vmem:[%s1677 + $0x50] sm:$0xf]
        %v1699 = vld [vmem:[%s1677 + $0x54] sm:$0xf]
        %v1700 = vld [vmem:[%s1677 + $0x58] sm:$0xf]
        %v1701 = vld [vmem:[%s1677 + $0x5c] sm:$0xf]
        %v1702 = vld [vmem:[%s1677 + $0x60] sm:$0xf]
        %v1703 = vld [vmem:[%s1677 + $0x64] sm:$0xf]
        %v1704 = vld [vmem:[%s1677 + $0x68] sm:$0xf]
        %v1705 = vld [vmem:[%s1677 + $0x6c] sm:$0xf]
        %v1706 = vld [vmem:[%s1677 + $0x70] sm:$0xf]
        %v1707 = vld [vmem:[%s1677 + $0x74] sm:$0xf]
        %v1708 = vld [vmem:[%s1677 + $0x78] sm:$0xf]
        %v1709 = vld [vmem:[%s1677 + $0x7c] sm:$0xf]
        %v1710 = vld [vmem:[%s1677 + $0x80] sm:$0xf]
        %v1711 = vld [vmem:[%s1677 + $0x84] sm:$0xf]
        %v1712 = vld [vmem:[%s1677 + $0x88] sm:$0xf]
        %v1713 = vld [vmem:[%s1677 + $0x8c] sm:$0xf]
        %v1714 = vld [vmem:[%s1677 + $0x90] sm:$0xf]
        %v1715 = vld [vmem:[%s1677 + $0x94] sm:$0xf]
        %v1716 = vld [vmem:[%s1677 + $0x98] sm:$0xf]
        %v1717 = vld [vmem:[%s1677 + $0x9c] sm:$0xf]
        %v1718 = vld [vmem:[%s1677 + $0xa0] sm:$0xf]
        %v1719 = vld [vmem:[%s1677 + $0xa4] sm:$0xf]
        %v1720 = vld [vmem:[%s1677 + $0xa8] sm:$0xf]
        %v1721 = vld [vmem:[%s1677 + $0xac] sm:$0xf]
        %v1722 = vld [vmem:[%s1677 + $0xb0] sm:$0xf]
        %v1723 = vld [vmem:[%s1677 + $0xb4] sm:$0xf]
        %v1724 = vld [vmem:[%s1677 + $0xb8] sm:$0xf]
        %v1725 = vld [vmem:[%s1677 + $0xbc] sm:$0xf]
        %v1774 = vunpack.c.l.b16 %v1678
        %v1775 = vunpack.c.l.b16 %v1679
        %v1776 = vunpack.c.l.b16 %v1680
        %v1777 = vunpack.c.l.b16 %v1681
        %v1778 = vunpack.c.l.b16 %v1682
        %v1779 = vunpack.c.l.b16 %v1683
        %v1780 = vunpack.c.l.b16 %v1684
        %v1781 = vunpack.c.l.b16 %v1685
        %v1782 = vunpack.c.l.b16 %v1686
        %v1783 = vunpack.c.l.b16 %v1687
        %v1784 = vunpack.c.l.b16 %v1688
        %v1785 = vunpack.c.l.b16 %v1689
        %v1786 = vunpack.c.l.b16 %v1690
        %v1787 = vunpack.c.l.b16 %v1691
        %v1788 = vunpack.c.l.b16 %v1692
        %v1789 = vunpack.c.l.b16 %v1693
        %v1790 = vunpack.c.l.b16 %v1694
        %v1791 = vunpack.c.l.b16 %v1695
        %v1792 = vunpack.c.l.b16 %v1696
        %v1793 = vunpack.c.l.b16 %v1697
        %v1794 = vunpack.c.l.b16 %v1698
        %v1795 = vunpack.c.l.b16 %v1699
        %v1796 = vunpack.c.l.b16 %v1700
        %v1797 = vunpack.c.l.b16 %v1701
        %v1798 = vunpack.c.l.b16 %v1702
        %v1799 = vunpack.c.l.b16 %v1703
        %v1800 = vunpack.c.l.b16 %v1704
        %v1801 = vunpack.c.l.b16 %v1705
        %v1802 = vunpack.c.l.b16 %v1706
        %v1803 = vunpack.c.l.b16 %v1707
        %v1804 = vunpack.c.l.b16 %v1708
        %v1805 = vunpack.c.l.b16 %v1709
        %v1806 = vunpack.c.l.b16 %v1710
        %v1807 = vunpack.c.l.b16 %v1711
        %v1808 = vunpack.c.l.b16 %v1712
        %v1809 = vunpack.c.l.b16 %v1713
        %v1810 = vunpack.c.l.b16 %v1714
        %v1811 = vunpack.c.l.b16 %v1715
        %v1812 = vunpack.c.l.b16 %v1716
        %v1813 = vunpack.c.l.b16 %v1717
        %v1814 = vunpack.c.l.b16 %v1718
        %v1815 = vunpack.c.l.b16 %v1719
        %v1816 = vunpack.c.l.b16 %v1720
        %v1817 = vunpack.c.l.b16 %v1721
        %v1818 = vunpack.c.l.b16 %v1722
        %v1819 = vunpack.c.l.b16 %v1723
        %v1820 = vunpack.c.l.b16 %v1724
        %v1821 = vunpack.c.l.b16 %v1725
        %v1822 = vpack.c.b16 %v1775, %v1774
        %v1823 = vpack.c.b16 %v1777, %v1776
        %v1824 = vpack.c.b16 %v1779, %v1778
        %v1825 = vpack.c.b16 %v1781, %v1780
        %v1826 = vpack.c.b16 %v1783, %v1782
        %v1827 = vpack.c.b16 %v1785, %v1784
        %v1828 = vpack.c.b16 %v1787, %v1786
        %v1829 = vpack.c.b16 %v1789, %v1788
        %v1830 = vpack.c.b16 %v1791, %v1790
        %v1831 = vpack.c.b16 %v1793, %v1792
        %v1832 = vpack.c.b16 %v1795, %v1794
        %v1833 = vpack.c.b16 %v1797, %v1796
        %v1834 = vpack.c.b16 %v1799, %v1798
        %v1835 = vpack.c.b16 %v1801, %v1800
        %v1836 = vpack.c.b16 %v1803, %v1802
        %v1837 = vpack.c.b16 %v1805, %v1804
        %v1838 = vpack.c.b16 %v1807, %v1806
        %v1839 = vpack.c.b16 %v1809, %v1808
        %v1840 = vpack.c.b16 %v1811, %v1810
        %v1841 = vpack.c.b16 %v1813, %v1812
        %v1842 = vpack.c.b16 %v1815, %v1814
        %v1843 = vpack.c.b16 %v1817, %v1816
        %v1844 = vpack.c.b16 %v1819, %v1818
        %v1845 = vpack.c.b16 %v1821, %v1820
        %1870 = vmatprep.subr.bf16.mxu0 0
        %1871 = vmatpush1.bf16.msra.mxu0 %v1822
        %1872 = vmatprep.subr.bf16.mxu0 0
        %1873 = vmatpush1.bf16.msra.mxu0 %v1823
        %1874 = vmatprep.subr.bf16.mxu0 0
        %1875 = vmatpush1.bf16.msra.mxu0 %v1824
        %1876 = vmatprep.subr.bf16.mxu0 0
        %1877 = vmatpush1.bf16.msra.mxu0 %v1825
        %1878 = vmatprep.subr.bf16.mxu0 0
        %1879 = vmatpush1.bf16.msra.mxu0 %v1826
        %1880 = vmatprep.subr.bf16.mxu0 0
        %1881 = vmatpush1.bf16.msra.mxu0 %v1827
        %1882 = vmatprep.subr.bf16.mxu0 0
        %1883 = vmatpush1.bf16.msra.mxu0 %v1828
        %1884 = vmatprep.subr.bf16.mxu0 0
        %1885 = vmatpush1.bf16.msra.mxu0 %v1829
        %1886 = vmatprep.subr.bf16.mxu0 0
        %1887 = vmatpush1.bf16.msra.mxu0 %v1830
        %1888 = vmatprep.subr.bf16.mxu0 0
        %1889 = vmatpush1.bf16.msra.mxu0 %v1831
        %1890 = vmatprep.subr.bf16.mxu0 0
        %1891 = vmatpush1.bf16.msra.mxu0 %v1832
        %1892 = vmatprep.subr.bf16.mxu0 0
        %1893 = vmatpush1.bf16.msra.mxu0 %v1833
        %1894 = vmatprep.subr.bf16.mxu0 0
        %1895 = vmatpush1.bf16.msra.mxu0 %v1834
        %1896 = vmatprep.subr.bf16.mxu0 0
        %1897 = vmatpush1.bf16.msra.mxu0 %v1835
        %1898 = vmatprep.subr.bf16.mxu0 0
        %1899 = vmatpush1.bf16.msra.mxu0 %v1836
        %1900 = vmatprep.subr.bf16.mxu0 0
        %1901 = vmatpush1.bf16.msra.mxu0 %v1837
        %1902 = vmatprep.mubr.bf16.mxu0 %v1666
        %1903 = vmatmul.mubr.bf16.gmra.mrb[0].mxu0 %v1665
        %v1904 = vpop.f32.mrb[0].mxu0
        %v1905 = vadd.f32 0.0, %v1904
        %v1906 = vpop.f32.mrb[0].mxu0
        %v1907 = vpop.f32.mrb[0].mxu0
        %v1908 = vadd.f32 0.0, %v1907
        %v1909 = vpop.f32.mrb[0].mxu0
        %1910 = vmatprep.mubr.bf16.mxu0 %v1669
        %1911 = vmatmul.mubr.bf16.gmra.mrb[0].mxu0 %v1668
        %v1912 = vpop.f32.mrb[0].mxu0
        %v1913 = vadd.f32 0.0, %v1912
        %v1914 = vpop.f32.mrb[0].mxu0
        %v1915 = vpop.f32.mrb[0].mxu0
        %v1916 = vadd.f32 0.0, %v1915
        %v1917 = vpop.f32.mrb[0].mxu0
        %1918 = vmatprep.mubr.bf16.mxu0 %v1672
        %1919 = vmatmul.mubr.bf16.gmra.mrb[0].mxu0 %v1671
        %v1920 = vpop.f32.mrb[0].mxu0
        %v1921 = vadd.f32 0.0, %v1920
        %v1922 = vpop.f32.mrb[0].mxu0
        %v1923 = vpop.f32.mrb[0].mxu0
        %v1924 = vadd.f32 0.0, %v1923
        %v1925 = vpop.f32.mrb[0].mxu0
        %1926 = vmatprep.mubr.bf16.mxu0 %v1675
        %1927 = vmatmul.mubr.bf16.gmra.mrb[0].mxu0 %v1674
        %v1928 = vpop.f32.mrb[0].mxu0
        %v1929 = vadd.f32 0.0, %v1928
        %v1930 = vpop.f32.mrb[0].mxu0
        %v1931 = vpop.f32.mrb[0].mxu0
        %v1932 = vadd.f32 0.0, %v1931
        %v1933 = vpop.f32.mrb[0].mxu0
        %1934 = vdwg.mxu0
        %1935 = vmatprep.subr.bf16.mxu0 0
        %1936 = vmatpush1.bf16.msra.mxu0 %v1838
        %1937 = vmatprep.subr.bf16.mxu0 0
        %1938 = vmatpush1.bf16.msra.mxu0 %v1839
        %1939 = vmatprep.subr.bf16.mxu0 0
        %1940 = vmatpush1.bf16.msra.mxu0 %v1840
        %1941 = vmatprep.subr.bf16.mxu0 0
        %1942 = vmatpush1.bf16.msra.mxu0 %v1841
        %1943 = vmatprep.subr.bf16.mxu0 0
        %1944 = vmatpush1.bf16.msra.mxu0 %v1842
        %1945 = vmatprep.subr.bf16.mxu0 0
        %1946 = vmatpush1.bf16.msra.mxu0 %v1843
        %1947 = vmatprep.subr.bf16.mxu0 0
        %1948 = vmatpush1.bf16.msra.mxu0 %v1844
        %1949 = vmatprep.subr.bf16.mxu0 0
        %1950 = vmatpush1.bf16.msra.mxu0 %v1845
        %1951 = vmatprep.subr.bf16.mxu0 0
        %1952 = vmatpush1.bf16.msra.mxu0 0
        %1953 = vmatprep.subr.bf16.mxu0 0
        %1954 = vmatpush1.bf16.msra.mxu0 0
        %1955 = vmatprep.subr.bf16.mxu0 0
        %1956 = vmatpush1.bf16.msra.mxu0 0
        %1957 = vmatprep.subr.bf16.mxu0 0
        %1958 = vmatpush1.bf16.msra.mxu0 0
        %1959 = vmatprep.subr.bf16.mxu0 0
        %1960 = vmatpush1.bf16.msra.mxu0 0
        %1961 = vmatprep.subr.bf16.mxu0 0
        %1962 = vmatpush1.bf16.msra.mxu0 0
        %1963 = vmatprep.subr.bf16.mxu0 0
        %1964 = vmatpush1.bf16.msra.mxu0 0
        %1965 = vmatprep.subr.bf16.mxu0 0
        %1966 = vmatpush1.bf16.msra.mxu0 0
        %1967 = vmatprep.mubr.bf16.mxu0 0
        %1968 = vmatmul.mubr.bf16.gmra.mrb[0].mxu0 %v1667
        %v1969 = vpop.f32.mrb[0].mxu0
        %v1970 = vadd.f32 %v1905, %v1969
        %v1971 = vpop.f32.mrb[0].mxu0
        %v1972 = vpop.f32.mrb[0].mxu0
        %v1973 = vadd.f32 %v1908, %v1972
        %v1974 = vpop.f32.mrb[0].mxu0
        %1975 = vmatprep.mubr.bf16.mxu0 0
        %1976 = vmatmul.mubr.bf16.gmra.mrb[0].mxu0 %v1670
        %v1977 = vpop.f32.mrb[0].mxu0
        %v1978 = vadd.f32 %v1913, %v1977
        %v1979 = vpop.f32.mrb[0].mxu0
        %v1980 = vpop.f32.mrb[0].mxu0
        %v1981 = vadd.f32 %v1916, %v1980
        %v1982 = vpop.f32.mrb[0].mxu0
        %1983 = vmatprep.mubr.bf16.mxu0 0
        %1984 = vmatmul.mubr.bf16.gmra.mrb[0].mxu0 %v1673
        %v1985 = vpop.f32.mrb[0].mxu0
        %v1986 = vadd.f32 %v1921, %v1985
        %v1987 = vpop.f32.mrb[0].mxu0
        %v1988 = vpop.f32.mrb[0].mxu0
        %v1989 = vadd.f32 %v1924, %v1988
        %v1990 = vpop.f32.mrb[0].mxu0
        %1991 = vmatprep.mubr.bf16.mxu0 0
        %1992 = vmatmul.mubr.bf16.gmra.mrb[0].mxu0 %v1676
        %v1993 = vpop.f32.mrb[0].mxu0
        %v1994 = vadd.f32 %v1929, %v1993
        %v1995 = vpop.f32.mrb[0].mxu0
        %v1996 = vpop.f32.mrb[0].mxu0
        %v1997 = vadd.f32 %v1932, %v1996
        %v1998 = vpop.f32.mrb[0].mxu0
        %1999 = vdwg.mxu0
        %v2000 = vadd.f32 %v1610, %v1970
        %v2001 = vadd.f32 %v1613, %v1973
        %v2002 = vadd.f32 %v1618, %v1978
        %v2003 = vadd.f32 %v1621, %v1981
        %v2004 = vadd.f32 %v1626, %v1986
        %v2005 = vadd.f32 %v1629, %v1989
        %v2006 = vadd.f32 %v1634, %v1994
        %v2007 = vadd.f32 %v1637, %v1997
        %v2008 = vpack.c.bf16 %v2000, %v2000
        %v2009 = vpack.c.bf16 %v2001, %v2001
        %v2010 = vpack.c.bf16 %v2002, %v2002
        %v2011 = vpack.c.bf16 %v2003, %v2003
        %v2012 = vpack.c.bf16 %v2004, %v2004
        %v2013 = vpack.c.bf16 %v2005, %v2005
        %v2014 = vpack.c.bf16 %v2006, %v2006
        %v2015 = vpack.c.bf16 %v2007, %v2007
        %2016 = vst [vmem:[%s597] sm:$0xf] %v2008
        %2017 = vst [vmem:[%s597 + $0x4] sm:$0xf] %v2009
        %2018 = vst [vmem:[%s597 + $0x8] sm:$0xf] %v2010
        %2019 = vst [vmem:[%s597 + $0xc] sm:$0xf] %v2011
        %2020 = vst [vmem:[%s597 + $0x10] sm:$0xf] %v2012
        %2021 = vst [vmem:[%s597 + $0x14] sm:$0xf] %v2013
        %2022 = vst [vmem:[%s597 + $0x18] sm:$0xf] %v2014
        %2023 = vst [vmem:[%s597 + $0x1c] sm:$0xf] %v2015
        %v2024 = vadd.f32 %v2000, %v2001
        %v2025 = vadd.f32 %v2024, %v2002
        %v2026 = vadd.f32 %v2025, %v2003
        %v2027 = vadd.f32 %v2026, %v2004
        %v2028 = vadd.f32 %v2027, %v2005
        %v2029 = vadd.f32 %v2028, %v2006
        %v2030 = vadd.f32 %v2029, %v2007
        %v2031 = vrot.slane %v2030, 4
        %v2032 = vadd.f32 %v2030, %v2031
        %v2033 = vrot.slane %v2032, 2
        %v2034 = vadd.f32 %v2032, %v2033
        %v2035 = vrot.slane %v2034, 1
        %v2036 = vadd.f32 %v2034, %v2035
        %v2037 = vmul.f32 %v2000, %v2000
        %v2038 = vmul.f32 %v2001, %v2001
        %v2039 = vmul.f32 %v2002, %v2002
        %v2040 = vmul.f32 %v2003, %v2003
        %v2041 = vmul.f32 %v2004, %v2004
        %v2042 = vmul.f32 %v2005, %v2005
        %v2043 = vmul.f32 %v2006, %v2006
        %v2044 = vmul.f32 %v2007, %v2007
        %v2045 = vadd.f32 %v2037, %v2038
        %v2046 = vadd.f32 %v2045, %v2039
        %v2047 = vadd.f32 %v2046, %v2040
        %v2048 = vadd.f32 %v2047, %v2041
        %v2049 = vadd.f32 %v2048, %v2042
        %v2050 = vadd.f32 %v2049, %v2043
        %v2051 = vadd.f32 %v2050, %v2044
        %v2052 = vrot.slane %v2051, 4
        %v2053 = vadd.f32 %v2051, %v2052
        %v2054 = vrot.slane %v2053, 2
        %v2055 = vadd.f32 %v2053, %v2054
        %v2056 = vrot.slane %v2055, 1
        %v2057 = vadd.f32 %v2055, %v2056
        %vm2058 = vcmask 1040384
        %v2059 = vsel %vm2058, %v2036, %v2057
        %2060 = vst [vmem:[%s601] sm:$0x3] %v2059
        %v2061 = vld [vmem:[%s786 + $0x8] sm:$0xff]
        %v2062 = vld [vmem:[%s786 + $0x20] sm:$0xff]
        %v2063 = vld [vmem:[%s786 + $0x38] sm:$0xff]
        %v2064 = vld [vmem:[%s786 + $0x50] sm:$0xff]
        %v2065 = vld [vmem:[%s786 + $0x68] sm:$0xff]
        %v2066 = vld [vmem:[%s786 + $0x80] sm:$0xff]
        %v2067 = vld [vmem:[%s786 + $0x98] sm:$0xff]
        %v2068 = vld [vmem:[%s786 + $0xb0] sm:$0xff]
        %v2069 = vpack.c.bf16 %v2062, %v2061
        %v2070 = vpack.c.bf16 %v2064, %v2063
        %v2071 = vpack.c.bf16 %v2066, %v2065
        %v2072 = vpack.c.bf16 %v2068, %v2067
        %v2073 = vld [vmem:[%s2] sm:$0xf]
        %v2074 = vld [vmem:[%s2 + $0x4] sm:$0xf]
        %v2075 = vld [vmem:[%s2 + $0x8] sm:$0xf]
        %v2076 = vld [vmem:[%s2 + $0xc] sm:$0xf]
        %v2077 = vld [vmem:[%s2 + $0x10] sm:$0xf]
        %v2078 = vld [vmem:[%s2 + $0x14] sm:$0xf]
        %v2079 = vld [vmem:[%s2 + $0x18] sm:$0xf]
        %v2080 = vld [vmem:[%s2 + $0x1c] sm:$0xf]
        %v2081 = vld [vmem:[%s2 + $0x20] sm:$0xf]
        %v2082 = vld [vmem:[%s2 + $0x24] sm:$0xf]
        %v2083 = vld [vmem:[%s2 + $0x28] sm:$0xf]
        %v2084 = vld [vmem:[%s2 + $0x2c] sm:$0xf]
        %v2085 = vld [vmem:[%s2 + $0x30] sm:$0xf]
        %v2086 = vld [vmem:[%s2 + $0x34] sm:$0xf]
        %v2087 = vld [vmem:[%s2 + $0x38] sm:$0xf]
        %v2088 = vld [vmem:[%s2 + $0x3c] sm:$0xf]
        %v2105 = vunpack.c.l.b16 %v2073
        %v2106 = vunpack.c.l.b16 %v2074
        %v2107 = vunpack.c.l.b16 %v2075
        %v2108 = vunpack.c.l.b16 %v2076
        %v2109 = vunpack.c.l.b16 %v2077
        %v2110 = vunpack.c.l.b16 %v2078
        %v2111 = vunpack.c.l.b16 %v2079
        %v2112 = vunpack.c.l.b16 %v2080
        %v2113 = vunpack.c.l.b16 %v2081
        %v2114 = vunpack.c.l.b16 %v2082
        %v2115 = vunpack.c.l.b16 %v2083
        %v2116 = vunpack.c.l.b16 %v2084
        %v2117 = vunpack.c.l.b16 %v2085
        %v2118 = vunpack.c.l.b16 %v2086
        %v2119 = vunpack.c.l.b16 %v2087
        %v2120 = vunpack.c.l.b16 %v2088
        %v2121 = vpack.c.b16 %v2106, %v2105
        %v2122 = vpack.c.b16 %v2108, %v2107
        %v2123 = vpack.c.b16 %v2110, %v2109
        %v2124 = vpack.c.b16 %v2112, %v2111
        %v2125 = vpack.c.b16 %v2114, %v2113
        %v2126 = vpack.c.b16 %v2116, %v2115
        %v2127 = vpack.c.b16 %v2118, %v2117
        %v2128 = vpack.c.b16 %v2120, %v2119
        %2137 = vmatprep.subr.bf16.mxu0 0
        %2138 = vmatpush1.bf16.msra.mxu0 %v2121
        %2139 = vmatprep.subr.bf16.mxu0 0
        %2140 = vmatpush1.bf16.msra.mxu0 %v2122
        %2141 = vmatprep.subr.bf16.mxu0 0
        %2142 = vmatpush1.bf16.msra.mxu0 %v2123
        %2143 = vmatprep.subr.bf16.mxu0 0
        %2144 = vmatpush1.bf16.msra.mxu0 %v2124
        %2145 = vmatprep.subr.bf16.mxu0 0
        %2146 = vmatpush1.bf16.msra.mxu0 %v2125
        %2147 = vmatprep.subr.bf16.mxu0 0
        %2148 = vmatpush1.bf16.msra.mxu0 %v2126
        %2149 = vmatprep.subr.bf16.mxu0 0
        %2150 = vmatpush1.bf16.msra.mxu0 %v2127
        %2151 = vmatprep.subr.bf16.mxu0 0
        %2152 = vmatpush1.bf16.msra.mxu0 %v2128
        %2153 = vmatprep.subr.bf16.mxu0 0
        %2154 = vmatpush1.bf16.msra.mxu0 0
        %2155 = vmatprep.subr.bf16.mxu0 0
        %2156 = vmatpush1.bf16.msra.mxu0 0
        %2157 = vmatprep.subr.bf16.mxu0 0
        %2158 = vmatpush1.bf16.msra.mxu0 0
        %2159 = vmatprep.subr.bf16.mxu0 0
        %2160 = vmatpush1.bf16.msra.mxu0 0
        %2161 = vmatprep.subr.bf16.mxu0 0
        %2162 = vmatpush1.bf16.msra.mxu0 0
        %2163 = vmatprep.subr.bf16.mxu0 0
        %2164 = vmatpush1.bf16.msra.mxu0 0
        %2165 = vmatprep.subr.bf16.mxu0 0
        %2166 = vmatpush1.bf16.msra.mxu0 0
        %2167 = vmatprep.subr.bf16.mxu0 0
        %2168 = vmatpush1.bf16.msra.mxu0 0
        %2169 = vmatprep.mubr.bf16.mxu0 0
        %2170 = vmatmul.mubr.bf16.gmra.mrb[0].mxu0 %v2069
        %v2171 = vpop.f32.mrb[0].mxu0
        %v2172 = vadd.f32 0.0, %v2171
        %v2173 = vpop.f32.mrb[0].mxu0
        %v2174 = vpop.f32.mrb[0].mxu0
        %v2175 = vadd.f32 0.0, %v2174
        %v2176 = vpop.f32.mrb[0].mxu0
        %2177 = vmatprep.mubr.bf16.mxu0 0
        %2178 = vmatmul.mubr.bf16.gmra.mrb[0].mxu0 %v2070
        %v2179 = vpop.f32.mrb[0].mxu0
        %v2180 = vadd.f32 0.0, %v2179
        %v2181 = vpop.f32.mrb[0].mxu0
        %v2182 = vpop.f32.mrb[0].mxu0
        %v2183 = vadd.f32 0.0, %v2182
        %v2184 = vpop.f32.mrb[0].mxu0
        %2185 = vmatprep.mubr.bf16.mxu0 0
        %2186 = vmatmul.mubr.bf16.gmra.mrb[0].mxu0 %v2071
        %v2187 = vpop.f32.mrb[0].mxu0
        %v2188 = vadd.f32 0.0, %v2187
        %v2189 = vpop.f32.mrb[0].mxu0
        %v2190 = vpop.f32.mrb[0].mxu0
        %v2191 = vadd.f32 0.0, %v2190
        %v2192 = vpop.f32.mrb[0].mxu0
        %2193 = vmatprep.mubr.bf16.mxu0 0
        %2194 = vmatmul.mubr.bf16.gmra.mrb[0].mxu0 %v2072
        %v2195 = vpop.f32.mrb[0].mxu0
        %v2196 = vadd.f32 0.0, %v2195
        %v2197 = vpop.f32.mrb[0].mxu0
        %v2198 = vpop.f32.mrb[0].mxu0
        %v2199 = vadd.f32 0.0, %v2198
        %v2200 = vpop.f32.mrb[0].mxu0
        %2201 = vdwg.mxu0
        %v2202 = vpack.c.bf16 %v2172, %v2172
        %v2203 = vpack.c.bf16 %v2175, %v2175
        %v2204 = vpack.c.bf16 %v2180, %v2180
        %v2205 = vpack.c.bf16 %v2183, %v2183
        %v2206 = vpack.c.bf16 %v2188, %v2188
        %v2207 = vpack.c.bf16 %v2191, %v2191
        %v2208 = vpack.c.bf16 %v2196, %v2196
        %v2209 = vpack.c.bf16 %v2199, %v2199
        %2210 = vst [vmem:[%s606] sm:$0xf] %v2202
        %2211 = vst [vmem:[%s606 + $0x4] sm:$0xf] %v2203
        %2212 = vst [vmem:[%s606 + $0x8] sm:$0xf] %v2204
        %2213 = vst [vmem:[%s606 + $0xc] sm:$0xf] %v2205
        %2214 = vst [vmem:[%s606 + $0x10] sm:$0xf] %v2206
        %2215 = vst [vmem:[%s606 + $0x14] sm:$0xf] %v2207
        %2216 = vst [vmem:[%s606 + $0x18] sm:$0xf] %v2208
        %2217 = vst [vmem:[%s606 + $0x1c] sm:$0xf] %v2209
        %v2218 = vadd.f32 %v2172, %v2175
        %v2219 = vadd.f32 %v2218, %v2180
        %v2220 = vadd.f32 %v2219, %v2183
        %v2221 = vadd.f32 %v2220, %v2188
        %v2222 = vadd.f32 %v2221, %v2191
        %v2223 = vadd.f32 %v2222, %v2196
        %v2224 = vadd.f32 %v2223, %v2199
        %v2225 = vrot.slane %v2224, 4
        %v2226 = vadd.f32 %v2224, %v2225
        %v2227 = vrot.slane %v2226, 2
        %v2228 = vadd.f32 %v2226, %v2227
        %v2229 = vrot.slane %v2228, 1
        %v2230 = vadd.f32 %v2228, %v2229
        %v2231 = vmul.f32 %v2172, %v2172
        %v2232 = vmul.f32 %v2175, %v2175
        %v2233 = vmul.f32 %v2180, %v2180
        %v2234 = vmul.f32 %v2183, %v2183
        %v2235 = vmul.f32 %v2188, %v2188
        %v2236 = vmul.f32 %v2191, %v2191
        %v2237 = vmul.f32 %v2196, %v2196
        %v2238 = vmul.f32 %v2199, %v2199
        %v2239 = vadd.f32 %v2231, %v2232
        %v2240 = vadd.f32 %v2239, %v2233
        %v2241 = vadd.f32 %v2240, %v2234
        %v2242 = vadd.f32 %v2241, %v2235
        %v2243 = vadd.f32 %v2242, %v2236
        %v2244 = vadd.f32 %v2243, %v2237
        %v2245 = vadd.f32 %v2244, %v2238
        %v2246 = vrot.slane %v2245, 4
        %v2247 = vadd.f32 %v2245, %v2246
        %v2248 = vrot.slane %v2247, 2
        %v2249 = vadd.f32 %v2247, %v2248
        %v2250 = vrot.slane %v2249, 1
        %v2251 = vadd.f32 %v2249, %v2250
        %v2252 = vsel %vm2058, %v2230, %v2251
        %2253 = vst [vmem:[%s610] sm:$0x3] %v2252
        %p2254 = scmp.lt.s32.totalorder %s18, 1
        %s2255 = scalar_select %p2254, %s18, 1
        %s2256 = smul.addr %s2255, 8
        %s2257 = smul.addr %s2256, 4
        %s2258 = scalar_lea.vmem %s3, %s2257
        %p2259 = scmp.lt.s32.totalorder %s18, 1
        %s2260 = scalar_select %p2259, %s18, 1
        %s2261 = smul.addr %s2260, 2
        %s2262 = scalar_lea.vmem %s4, %s2261
        %p2263 = scmp.lt.s32.totalorder %s18, 1
        %s2264 = scalar_select %p2263, %s18, 1
        %s2265 = smul.addr %s2264, 8
        %s2266 = smul.addr %s2265, 4
        %s2267 = scalar_lea.vmem %s5, %s2266
        %p2268 = scmp.lt.s32.totalorder %s18, 1
        %s2269 = scalar_select %p2268, %s18, 1
        %s2270 = smul.addr %s2269, 2
        %s2271 = scalar_lea.vmem %s6, %s2270
        // Predicated region
        $region74: #{basic_block_forward.3} parent=68 // pred_check
          %p2272 = pneg %p104
        $region75: #{basic_block_forward.3} parent=68 // pred_check_branch
          %2274 = sbr.rel (%p2272) target = $region77
        $region76: #{basic_block_forward.3} parent=68 // pred_region
          _
        $region77: #{basic_block_forward.3} parent=68 // pred_fallthru
          _
        // Predicated region
        $region78: #{basic_block_forward.3} parent=68 // pred_check
          %p2275 = pneg %p130
        $region79: #{basic_block_forward.3} parent=68 // pred_check_branch
          %2277 = sbr.rel (%p2275) target = $region81
        $region80: #{basic_block_forward.3} parent=68 // pred_region
          _
        $region81: #{basic_block_forward.3} parent=68 // pred_fallthru
          _
        // Predicated region
        $region82: #{basic_block_forward.3} parent=68 // pred_check
          %p2278 = pneg %p156
        $region83: #{basic_block_forward.3} parent=68 // pred_check_branch
          %2280 = sbr.rel (%p2278) target = $region85
        $region84: #{basic_block_forward.3} parent=68 // pred_region
          _
        $region85: #{basic_block_forward.3} parent=68 // pred_fallthru
          _
        // Predicated region
        $region86: #{basic_block_forward.3} parent=68 // pred_check
          %p2281 = pneg %p182
        $region87: #{basic_block_forward.3} parent=68 // pred_check_branch
          %2283 = sbr.rel (%p2281) target = $region89
        $region88: #{basic_block_forward.3} parent=68 // pred_region
          _
        $region89: #{basic_block_forward.3} parent=68 // pred_fallthru
          _
      $region69: #{basic_block_forward.3} parent=5 // pred_fallthru
        _
      %p2284 = scmp.le.s32.totalorder 2, %s13
      // Predicated region
      $region90: #{basic_block_forward.3} parent=5 // pred_check
        %p2285 = pneg %p2284
      $region91: #{basic_block_forward.3} parent=5 // pred_check_branch
        %2287 = sbr.rel (%p2285) target = $region93
      $region92: #{basic_block_forward.3} parent=5 // pred_region
        %s2288 = ssub.s32 %s13, 2
        // Predicated region
        $region94: #{basic_block_forward.3} parent=92 // pred_check
          %p2289 = pneg %p110
        $region95: #{basic_block_forward.3} parent=92 // pred_check_branch
          %2291 = sbr.rel (%p2289) target = $region97
        $region96: #{basic_block_forward.3} parent=92 // pred_region
          %p2292 = scmp.lt.s32.totalorder %s19, 1
          %s2293 = scalar_select %p2292, %s19, 1
          %s2294 = smul.addr %s2293, 8
          %s2295 = smul.addr %s2294, 4
          %s2296 = scalar_lea.vmem %s3, %s2295
        $region97: #{basic_block_forward.3} parent=92 // pred_fallthru
          _
        // Predicated region
        $region98: #{basic_block_forward.3} parent=92 // pred_check
          %p2297 = pneg %p136
        $region99: #{basic_block_forward.3} parent=92 // pred_check_branch
          %2299 = sbr.rel (%p2297) target = $region101
        $region100: #{basic_block_forward.3} parent=92 // pred_region
          %p2300 = scmp.lt.s32.totalorder %s19, 1
          %s2301 = scalar_select %p2300, %s19, 1
          %s2302 = smul.addr %s2301, 2
          %s2303 = scalar_lea.vmem %s4, %s2302
        $region101: #{basic_block_forward.3} parent=92 // pred_fallthru
          _
        // Predicated region
        $region102: #{basic_block_forward.3} parent=92 // pred_check
          %p2304 = pneg %p162
        $region103: #{basic_block_forward.3} parent=92 // pred_check_branch
          %2306 = sbr.rel (%p2304) target = $region105
        $region104: #{basic_block_forward.3} parent=92 // pred_region
          %p2307 = scmp.lt.s32.totalorder %s19, 1
          %s2308 = scalar_select %p2307, %s19, 1
          %s2309 = smul.addr %s2308, 8
          %s2310 = smul.addr %s2309, 4
          %s2311 = scalar_lea.vmem %s5, %s2310
        $region105: #{basic_block_forward.3} parent=92 // pred_fallthru
          _
        // Predicated region
        $region106: #{basic_block_forward.3} parent=92 // pred_check
          %p2312 = pneg %p188
        $region107: #{basic_block_forward.3} parent=92 // pred_check_branch
          %2314 = sbr.rel (%p2312) target = $region109
        $region108: #{basic_block_forward.3} parent=92 // pred_region
          %p2315 = scmp.lt.s32.totalorder %s19, 1
          %s2316 = scalar_select %p2315, %s19, 1
          %s2317 = smul.addr %s2316, 2
          %s2318 = scalar_lea.vmem %s6, %s2317
        $region109: #{basic_block_forward.3} parent=92 // pred_fallthru
          _
      $region93: #{basic_block_forward.3} parent=5 // pred_fallthru
        _
    $region6: #{basic_block_forward.3} parent=1 // loop_footer
      %s17 = sadd.s32 1, %s13
    $region7: #{basic_block_forward.3} parent=1 // loop_footer_branch
      %12 = sbr.rel target = $region3
    $region8: #{basic_block_forward.3} parent=1 // loop_exit
      _

</llo_original>
